<compile_context>
chip_gen: v6e
topology: v6e:2x2x1
jax: 0.10.0
libtpu: 0.0.40
codegen_flags: <defaults>
</compile_context>

<pallas_src>
import functools

import jax
import jax.numpy as jnp
from jax.experimental import pallas as pl
from jax.experimental.pallas import tpu as pltpu

LN_EPS = 1e-5
OUT_PAD = 128  # lane-dense padded width of the final FC output


def _layernorm(x, gamma, beta):
    mu = jnp.mean(x, axis=-1, keepdims=True)
    var = jnp.mean((x - mu) ** 2, axis=-1, keepdims=True)
    return (x - mu) * jax.lax.rsqrt(var + LN_EPS) * gamma + beta


# ----------------------------------------------------------------------------
# Fully fused TFT forward kernel.
#   x_ref:    (B*T, D) flattened input rows
#   GRN:      w1,b1,w2,b2,wg,bg, gln_g,gln_b
#   attn[l]:  wqkv (L,H,3H), bqkv (L,1,3H), wo (L,H,H), bo (L,1,H),
#             ln_g (L,1,H), ln_b (L,1,H)
#   head:     wf (H, OUT_PAD) zero-padded, bf (1, OUT_PAD) zero-padded
#   o_ref:    (B, OUT_PAD) lane-dense, last timestep only;
#             wrapper slices back to output_dim
# ----------------------------------------------------------------------------
def tft_kernel(x_ref,
               w1_ref, b1_ref, w2_ref, b2_ref, wg_ref, bg_ref,
               gln_g_ref, gln_b_ref,
               wqkv_ref, bqkv_ref, wo_ref, bo_ref, ln_g_ref, ln_b_ref,
               wf_ref, bf_ref,
               o_ref, *, num_heads, num_layers, B, T):
    x = x_ref[...].astype(jnp.float32)                      # (B*T, D)

    # ---- Gated Residual Network (rows are independent) ----------------------
    residual = x
    h = jnp.dot(x, w1_ref[...], preferred_element_type=jnp.float32) + b1_ref[...]
    # ELU(alpha=1); clamp exp argument so the discarded branch stays finite.
    h = jnp.where(h > 0, h, jnp.exp(jnp.minimum(h, 0.0)) - 1.0)
    # dropout: identity (eval mode)
    h = jnp.dot(h, w2_ref[...], preferred_element_type=jnp.float32) + b2_ref[...]
    y = _layernorm(h + residual, gln_g_ref[...], gln_b_ref[...])
    gate = jax.nn.sigmoid(
        jnp.dot(y, wg_ref[...], preferred_element_type=jnp.float32) + bg_ref[...])
    h2d = gate * y + (1.0 - gate) * residual                 # (B*T, H)

    H = h2d.shape[-1]
    dh = H // num_heads
    scale = 1.0 / (dh ** 0.5)

    # ---- Temporal self-attention stack (num_layers is static -> unrolled) ---
    for l in range(num_layers):
        # Fused QKV projection: single (H, 3H) RHS, flattened 2-D matmul.
        qkv = (jnp.dot(h2d, wqkv_ref[l], preferred_element_type=jnp.float32)
               + bqkv_ref[l])                                # (B*T, 3H)
        qkv3 = qkv.reshape(B, T, 3 * H)

        head_outs = []
        for hd in range(num_heads):                          # static unroll
            q_h = qkv3[:, :, hd * dh:(hd + 1) * dh]
            k_h = qkv3[:, :, H + hd * dh:H + (hd + 1) * dh]
            v_h = qkv3[:, :, 2 * H + hd * dh:2 * H + (hd + 1) * dh]
            s = jnp.einsum('bqd,bkd->bqk', q_h, k_h,
                           preferred_element_type=jnp.float32) * scale
            s = s - jnp.max(s, axis=-1, keepdims=True)
            p = jnp.exp(s)
            p = p * pl.reciprocal(jnp.sum(p, axis=-1, keepdims=True), approx=True)
            head_outs.append(
                jnp.einsum('bqk,bkd->bqd', p, v_h,
                           preferred_element_type=jnp.float32))
        ctx = jnp.concatenate(head_outs, axis=-1).reshape(B * T, H)

        attn = (jnp.dot(ctx, wo_ref[l], preferred_element_type=jnp.float32)
                + bo_ref[l])
        # dropout: identity (eval mode)
        h2d = _layernorm(h2d + attn, ln_g_ref[l], ln_b_ref[l])

    # ---- Final linear head on the LAST timestep only, lane-dense ------------
    last = h2d.reshape(B, T, H)[:, T - 1, :]                 # (B, H)
    o_ref[...] = (jnp.dot(last, wf_ref[...], preferred_element_type=jnp.float32)
                  + bf_ref[...])


_VMEM = pl.BlockSpec(memory_space=pltpu.MemorySpace.VMEM)


# ----------------------------------------------------------------------------
# Parameter construction (deterministic, synthetic)
# ----------------------------------------------------------------------------
def init_params(key, input_dim, hidden_dim, output_dim, num_heads, num_layers):
    assert input_dim == hidden_dim, "GRN residual add requires input_dim == hidden_dim"
    assert hidden_dim % num_heads == 0
    H = hidden_dim

    def lin(k, fan_in, fan_out):
        kw, kb = jax.random.split(k)
        bound = 1.0 / (fan_in ** 0.5)
        w = jax.random.uniform(kw, (fan_in, fan_out), jnp.float32, -bound, bound)
        b = jax.random.uniform(kb, (1, fan_out), jnp.float32, -bound, bound)
        return w, b

    keys = jax.random.split(key, 4 + num_layers)
    p = {}
    # GRN
    p['w1'], p['b1'] = lin(keys[0], input_dim, H)
    p['w2'], p['b2'] = lin(keys[1], H, H)
    p['wg'], p['bg'] = lin(keys[2], H, H)
    p['grn_ln_g'] = jnp.ones((1, H), jnp.float32)
    p['grn_ln_b'] = jnp.zeros((1, H), jnp.float32)

    # Attention layers (stacked along a leading layer dim)
    bound = 1.0 / (H ** 0.5)
    wqkv, bqkv, wo, bo, lng, lnb = [], [], [], [], [], []
    for l in range(num_layers):
        kq, kow, kob = jax.random.split(keys[3 + l], 3)
        wqkv.append(jax.random.uniform(kq, (H, 3 * H), jnp.float32, -bound, bound))
        bqkv.append(jnp.zeros((1, 3 * H), jnp.float32))   # MHA in_proj bias init = 0
        wo.append(jax.random.uniform(kow, (H, H), jnp.float32, -bound, bound))
        bo.append(jax.random.uniform(kob, (1, H), jnp.float32, -bound, bound))
        lng.append(jnp.ones((1, H), jnp.float32))
        lnb.append(jnp.zeros((1, H), jnp.float32))
    p['wqkv'] = jnp.stack(wqkv)
    p['bqkv'] = jnp.stack(bqkv)
    p['wo'] = jnp.stack(wo)
    p['bo'] = jnp.stack(bo)
    p['ln_g'] = jnp.stack(lng)
    p['ln_b'] = jnp.stack(lnb)

    # Output head, zero-padded to OUT_PAD lanes for a lane-dense store.
    wf, bf = lin(keys[3 + num_layers], H, output_dim)
    p['wf_pad'] = jnp.zeros((H, OUT_PAD), jnp.float32).at[:, :output_dim].set(wf)
    p['bf_pad'] = jnp.zeros((1, OUT_PAD), jnp.float32).at[:, :output_dim].set(bf)
    return p


# ----------------------------------------------------------------------------
# Forward pass wrapper: one fused pallas_call
# ----------------------------------------------------------------------------
def tft_forward(params, x, *, num_heads, num_layers, output_dim):
    B, T, D = x.shape
    x2d = x.reshape(B * T, D)

    kernel = functools.partial(tft_kernel, num_heads=num_heads,
                               num_layers=num_layers, B=B, T=T)
    args = (x2d,
            params['w1'], params['b1'], params['w2'], params['b2'],
            params['wg'], params['bg'], params['grn_ln_g'], params['grn_ln_b'],
            params['wqkv'], params['bqkv'], params['wo'], params['bo'],
            params['ln_g'], params['ln_b'],
            params['wf_pad'], params['bf_pad'])

    out = pl.pallas_call(
        kernel,
        out_shape=jax.ShapeDtypeStruct((B, OUT_PAD), jnp.float32),
        in_specs=[_VMEM] * len(args),
        out_specs=_VMEM,
    )(*args)

    # Slice back to the real output columns (kernel already took the last step).
    return out[:, :output_dim]


if __name__ == "__main__":
    B, T = 2, 8
    input_dim = hidden_dim = 32
    output_dim = 4
    num_heads = 4
    num_layers = 2

    key = jax.random.PRNGKey(0)
    kx, kp = jax.random.split(key)
    x = jax.random.normal(kx, (B, T, input_dim), jnp.float32)
    params = init_params(kp, input_dim, hidden_dim, output_dim, num_heads, num_layers)

    fwd = jax.jit(functools.partial(tft_forward, num_heads=num_heads,
                                    num_layers=num_layers, output_dim=output_dim))
    out = fwd(params, x)
    jax.block_until_ready(out)
    assert out.shape == (B, output_dim)
    assert bool(jnp.all(jnp.isfinite(out)))
    print("KERNEL_OK")
</pallas_src>

<mosaic_0001>
module attributes {stable_mosaic.version = 11 : i64} {
  func.func @tft_kernel(%arg0: memref<16x32xf32, #tpu.memory_space<vmem>>, %arg1: memref<32x32xf32, #tpu.memory_space<vmem>>, %arg2: memref<1x32xf32, #tpu.memory_space<vmem>>, %arg3: memref<32x32xf32, #tpu.memory_space<vmem>>, %arg4: memref<1x32xf32, #tpu.memory_space<vmem>>, %arg5: memref<32x32xf32, #tpu.memory_space<vmem>>, %arg6: memref<1x32xf32, #tpu.memory_space<vmem>>, %arg7: memref<1x32xf32, #tpu.memory_space<vmem>>, %arg8: memref<1x32xf32, #tpu.memory_space<vmem>>, %arg9: memref<2x32x96xf32, #tpu.memory_space<vmem>>, %arg10: memref<2x1x96xf32, #tpu.memory_space<vmem>>, %arg11: memref<2x32x32xf32, #tpu.memory_space<vmem>>, %arg12: memref<2x1x32xf32, #tpu.memory_space<vmem>>, %arg13: memref<2x1x32xf32, #tpu.memory_space<vmem>>, %arg14: memref<2x1x32xf32, #tpu.memory_space<vmem>>, %arg15: memref<32x128xf32, #tpu.memory_space<vmem>>, %arg16: memref<1x128xf32, #tpu.memory_space<vmem>>, %arg17: memref<2x128xf32, #tpu.memory_space<vmem>>) attributes {dimension_semantics = [], scalar_prefetch = 0 : i64, scratch_operands = 0 : i64, tpu.core_type = #tpu.core_type<tc>} {
    %c0 = arith.constant 0 : index
    %c0_0 = arith.constant 0 : index
    %0 = vector.load %arg0[%c0, %c0_0] : memref<16x32xf32, #tpu.memory_space<vmem>>, vector<16x32xf32>
    %c0_1 = arith.constant 0 : index
    %c0_2 = arith.constant 0 : index
    %1 = vector.load %arg1[%c0_1, %c0_2] : memref<32x32xf32, #tpu.memory_space<vmem>>, vector<32x32xf32>
    %cst = arith.constant dense<0.000000e+00> : vector<16x32xf32>
    %2 = tpu.matmul %0, %1, %cst {dimension_numbers = #tpu.dot_dimension_numbers<[1], [0], [0], [1], [0, 0, 1, 1], [], []>} : vector<16x32xf32>, vector<32x32xf32>, vector<16x32xf32> -> vector<16x32xf32>
    %c0_3 = arith.constant 0 : index
    %c0_4 = arith.constant 0 : index
    %3 = vector.load %arg2[%c0_3, %c0_4] : memref<1x32xf32, #tpu.memory_space<vmem>>, vector<1x32xf32>
    %4 = vector.broadcast %3 : vector<1x32xf32> to vector<16x32xf32>
    %5 = arith.addf %2, %4 : vector<16x32xf32>
    %cst_5 = arith.constant 0.000000e+00 : f32
    %6 = vector.broadcast %cst_5 : f32 to vector<16x32xf32>
    %7 = arith.cmpf ogt, %5, %6 : vector<16x32xf32>
    %cst_6 = arith.constant 0.000000e+00 : f32
    %8 = vector.broadcast %cst_6 : f32 to vector<16x32xf32>
    %9 = arith.minimumf %5, %8 : vector<16x32xf32>
    %10 = math.exp %9 : vector<16x32xf32>
    %cst_7 = arith.constant 1.000000e+00 : f32
    %11 = vector.broadcast %cst_7 : f32 to vector<16x32xf32>
    %12 = arith.subf %10, %11 : vector<16x32xf32>
    %13 = arith.select %7, %5, %12 : vector<16x32xi1>, vector<16x32xf32>
    %c0_8 = arith.constant 0 : index
    %c0_9 = arith.constant 0 : index
    %14 = vector.load %arg3[%c0_8, %c0_9] : memref<32x32xf32, #tpu.memory_space<vmem>>, vector<32x32xf32>
    %cst_10 = arith.constant dense<0.000000e+00> : vector<16x32xf32>
    %15 = tpu.matmul %13, %14, %cst_10 {dimension_numbers = #tpu.dot_dimension_numbers<[1], [0], [0], [1], [0, 0, 1, 1], [], []>} : vector<16x32xf32>, vector<32x32xf32>, vector<16x32xf32> -> vector<16x32xf32>
    %c0_11 = arith.constant 0 : index
    %c0_12 = arith.constant 0 : index
    %16 = vector.load %arg4[%c0_11, %c0_12] : memref<1x32xf32, #tpu.memory_space<vmem>>, vector<1x32xf32>
    %17 = vector.broadcast %16 : vector<1x32xf32> to vector<16x32xf32>
    %18 = arith.addf %15, %17 : vector<16x32xf32>
    %19 = arith.addf %18, %0 : vector<16x32xf32>
    %c0_13 = arith.constant 0 : index
    %c0_14 = arith.constant 0 : index
    %20 = vector.load %arg7[%c0_13, %c0_14] : memref<1x32xf32, #tpu.memory_space<vmem>>, vector<1x32xf32>
    %c0_15 = arith.constant 0 : index
    %c0_16 = arith.constant 0 : index
    %21 = vector.load %arg8[%c0_15, %c0_16] : memref<1x32xf32, #tpu.memory_space<vmem>>, vector<1x32xf32>
    %cst_17 = arith.constant dense<0.000000e+00> : vector<16xf32>
    %22 = vector.multi_reduction <add>, %19, %cst_17 [1] : vector<16x32xf32> to vector<16xf32>
    %23 = vector.shape_cast %22 : vector<16xf32> to vector<16x1xf32>
    %cst_18 = arith.constant 3.200000e+01 : f32
    %24 = vector.broadcast %cst_18 : f32 to vector<16x1xf32>
    %25 = arith.divf %23, %24 : vector<16x1xf32>
    %26 = vector.broadcast %25 : vector<16x1xf32> to vector<16x32xf32>
    %27 = arith.subf %19, %26 : vector<16x32xf32>
    %28 = arith.mulf %27, %27 : vector<16x32xf32>
    %cst_19 = arith.constant dense<0.000000e+00> : vector<16xf32>
    %29 = vector.multi_reduction <add>, %28, %cst_19 [1] : vector<16x32xf32> to vector<16xf32>
    %30 = vector.shape_cast %29 : vector<16xf32> to vector<16x1xf32>
    %cst_20 = arith.constant 3.200000e+01 : f32
    %31 = vector.broadcast %cst_20 : f32 to vector<16x1xf32>
    %32 = arith.divf %30, %31 : vector<16x1xf32>
    %33 = vector.broadcast %25 : vector<16x1xf32> to vector<16x32xf32>
    %34 = arith.subf %19, %33 : vector<16x32xf32>
    %cst_21 = arith.constant 9.99999974E-6 : f32
    %35 = vector.broadcast %cst_21 : f32 to vector<16x1xf32>
    %36 = arith.addf %32, %35 : vector<16x1xf32>
    %37 = math.rsqrt %36 : vector<16x1xf32>
    %38 = vector.broadcast %37 : vector<16x1xf32> to vector<16x32xf32>
    %39 = arith.mulf %34, %38 : vector<16x32xf32>
    %40 = vector.broadcast %20 : vector<1x32xf32> to vector<16x32xf32>
    %41 = arith.mulf %39, %40 : vector<16x32xf32>
    %42 = vector.broadcast %21 : vector<1x32xf32> to vector<16x32xf32>
    %43 = arith.addf %41, %42 : vector<16x32xf32>
    %c0_22 = arith.constant 0 : index
    %c0_23 = arith.constant 0 : index
    %44 = vector.load %arg5[%c0_22, %c0_23] : memref<32x32xf32, #tpu.memory_space<vmem>>, vector<32x32xf32>
    %cst_24 = arith.constant dense<0.000000e+00> : vector<16x32xf32>
    %45 = tpu.matmul %43, %44, %cst_24 {dimension_numbers = #tpu.dot_dimension_numbers<[1], [0], [0], [1], [0, 0, 1, 1], [], []>} : vector<16x32xf32>, vector<32x32xf32>, vector<16x32xf32> -> vector<16x32xf32>
    %c0_25 = arith.constant 0 : index
    %c0_26 = arith.constant 0 : index
    %46 = vector.load %arg6[%c0_25, %c0_26] : memref<1x32xf32, #tpu.memory_space<vmem>>, vector<1x32xf32>
    %47 = vector.broadcast %46 : vector<1x32xf32> to vector<16x32xf32>
    %48 = arith.addf %45, %47 : vector<16x32xf32>
    %49 = arith.negf %48 : vector<16x32xf32>
    %50 = math.exp %49 : vector<16x32xf32>
    %cst_27 = arith.constant 1.000000e+00 : f32
    %51 = vector.broadcast %cst_27 : f32 to vector<16x32xf32>
    %52 = arith.addf %51, %50 : vector<16x32xf32>
    %53 = arith.divf %51, %52 : vector<16x32xf32>
    %54 = arith.mulf %53, %43 : vector<16x32xf32>
    %cst_28 = arith.constant 1.000000e+00 : f32
    %55 = vector.broadcast %cst_28 : f32 to vector<16x32xf32>
    %56 = arith.subf %55, %53 : vector<16x32xf32>
    %57 = arith.mulf %56, %0 : vector<16x32xf32>
    %58 = arith.addf %54, %57 : vector<16x32xf32>
    %c0_29 = arith.constant 0 : index
    %c0_30 = arith.constant 0 : index
    %c0_31 = arith.constant 0 : index
    %59 = vector.load %arg9[%c0_29, %c0_30, %c0_31] : memref<2x32x96xf32, #tpu.memory_space<vmem>>, vector<1x32x96xf32>
    %60 = vector.shape_cast %59 : vector<1x32x96xf32> to vector<32x96xf32>
    %cst_32 = arith.constant dense<0.000000e+00> : vector<16x96xf32>
    %61 = tpu.matmul %58, %60, %cst_32 {dimension_numbers = #tpu.dot_dimension_numbers<[1], [0], [0], [1], [0, 0, 1, 1], [], []>} : vector<16x32xf32>, vector<32x96xf32>, vector<16x96xf32> -> vector<16x96xf32>
    %c0_33 = arith.constant 0 : index
    %c0_34 = arith.constant 0 : index
    %c0_35 = arith.constant 0 : index
    %62 = vector.load %arg10[%c0_33, %c0_34, %c0_35] : memref<2x1x96xf32, #tpu.memory_space<vmem>>, vector<1x1x96xf32>
    %63 = vector.shape_cast %62 : vector<1x1x96xf32> to vector<1x96xf32>
    %64 = vector.broadcast %63 : vector<1x96xf32> to vector<16x96xf32>
    %65 = arith.addf %61, %64 : vector<16x96xf32>
    %66 = vector.shape_cast %65 : vector<16x96xf32> to vector<2x8x96xf32>
    %67 = vector.extract_strided_slice %66 {offsets = [0, 0, 0], sizes = [2, 8, 8], strides = [1, 1, 1]} : vector<2x8x96xf32> to vector<2x8x8xf32>
    %68 = vector.extract_strided_slice %66 {offsets = [0, 0, 32], sizes = [2, 8, 8], strides = [1, 1, 1]} : vector<2x8x96xf32> to vector<2x8x8xf32>
    %69 = vector.extract_strided_slice %66 {offsets = [0, 0, 64], sizes = [2, 8, 8], strides = [1, 1, 1]} : vector<2x8x96xf32> to vector<2x8x8xf32>
    "tpu.trace_start"() <{level = 10 : i32, message = "bqd,bkd->bqk"}> : () -> ()
    %cst_36 = arith.constant dense<0.000000e+00> : vector<2x8x8xf32>
    %70 = tpu.matmul %67, %68, %cst_36 {dimension_numbers = #tpu.dot_dimension_numbers<[2], [2], [1], [1], [0, 0, 0, 1, 1, 1], [0], [0]>} : vector<2x8x8xf32>, vector<2x8x8xf32>, vector<2x8x8xf32> -> vector<2x8x8xf32>
    "tpu.trace_stop"() : () -> ()
    %cst_37 = arith.constant 0.353553385 : f32
    %71 = vector.broadcast %cst_37 : f32 to vector<2x8x8xf32>
    %72 = arith.mulf %70, %71 : vector<2x8x8xf32>
    %cst_38 = arith.constant dense<0xFF800000> : vector<2x8xf32>
    %73 = vector.multi_reduction <maximumf>, %72, %cst_38 [2] : vector<2x8x8xf32> to vector<2x8xf32>
    %74 = vector.shape_cast %73 : vector<2x8xf32> to vector<2x8x1xf32>
    %75 = vector.broadcast %74 : vector<2x8x1xf32> to vector<2x8x8xf32>
    %76 = arith.subf %72, %75 : vector<2x8x8xf32>
    %77 = math.exp %76 : vector<2x8x8xf32>
    %cst_39 = arith.constant dense<0.000000e+00> : vector<2x8xf32>
    %78 = vector.multi_reduction <add>, %77, %cst_39 [2] : vector<2x8x8xf32> to vector<2x8xf32>
    %79 = vector.shape_cast %78 : vector<2x8xf32> to vector<2x8x1xf32>
    %80 = tpu.reciprocal %79 {approx = true} : vector<2x8x1xf32> -> vector<2x8x1xf32>
    %81 = vector.broadcast %80 : vector<2x8x1xf32> to vector<2x8x8xf32>
    %82 = arith.mulf %77, %81 : vector<2x8x8xf32>
    "tpu.trace_start"() <{level = 10 : i32, message = "bqk,bkd->bqd"}> : () -> ()
    %cst_40 = arith.constant dense<0.000000e+00> : vector<2x8x8xf32>
    %83 = tpu.matmul %82, %69, %cst_40 {dimension_numbers = #tpu.dot_dimension_numbers<[2], [1], [1], [2], [0, 0, 0, 1, 1, 2], [0], [0]>} : vector<2x8x8xf32>, vector<2x8x8xf32>, vector<2x8x8xf32> -> vector<2x8x8xf32>
    "tpu.trace_stop"() : () -> ()
    %84 = vector.extract_strided_slice %66 {offsets = [0, 0, 8], sizes = [2, 8, 8], strides = [1, 1, 1]} : vector<2x8x96xf32> to vector<2x8x8xf32>
    %85 = vector.extract_strided_slice %66 {offsets = [0, 0, 40], sizes = [2, 8, 8], strides = [1, 1, 1]} : vector<2x8x96xf32> to vector<2x8x8xf32>
    %86 = vector.extract_strided_slice %66 {offsets = [0, 0, 72], sizes = [2, 8, 8], strides = [1, 1, 1]} : vector<2x8x96xf32> to vector<2x8x8xf32>
    "tpu.trace_start"() <{level = 10 : i32, message = "bqd,bkd->bqk"}> : () -> ()
    %cst_41 = arith.constant dense<0.000000e+00> : vector<2x8x8xf32>
    %87 = tpu.matmul %84, %85, %cst_41 {dimension_numbers = #tpu.dot_dimension_numbers<[2], [2], [1], [1], [0, 0, 0, 1, 1, 1], [0], [0]>} : vector<2x8x8xf32>, vector<2x8x8xf32>, vector<2x8x8xf32> -> vector<2x8x8xf32>
    "tpu.trace_stop"() : () -> ()
    %cst_42 = arith.constant 0.353553385 : f32
    %88 = vector.broadcast %cst_42 : f32 to vector<2x8x8xf32>
    %89 = arith.mulf %87, %88 : vector<2x8x8xf32>
    %cst_43 = arith.constant dense<0xFF800000> : vector<2x8xf32>
    %90 = vector.multi_reduction <maximumf>, %89, %cst_43 [2] : vector<2x8x8xf32> to vector<2x8xf32>
    %91 = vector.shape_cast %90 : vector<2x8xf32> to vector<2x8x1xf32>
    %92 = vector.broadcast %91 : vector<2x8x1xf32> to vector<2x8x8xf32>
    %93 = arith.subf %89, %92 : vector<2x8x8xf32>
    %94 = math.exp %93 : vector<2x8x8xf32>
    %cst_44 = arith.constant dense<0.000000e+00> : vector<2x8xf32>
    %95 = vector.multi_reduction <add>, %94, %cst_44 [2] : vector<2x8x8xf32> to vector<2x8xf32>
    %96 = vector.shape_cast %95 : vector<2x8xf32> to vector<2x8x1xf32>
    %97 = tpu.reciprocal %96 {approx = true} : vector<2x8x1xf32> -> vector<2x8x1xf32>
    %98 = vector.broadcast %97 : vector<2x8x1xf32> to vector<2x8x8xf32>
    %99 = arith.mulf %94, %98 : vector<2x8x8xf32>
    "tpu.trace_start"() <{level = 10 : i32, message = "bqk,bkd->bqd"}> : () -> ()
    %cst_45 = arith.constant dense<0.000000e+00> : vector<2x8x8xf32>
    %100 = tpu.matmul %99, %86, %cst_45 {dimension_numbers = #tpu.dot_dimension_numbers<[2], [1], [1], [2], [0, 0, 0, 1, 1, 2], [0], [0]>} : vector<2x8x8xf32>, vector<2x8x8xf32>, vector<2x8x8xf32> -> vector<2x8x8xf32>
    "tpu.trace_stop"() : () -> ()
    %101 = vector.extract_strided_slice %66 {offsets = [0, 0, 16], sizes = [2, 8, 8], strides = [1, 1, 1]} : vector<2x8x96xf32> to vector<2x8x8xf32>
    %102 = vector.extract_strided_slice %66 {offsets = [0, 0, 48], sizes = [2, 8, 8], strides = [1, 1, 1]} : vector<2x8x96xf32> to vector<2x8x8xf32>
    %103 = vector.extract_strided_slice %66 {offsets = [0, 0, 80], sizes = [2, 8, 8], strides = [1, 1, 1]} : vector<2x8x96xf32> to vector<2x8x8xf32>
    "tpu.trace_start"() <{level = 10 : i32, message = "bqd,bkd->bqk"}> : () -> ()
    %cst_46 = arith.constant dense<0.000000e+00> : vector<2x8x8xf32>
    %104 = tpu.matmul %101, %102, %cst_46 {dimension_numbers = #tpu.dot_dimension_numbers<[2], [2], [1], [1], [0, 0, 0, 1, 1, 1], [0], [0]>} : vector<2x8x8xf32>, vector<2x8x8xf32>, vector<2x8x8xf32> -> vector<2x8x8xf32>
    "tpu.trace_stop"() : () -> ()
    %cst_47 = arith.constant 0.353553385 : f32
    %105 = vector.broadcast %cst_47 : f32 to vector<2x8x8xf32>
    %106 = arith.mulf %104, %105 : vector<2x8x8xf32>
    %cst_48 = arith.constant dense<0xFF800000> : vector<2x8xf32>
    %107 = vector.multi_reduction <maximumf>, %106, %cst_48 [2] : vector<2x8x8xf32> to vector<2x8xf32>
    %108 = vector.shape_cast %107 : vector<2x8xf32> to vector<2x8x1xf32>
    %109 = vector.broadcast %108 : vector<2x8x1xf32> to vector<2x8x8xf32>
    %110 = arith.subf %106, %109 : vector<2x8x8xf32>
    %111 = math.exp %110 : vector<2x8x8xf32>
    %cst_49 = arith.constant dense<0.000000e+00> : vector<2x8xf32>
    %112 = vector.multi_reduction <add>, %111, %cst_49 [2] : vector<2x8x8xf32> to vector<2x8xf32>
    %113 = vector.shape_cast %112 : vector<2x8xf32> to vector<2x8x1xf32>
    %114 = tpu.reciprocal %113 {approx = true} : vector<2x8x1xf32> -> vector<2x8x1xf32>
    %115 = vector.broadcast %114 : vector<2x8x1xf32> to vector<2x8x8xf32>
    %116 = arith.mulf %111, %115 : vector<2x8x8xf32>
    "tpu.trace_start"() <{level = 10 : i32, message = "bqk,bkd->bqd"}> : () -> ()
    %cst_50 = arith.constant dense<0.000000e+00> : vector<2x8x8xf32>
    %117 = tpu.matmul %116, %103, %cst_50 {dimension_numbers = #tpu.dot_dimension_numbers<[2], [1], [1], [2], [0, 0, 0, 1, 1, 2], [0], [0]>} : vector<2x8x8xf32>, vector<2x8x8xf32>, vector<2x8x8xf32> -> vector<2x8x8xf32>
    "tpu.trace_stop"() : () -> ()
    %118 = vector.extract_strided_slice %66 {offsets = [0, 0, 24], sizes = [2, 8, 8], strides = [1, 1, 1]} : vector<2x8x96xf32> to vector<2x8x8xf32>
    %119 = vector.extract_strided_slice %66 {offsets = [0, 0, 56], sizes = [2, 8, 8], strides = [1, 1, 1]} : vector<2x8x96xf32> to vector<2x8x8xf32>
    %120 = vector.extract_strided_slice %66 {offsets = [0, 0, 88], sizes = [2, 8, 8], strides = [1, 1, 1]} : vector<2x8x96xf32> to vector<2x8x8xf32>
    "tpu.trace_start"() <{level = 10 : i32, message = "bqd,bkd->bqk"}> : () -> ()
    %cst_51 = arith.constant dense<0.000000e+00> : vector<2x8x8xf32>
    %121 = tpu.matmul %118, %119, %cst_51 {dimension_numbers = #tpu.dot_dimension_numbers<[2], [2], [1], [1], [0, 0, 0, 1, 1, 1], [0], [0]>} : vector<2x8x8xf32>, vector<2x8x8xf32>, vector<2x8x8xf32> -> vector<2x8x8xf32>
    "tpu.trace_stop"() : () -> ()
    %cst_52 = arith.constant 0.353553385 : f32
    %122 = vector.broadcast %cst_52 : f32 to vector<2x8x8xf32>
    %123 = arith.mulf %121, %122 : vector<2x8x8xf32>
    %cst_53 = arith.constant dense<0xFF800000> : vector<2x8xf32>
    %124 = vector.multi_reduction <maximumf>, %123, %cst_53 [2] : vector<2x8x8xf32> to vector<2x8xf32>
    %125 = vector.shape_cast %124 : vector<2x8xf32> to vector<2x8x1xf32>
    %126 = vector.broadcast %125 : vector<2x8x1xf32> to vector<2x8x8xf32>
    %127 = arith.subf %123, %126 : vector<2x8x8xf32>
    %128 = math.exp %127 : vector<2x8x8xf32>
    %cst_54 = arith.constant dense<0.000000e+00> : vector<2x8xf32>
    %129 = vector.multi_reduction <add>, %128, %cst_54 [2] : vector<2x8x8xf32> to vector<2x8xf32>
    %130 = vector.shape_cast %129 : vector<2x8xf32> to vector<2x8x1xf32>
    %131 = tpu.reciprocal %130 {approx = true} : vector<2x8x1xf32> -> vector<2x8x1xf32>
    %132 = vector.broadcast %131 : vector<2x8x1xf32> to vector<2x8x8xf32>
    %133 = arith.mulf %128, %132 : vector<2x8x8xf32>
    "tpu.trace_start"() <{level = 10 : i32, message = "bqk,bkd->bqd"}> : () -> ()
    %cst_55 = arith.constant dense<0.000000e+00> : vector<2x8x8xf32>
    %134 = tpu.matmul %133, %120, %cst_55 {dimension_numbers = #tpu.dot_dimension_numbers<[2], [1], [1], [2], [0, 0, 0, 1, 1, 2], [0], [0]>} : vector<2x8x8xf32>, vector<2x8x8xf32>, vector<2x8x8xf32> -> vector<2x8x8xf32>
    "tpu.trace_stop"() : () -> ()
    %135 = tpu.concatenate %83, %100, %117, %134 in 2 : vector<2x8x8xf32>, vector<2x8x8xf32>, vector<2x8x8xf32>, vector<2x8x8xf32> -> vector<2x8x32xf32>
    %136 = vector.shape_cast %135 : vector<2x8x32xf32> to vector<16x32xf32>
    %c0_56 = arith.constant 0 : index
    %c0_57 = arith.constant 0 : index
    %c0_58 = arith.constant 0 : index
    %137 = vector.load %arg11[%c0_56, %c0_57, %c0_58] : memref<2x32x32xf32, #tpu.memory_space<vmem>>, vector<1x32x32xf32>
    %138 = vector.shape_cast %137 : vector<1x32x32xf32> to vector<32x32xf32>
    %cst_59 = arith.constant dense<0.000000e+00> : vector<16x32xf32>
    %139 = tpu.matmul %136, %138, %cst_59 {dimension_numbers = #tpu.dot_dimension_numbers<[1], [0], [0], [1], [0, 0, 1, 1], [], []>} : vector<16x32xf32>, vector<32x32xf32>, vector<16x32xf32> -> vector<16x32xf32>
    %c0_60 = arith.constant 0 : index
    %c0_61 = arith.constant 0 : index
    %c0_62 = arith.constant 0 : index
    %140 = vector.load %arg12[%c0_60, %c0_61, %c0_62] : memref<2x1x32xf32, #tpu.memory_space<vmem>>, vector<1x1x32xf32>
    %141 = vector.shape_cast %140 : vector<1x1x32xf32> to vector<1x32xf32>
    %142 = vector.broadcast %141 : vector<1x32xf32> to vector<16x32xf32>
    %143 = arith.addf %139, %142 : vector<16x32xf32>
    %144 = arith.addf %58, %143 : vector<16x32xf32>
    %c0_63 = arith.constant 0 : index
    %c0_64 = arith.constant 0 : index
    %c0_65 = arith.constant 0 : index
    %145 = vector.load %arg13[%c0_63, %c0_64, %c0_65] : memref<2x1x32xf32, #tpu.memory_space<vmem>>, vector<1x1x32xf32>
    %146 = vector.shape_cast %145 : vector<1x1x32xf32> to vector<1x32xf32>
    %c0_66 = arith.constant 0 : index
    %c0_67 = arith.constant 0 : index
    %c0_68 = arith.constant 0 : index
    %147 = vector.load %arg14[%c0_66, %c0_67, %c0_68] : memref<2x1x32xf32, #tpu.memory_space<vmem>>, vector<1x1x32xf32>
    %148 = vector.shape_cast %147 : vector<1x1x32xf32> to vector<1x32xf32>
    %cst_69 = arith.constant dense<0.000000e+00> : vector<16xf32>
    %149 = vector.multi_reduction <add>, %144, %cst_69 [1] : vector<16x32xf32> to vector<16xf32>
    %150 = vector.shape_cast %149 : vector<16xf32> to vector<16x1xf32>
    %cst_70 = arith.constant 3.200000e+01 : f32
    %151 = vector.broadcast %cst_70 : f32 to vector<16x1xf32>
    %152 = arith.divf %150, %151 : vector<16x1xf32>
    %153 = vector.broadcast %152 : vector<16x1xf32> to vector<16x32xf32>
    %154 = arith.subf %144, %153 : vector<16x32xf32>
    %155 = arith.mulf %154, %154 : vector<16x32xf32>
    %cst_71 = arith.constant dense<0.000000e+00> : vector<16xf32>
    %156 = vector.multi_reduction <add>, %155, %cst_71 [1] : vector<16x32xf32> to vector<16xf32>
    %157 = vector.shape_cast %156 : vector<16xf32> to vector<16x1xf32>
    %cst_72 = arith.constant 3.200000e+01 : f32
    %158 = vector.broadcast %cst_72 : f32 to vector<16x1xf32>
    %159 = arith.divf %157, %158 : vector<16x1xf32>
    %160 = vector.broadcast %152 : vector<16x1xf32> to vector<16x32xf32>
    %161 = arith.subf %144, %160 : vector<16x32xf32>
    %cst_73 = arith.constant 9.99999974E-6 : f32
    %162 = vector.broadcast %cst_73 : f32 to vector<16x1xf32>
    %163 = arith.addf %159, %162 : vector<16x1xf32>
    %164 = math.rsqrt %163 : vector<16x1xf32>
    %165 = vector.broadcast %164 : vector<16x1xf32> to vector<16x32xf32>
    %166 = arith.mulf %161, %165 : vector<16x32xf32>
    %167 = vector.broadcast %146 : vector<1x32xf32> to vector<16x32xf32>
    %168 = arith.mulf %166, %167 : vector<16x32xf32>
    %169 = vector.broadcast %148 : vector<1x32xf32> to vector<16x32xf32>
    %170 = arith.addf %168, %169 : vector<16x32xf32>
    %c1 = arith.constant 1 : index
    %c0_74 = arith.constant 0 : index
    %c0_75 = arith.constant 0 : index
    %171 = vector.load %arg9[%c1, %c0_74, %c0_75] : memref<2x32x96xf32, #tpu.memory_space<vmem>>, vector<1x32x96xf32>
    %172 = vector.shape_cast %171 : vector<1x32x96xf32> to vector<32x96xf32>
    %cst_76 = arith.constant dense<0.000000e+00> : vector<16x96xf32>
    %173 = tpu.matmul %170, %172, %cst_76 {dimension_numbers = #tpu.dot_dimension_numbers<[1], [0], [0], [1], [0, 0, 1, 1], [], []>} : vector<16x32xf32>, vector<32x96xf32>, vector<16x96xf32> -> vector<16x96xf32>
    %c1_77 = arith.constant 1 : index
    %c0_78 = arith.constant 0 : index
    %c0_79 = arith.constant 0 : index
    %174 = vector.load %arg10[%c1_77, %c0_78, %c0_79] : memref<2x1x96xf32, #tpu.memory_space<vmem>>, vector<1x1x96xf32>
    %175 = vector.shape_cast %174 : vector<1x1x96xf32> to vector<1x96xf32>
    %176 = vector.broadcast %175 : vector<1x96xf32> to vector<16x96xf32>
    %177 = arith.addf %173, %176 : vector<16x96xf32>
    %178 = vector.shape_cast %177 : vector<16x96xf32> to vector<2x8x96xf32>
    %179 = vector.extract_strided_slice %178 {offsets = [0, 0, 0], sizes = [2, 8, 8], strides = [1, 1, 1]} : vector<2x8x96xf32> to vector<2x8x8xf32>
    %180 = vector.extract_strided_slice %178 {offsets = [0, 0, 32], sizes = [2, 8, 8], strides = [1, 1, 1]} : vector<2x8x96xf32> to vector<2x8x8xf32>
    %181 = vector.extract_strided_slice %178 {offsets = [0, 0, 64], sizes = [2, 8, 8], strides = [1, 1, 1]} : vector<2x8x96xf32> to vector<2x8x8xf32>
    "tpu.trace_start"() <{level = 10 : i32, message = "bqd,bkd->bqk"}> : () -> ()
    %cst_80 = arith.constant dense<0.000000e+00> : vector<2x8x8xf32>
    %182 = tpu.matmul %179, %180, %cst_80 {dimension_numbers = #tpu.dot_dimension_numbers<[2], [2], [1], [1], [0, 0, 0, 1, 1, 1], [0], [0]>} : vector<2x8x8xf32>, vector<2x8x8xf32>, vector<2x8x8xf32> -> vector<2x8x8xf32>
    "tpu.trace_stop"() : () -> ()
    %cst_81 = arith.constant 0.353553385 : f32
    %183 = vector.broadcast %cst_81 : f32 to vector<2x8x8xf32>
    %184 = arith.mulf %182, %183 : vector<2x8x8xf32>
    %cst_82 = arith.constant dense<0xFF800000> : vector<2x8xf32>
    %185 = vector.multi_reduction <maximumf>, %184, %cst_82 [2] : vector<2x8x8xf32> to vector<2x8xf32>
    %186 = vector.shape_cast %185 : vector<2x8xf32> to vector<2x8x1xf32>
    %187 = vector.broadcast %186 : vector<2x8x1xf32> to vector<2x8x8xf32>
    %188 = arith.subf %184, %187 : vector<2x8x8xf32>
    %189 = math.exp %188 : vector<2x8x8xf32>
    %cst_83 = arith.constant dense<0.000000e+00> : vector<2x8xf32>
    %190 = vector.multi_reduction <add>, %189, %cst_83 [2] : vector<2x8x8xf32> to vector<2x8xf32>
    %191 = vector.shape_cast %190 : vector<2x8xf32> to vector<2x8x1xf32>
    %192 = tpu.reciprocal %191 {approx = true} : vector<2x8x1xf32> -> vector<2x8x1xf32>
    %193 = vector.broadcast %192 : vector<2x8x1xf32> to vector<2x8x8xf32>
    %194 = arith.mulf %189, %193 : vector<2x8x8xf32>
    "tpu.trace_start"() <{level = 10 : i32, message = "bqk,bkd->bqd"}> : () -> ()
    %cst_84 = arith.constant dense<0.000000e+00> : vector<2x8x8xf32>
    %195 = tpu.matmul %194, %181, %cst_84 {dimension_numbers = #tpu.dot_dimension_numbers<[2], [1], [1], [2], [0, 0, 0, 1, 1, 2], [0], [0]>} : vector<2x8x8xf32>, vector<2x8x8xf32>, vector<2x8x8xf32> -> vector<2x8x8xf32>
    "tpu.trace_stop"() : () -> ()
    %196 = vector.extract_strided_slice %178 {offsets = [0, 0, 8], sizes = [2, 8, 8], strides = [1, 1, 1]} : vector<2x8x96xf32> to vector<2x8x8xf32>
    %197 = vector.extract_strided_slice %178 {offsets = [0, 0, 40], sizes = [2, 8, 8], strides = [1, 1, 1]} : vector<2x8x96xf32> to vector<2x8x8xf32>
    %198 = vector.extract_strided_slice %178 {offsets = [0, 0, 72], sizes = [2, 8, 8], strides = [1, 1, 1]} : vector<2x8x96xf32> to vector<2x8x8xf32>
    "tpu.trace_start"() <{level = 10 : i32, message = "bqd,bkd->bqk"}> : () -> ()
    %cst_85 = arith.constant dense<0.000000e+00> : vector<2x8x8xf32>
    %199 = tpu.matmul %196, %197, %cst_85 {dimension_numbers = #tpu.dot_dimension_numbers<[2], [2], [1], [1], [0, 0, 0, 1, 1, 1], [0], [0]>} : vector<2x8x8xf32>, vector<2x8x8xf32>, vector<2x8x8xf32> -> vector<2x8x8xf32>
    "tpu.trace_stop"() : () -> ()
    %cst_86 = arith.constant 0.353553385 : f32
    %200 = vector.broadcast %cst_86 : f32 to vector<2x8x8xf32>
    %201 = arith.mulf %199, %200 : vector<2x8x8xf32>
    %cst_87 = arith.constant dense<0xFF800000> : vector<2x8xf32>
    %202 = vector.multi_reduction <maximumf>, %201, %cst_87 [2] : vector<2x8x8xf32> to vector<2x8xf32>
    %203 = vector.shape_cast %202 : vector<2x8xf32> to vector<2x8x1xf32>
    %204 = vector.broadcast %203 : vector<2x8x1xf32> to vector<2x8x8xf32>
    %205 = arith.subf %201, %204 : vector<2x8x8xf32>
    %206 = math.exp %205 : vector<2x8x8xf32>
    %cst_88 = arith.constant dense<0.000000e+00> : vector<2x8xf32>
    %207 = vector.multi_reduction <add>, %206, %cst_88 [2] : vector<2x8x8xf32> to vector<2x8xf32>
    %208 = vector.shape_cast %207 : vector<2x8xf32> to vector<2x8x1xf32>
    %209 = tpu.reciprocal %208 {approx = true} : vector<2x8x1xf32> -> vector<2x8x1xf32>
    %210 = vector.broadcast %209 : vector<2x8x1xf32> to vector<2x8x8xf32>
    %211 = arith.mulf %206, %210 : vector<2x8x8xf32>
    "tpu.trace_start"() <{level = 10 : i32, message = "bqk,bkd->bqd"}> : () -> ()
    %cst_89 = arith.constant dense<0.000000e+00> : vector<2x8x8xf32>
    %212 = tpu.matmul %211, %198, %cst_89 {dimension_numbers = #tpu.dot_dimension_numbers<[2], [1], [1], [2], [0, 0, 0, 1, 1, 2], [0], [0]>} : vector<2x8x8xf32>, vector<2x8x8xf32>, vector<2x8x8xf32> -> vector<2x8x8xf32>
    "tpu.trace_stop"() : () -> ()
    %213 = vector.extract_strided_slice %178 {offsets = [0, 0, 16], sizes = [2, 8, 8], strides = [1, 1, 1]} : vector<2x8x96xf32> to vector<2x8x8xf32>
    %214 = vector.extract_strided_slice %178 {offsets = [0, 0, 48], sizes = [2, 8, 8], strides = [1, 1, 1]} : vector<2x8x96xf32> to vector<2x8x8xf32>
    %215 = vector.extract_strided_slice %178 {offsets = [0, 0, 80], sizes = [2, 8, 8], strides = [1, 1, 1]} : vector<2x8x96xf32> to vector<2x8x8xf32>
    "tpu.trace_start"() <{level = 10 : i32, message = "bqd,bkd->bqk"}> : () -> ()
    %cst_90 = arith.constant dense<0.000000e+00> : vector<2x8x8xf32>
    %216 = tpu.matmul %213, %214, %cst_90 {dimension_numbers = #tpu.dot_dimension_numbers<[2], [2], [1], [1], [0, 0, 0, 1, 1, 1], [0], [0]>} : vector<2x8x8xf32>, vector<2x8x8xf32>, vector<2x8x8xf32> -> vector<2x8x8xf32>
    "tpu.trace_stop"() : () -> ()
    %cst_91 = arith.constant 0.353553385 : f32
    %217 = vector.broadcast %cst_91 : f32 to vector<2x8x8xf32>
    %218 = arith.mulf %216, %217 : vector<2x8x8xf32>
    %cst_92 = arith.constant dense<0xFF800000> : vector<2x8xf32>
    %219 = vector.multi_reduction <maximumf>, %218, %cst_92 [2] : vector<2x8x8xf32> to vector<2x8xf32>
    %220 = vector.shape_cast %219 : vector<2x8xf32> to vector<2x8x1xf32>
    %221 = vector.broadcast %220 : vector<2x8x1xf32> to vector<2x8x8xf32>
    %222 = arith.subf %218, %221 : vector<2x8x8xf32>
    %223 = math.exp %222 : vector<2x8x8xf32>
    %cst_93 = arith.constant dense<0.000000e+00> : vector<2x8xf32>
    %224 = vector.multi_reduction <add>, %223, %cst_93 [2] : vector<2x8x8xf32> to vector<2x8xf32>
    %225 = vector.shape_cast %224 : vector<2x8xf32> to vector<2x8x1xf32>
    %226 = tpu.reciprocal %225 {approx = true} : vector<2x8x1xf32> -> vector<2x8x1xf32>
    %227 = vector.broadcast %226 : vector<2x8x1xf32> to vector<2x8x8xf32>
    %228 = arith.mulf %223, %227 : vector<2x8x8xf32>
    "tpu.trace_start"() <{level = 10 : i32, message = "bqk,bkd->bqd"}> : () -> ()
    %cst_94 = arith.constant dense<0.000000e+00> : vector<2x8x8xf32>
    %229 = tpu.matmul %228, %215, %cst_94 {dimension_numbers = #tpu.dot_dimension_numbers<[2], [1], [1], [2], [0, 0, 0, 1, 1, 2], [0], [0]>} : vector<2x8x8xf32>, vector<2x8x8xf32>, vector<2x8x8xf32> -> vector<2x8x8xf32>
    "tpu.trace_stop"() : () -> ()
    %230 = vector.extract_strided_slice %178 {offsets = [0, 0, 24], sizes = [2, 8, 8], strides = [1, 1, 1]} : vector<2x8x96xf32> to vector<2x8x8xf32>
    %231 = vector.extract_strided_slice %178 {offsets = [0, 0, 56], sizes = [2, 8, 8], strides = [1, 1, 1]} : vector<2x8x96xf32> to vector<2x8x8xf32>
    %232 = vector.extract_strided_slice %178 {offsets = [0, 0, 88], sizes = [2, 8, 8], strides = [1, 1, 1]} : vector<2x8x96xf32> to vector<2x8x8xf32>
    "tpu.trace_start"() <{level = 10 : i32, message = "bqd,bkd->bqk"}> : () -> ()
    %cst_95 = arith.constant dense<0.000000e+00> : vector<2x8x8xf32>
    %233 = tpu.matmul %230, %231, %cst_95 {dimension_numbers = #tpu.dot_dimension_numbers<[2], [2], [1], [1], [0, 0, 0, 1, 1, 1], [0], [0]>} : vector<2x8x8xf32>, vector<2x8x8xf32>, vector<2x8x8xf32> -> vector<2x8x8xf32>
    "tpu.trace_stop"() : () -> ()
    %cst_96 = arith.constant 0.353553385 : f32
    %234 = vector.broadcast %cst_96 : f32 to vector<2x8x8xf32>
    %235 = arith.mulf %233, %234 : vector<2x8x8xf32>
    %cst_97 = arith.constant dense<0xFF800000> : vector<2x8xf32>
    %236 = vector.multi_reduction <maximumf>, %235, %cst_97 [2] : vector<2x8x8xf32> to vector<2x8xf32>
    %237 = vector.shape_cast %236 : vector<2x8xf32> to vector<2x8x1xf32>
    %238 = vector.broadcast %237 : vector<2x8x1xf32> to vector<2x8x8xf32>
    %239 = arith.subf %235, %238 : vector<2x8x8xf32>
    %240 = math.exp %239 : vector<2x8x8xf32>
    %cst_98 = arith.constant dense<0.000000e+00> : vector<2x8xf32>
    %241 = vector.multi_reduction <add>, %240, %cst_98 [2] : vector<2x8x8xf32> to vector<2x8xf32>
    %242 = vector.shape_cast %241 : vector<2x8xf32> to vector<2x8x1xf32>
    %243 = tpu.reciprocal %242 {approx = true} : vector<2x8x1xf32> -> vector<2x8x1xf32>
    %244 = vector.broadcast %243 : vector<2x8x1xf32> to vector<2x8x8xf32>
    %245 = arith.mulf %240, %244 : vector<2x8x8xf32>
    "tpu.trace_start"() <{level = 10 : i32, message = "bqk,bkd->bqd"}> : () -> ()
    %cst_99 = arith.constant dense<0.000000e+00> : vector<2x8x8xf32>
    %246 = tpu.matmul %245, %232, %cst_99 {dimension_numbers = #tpu.dot_dimension_numbers<[2], [1], [1], [2], [0, 0, 0, 1, 1, 2], [0], [0]>} : vector<2x8x8xf32>, vector<2x8x8xf32>, vector<2x8x8xf32> -> vector<2x8x8xf32>
    "tpu.trace_stop"() : () -> ()
    %247 = tpu.concatenate %195, %212, %229, %246 in 2 : vector<2x8x8xf32>, vector<2x8x8xf32>, vector<2x8x8xf32>, vector<2x8x8xf32> -> vector<2x8x32xf32>
    %248 = vector.shape_cast %247 : vector<2x8x32xf32> to vector<16x32xf32>
    %c1_100 = arith.constant 1 : index
    %c0_101 = arith.constant 0 : index
    %c0_102 = arith.constant 0 : index
    %249 = vector.load %arg11[%c1_100, %c0_101, %c0_102] : memref<2x32x32xf32, #tpu.memory_space<vmem>>, vector<1x32x32xf32>
    %250 = vector.shape_cast %249 : vector<1x32x32xf32> to vector<32x32xf32>
    %cst_103 = arith.constant dense<0.000000e+00> : vector<16x32xf32>
    %251 = tpu.matmul %248, %250, %cst_103 {dimension_numbers = #tpu.dot_dimension_numbers<[1], [0], [0], [1], [0, 0, 1, 1], [], []>} : vector<16x32xf32>, vector<32x32xf32>, vector<16x32xf32> -> vector<16x32xf32>
    %c1_104 = arith.constant 1 : index
    %c0_105 = arith.constant 0 : index
    %c0_106 = arith.constant 0 : index
    %252 = vector.load %arg12[%c1_104, %c0_105, %c0_106] : memref<2x1x32xf32, #tpu.memory_space<vmem>>, vector<1x1x32xf32>
    %253 = vector.shape_cast %252 : vector<1x1x32xf32> to vector<1x32xf32>
    %254 = vector.broadcast %253 : vector<1x32xf32> to vector<16x32xf32>
    %255 = arith.addf %251, %254 : vector<16x32xf32>
    %256 = arith.addf %170, %255 : vector<16x32xf32>
    %c1_107 = arith.constant 1 : index
    %c0_108 = arith.constant 0 : index
    %c0_109 = arith.constant 0 : index
    %257 = vector.load %arg13[%c1_107, %c0_108, %c0_109] : memref<2x1x32xf32, #tpu.memory_space<vmem>>, vector<1x1x32xf32>
    %258 = vector.shape_cast %257 : vector<1x1x32xf32> to vector<1x32xf32>
    %c1_110 = arith.constant 1 : index
    %c0_111 = arith.constant 0 : index
    %c0_112 = arith.constant 0 : index
    %259 = vector.load %arg14[%c1_110, %c0_111, %c0_112] : memref<2x1x32xf32, #tpu.memory_space<vmem>>, vector<1x1x32xf32>
    %260 = vector.shape_cast %259 : vector<1x1x32xf32> to vector<1x32xf32>
    %cst_113 = arith.constant dense<0.000000e+00> : vector<16xf32>
    %261 = vector.multi_reduction <add>, %256, %cst_113 [1] : vector<16x32xf32> to vector<16xf32>
    %262 = vector.shape_cast %261 : vector<16xf32> to vector<16x1xf32>
    %cst_114 = arith.constant 3.200000e+01 : f32
    %263 = vector.broadcast %cst_114 : f32 to vector<16x1xf32>
    %264 = arith.divf %262, %263 : vector<16x1xf32>
    %265 = vector.broadcast %264 : vector<16x1xf32> to vector<16x32xf32>
    %266 = arith.subf %256, %265 : vector<16x32xf32>
    %267 = arith.mulf %266, %266 : vector<16x32xf32>
    %cst_115 = arith.constant dense<0.000000e+00> : vector<16xf32>
    %268 = vector.multi_reduction <add>, %267, %cst_115 [1] : vector<16x32xf32> to vector<16xf32>
    %269 = vector.shape_cast %268 : vector<16xf32> to vector<16x1xf32>
    %cst_116 = arith.constant 3.200000e+01 : f32
    %270 = vector.broadcast %cst_116 : f32 to vector<16x1xf32>
    %271 = arith.divf %269, %270 : vector<16x1xf32>
    %272 = vector.broadcast %264 : vector<16x1xf32> to vector<16x32xf32>
    %273 = arith.subf %256, %272 : vector<16x32xf32>
    %cst_117 = arith.constant 9.99999974E-6 : f32
    %274 = vector.broadcast %cst_117 : f32 to vector<16x1xf32>
    %275 = arith.addf %271, %274 : vector<16x1xf32>
    %276 = math.rsqrt %275 : vector<16x1xf32>
    %277 = vector.broadcast %276 : vector<16x1xf32> to vector<16x32xf32>
    %278 = arith.mulf %273, %277 : vector<16x32xf32>
    %279 = vector.broadcast %258 : vector<1x32xf32> to vector<16x32xf32>
    %280 = arith.mulf %278, %279 : vector<16x32xf32>
    %281 = vector.broadcast %260 : vector<1x32xf32> to vector<16x32xf32>
    %282 = arith.addf %280, %281 : vector<16x32xf32>
    %283 = vector.shape_cast %282 : vector<16x32xf32> to vector<2x8x32xf32>
    %284 = vector.extract_strided_slice %283 {offsets = [0, 7, 0], sizes = [2, 1, 32], strides = [1, 1, 1]} : vector<2x8x32xf32> to vector<2x1x32xf32>
    %285 = vector.shape_cast %284 : vector<2x1x32xf32> to vector<2x32xf32>
    %c0_118 = arith.constant 0 : index
    %c0_119 = arith.constant 0 : index
    %286 = vector.load %arg15[%c0_118, %c0_119] : memref<32x128xf32, #tpu.memory_space<vmem>>, vector<32x128xf32>
    %cst_120 = arith.constant dense<0.000000e+00> : vector<2x128xf32>
    %287 = tpu.matmul %285, %286, %cst_120 {dimension_numbers = #tpu.dot_dimension_numbers<[1], [0], [0], [1], [0, 0, 1, 1], [], []>} : vector<2x32xf32>, vector<32x128xf32>, vector<2x128xf32> -> vector<2x128xf32>
    %c0_121 = arith.constant 0 : index
    %c0_122 = arith.constant 0 : index
    %288 = vector.load %arg16[%c0_121, %c0_122] : memref<1x128xf32, #tpu.memory_space<vmem>>, vector<1x128xf32>
    %289 = vector.broadcast %288 : vector<1x128xf32> to vector<2x128xf32>
    %290 = arith.addf %287, %289 : vector<2x128xf32>
    %c0_123 = arith.constant 0 : index
    %c0_124 = arith.constant 0 : index
    %291 = vector.load %arg17[%c0_123, %c0_124] : memref<2x128xf32, #tpu.memory_space<vmem>>, vector<2x128xf32>
    tpu.vector_store %arg17[%c0_123, %c0_124], %290 {strides = array<i32>} : memref<2x128xf32, #tpu.memory_space<vmem>>, vector<2x128xf32>,
    return
  }
}

</mosaic_0001>

<llo_original>
// kernel: tft_forward.1
$region0: #{tft_forward.1}
  #allocation0 [shape = 'u32[]', space=smem, size = 0x4, offset = 0x4, fixed_abs, tag = 'smem constant byte address 0x4 - core index']
  #allocation1 [shape = 'u32[144,128]{1,0:T(1,128)}', space=vmem, size = 0x12000, scoped, tag = 'internal scratch']
  %s0 = inlined_call_operand.vmem [shape: f32[16,32], index: 0, kind: input, shape index: {}]
  %s1 = inlined_call_operand.hbm [shape: f32[32,32], index: 1, kind: input, shape index: {}]
  %s2 = inlined_call_operand.vmem [shape: f32[1,32], index: 2, kind: input, shape index: {}]
  %s3 = inlined_call_operand.hbm [shape: f32[32,32], index: 3, kind: input, shape index: {}]
  %s4 = inlined_call_operand.hbm [shape: f32[1,32], index: 4, kind: input, shape index: {}]
  %s5 = inlined_call_operand.hbm [shape: f32[32,32], index: 5, kind: input, shape index: {}]
  %s6 = inlined_call_operand.hbm [shape: f32[1,32], index: 6, kind: input, shape index: {}]
  %s7 = inlined_call_operand.vmem [shape: f32[1,32], index: 7, kind: input, shape index: {}]
  %s8 = inlined_call_operand.vmem [shape: f32[1,32], index: 8, kind: input, shape index: {}]
  %s9 = inlined_call_operand.hbm [shape: f32[2,32,96], index: 9, kind: input, shape index: {}]
  %s10 = inlined_call_operand.vmem [shape: f32[2,1,96], index: 10, kind: input, shape index: {}]
  %s11 = inlined_call_operand.hbm [shape: f32[2,32,32], index: 11, kind: input, shape index: {}]
  %s12 = inlined_call_operand.vmem [shape: f32[2,1,32], index: 12, kind: input, shape index: {}]
  %s13 = inlined_call_operand.vmem [shape: f32[2,1,32], index: 13, kind: input, shape index: {}]
  %s14 = inlined_call_operand.vmem [shape: f32[2,1,32], index: 14, kind: input, shape index: {}]
  %s15 = inlined_call_operand.hbm [shape: f32[32,128], index: 15, kind: input, shape index: {}]
  %s16 = inlined_call_operand.hbm [shape: f32[1,128], index: 16, kind: input, shape index: {}]
  %s17 = inlined_call_operand.hbm [shape: f32[2,128], index: 17, kind: output, shape index: {}]
  %s18 = sld [smem:[#allocation0]]
  $region114: #{tft_forward.1} parent=0
    _
  %s20 = ssub.s32 1, %s18
  %s21 = scalar_select 0, %s20, %s18
  $region1: #{tft_forward.1} parent=0
    #allocation2 [shape = 'u8[16384]{0}', space=vmem, size = 0x4000, scoped, tag = 'input window, operand 1, single buffered']
    #allocation3 [shape = 's32[1]{0}', space=sflag, size = 0x4, scoped, tag = 'scoped memory for tft_forward.1']
    #allocation4 [shape = 's32[1]{0}', space=sflag, size = 0x4, scoped, tag = 'scoped memory for tft_forward.1']
    #allocation5 [shape = 'u8[16384]{0}', space=vmem, size = 0x4000, scoped, tag = 'input window, operand 3, single buffered']
    #allocation6 [shape = 's32[1]{0}', space=sflag, size = 0x4, scoped, tag = 'scoped memory for tft_forward.1']
    #allocation7 [shape = 'u8[512]{0}', space=vmem, size = 0x400, scoped, tag = 'input window, operand 4, single buffered']
    #allocation8 [shape = 'u8[16384]{0}', space=vmem, size = 0x4000, scoped, tag = 'input window, operand 5, single buffered']
    #allocation9 [shape = 's32[1]{0}', space=sflag, size = 0x4, scoped, tag = 'scoped memory for tft_forward.1']
    #allocation10 [shape = 'u8[512]{0}', space=vmem, size = 0x400, scoped, tag = 'input window, operand 6, single buffered']
    #allocation11 [shape = 'u8[32768]{0}', space=vmem, size = 0x8000, scoped, tag = 'input window, operand 9, single buffered']
    #allocation12 [shape = 's32[1]{0}', space=sflag, size = 0x4, scoped, tag = 'scoped memory for tft_forward.1']
    #allocation13 [shape = 'u8[32768]{0}', space=vmem, size = 0x8000, scoped, tag = 'input window, operand 11, single buffered']
    #allocation14 [shape = 'u8[16384]{0}', space=vmem, size = 0x4000, scoped, tag = 'input window, operand 15, single buffered']
    #allocation15 [shape = 's32[1]{0}', space=sflag, size = 0x4, scoped, tag = 'scoped memory for tft_forward.1']
    #allocation16 [shape = 'u8[512]{0}', space=vmem, size = 0x400, scoped, tag = 'input window, operand 16, single buffered']
    #allocation17 [shape = 'u8[1024]{0}', space=vmem, size = 0x400, scoped, tag = 'output window, operand 0, single buffered']
    %22 = vsyncpa [#allocation3], 0
    %23 = vsyncpa [#allocation6], 0
    %24 = vsyncpa [#allocation9], 0
    %25 = vsyncpa [#allocation12], 0
    %26 = vsyncpa [#allocation15], 0
    %27 = vsyncpa [#allocation4], 0
    // Predicated region
    $region2: #{tft_forward.1} parent=1 // pred_check
      _
    $region3: #{tft_forward.1} parent=1 // pred_check_branch
      %29 = sbr.rel (0) target = $region5
    $region4: #{tft_forward.1} parent=1 // pred_region
      _
    $region5: #{tft_forward.1} parent=1 // pred_fallthru
      _
    // Predicated region
    $region6: #{tft_forward.1} parent=1 // pred_check
      _
    $region7: #{tft_forward.1} parent=1 // pred_check_branch
      %31 = sbr.rel (0) target = $region9
    $region8: #{tft_forward.1} parent=1 // pred_region
      %s33 = ssub.s32 512, 512
      %34 = vsyncadd [#allocation3], %s33
      %s35 = sshll.u32 [#allocation2], 4
      %s36 = int_to_ptr.vmem [resolvable:$true] %s35
      %41 = dma.hbm_to_vmem [thread:$0]  %s1, 512, %s36, [#allocation3], 128, 128, 8
    $region9: #{tft_forward.1} parent=1 // pred_fallthru
      _
    // Predicated region
    $region10: #{tft_forward.1} parent=1 // pred_check
      _
    $region11: #{tft_forward.1} parent=1 // pred_check_branch
      %43 = sbr.rel (0) target = $region13
    $region12: #{tft_forward.1} parent=1 // pred_region
      _
    $region13: #{tft_forward.1} parent=1 // pred_fallthru
      _
    // Predicated region
    $region14: #{tft_forward.1} parent=1 // pred_check
      _
    $region15: #{tft_forward.1} parent=1 // pred_check_branch
      %45 = sbr.rel (0) target = $region17
    $region16: #{tft_forward.1} parent=1 // pred_region
      %s47 = ssub.s32 512, 512
      %48 = vsyncadd [#allocation6], %s47
      %s49 = sshll.u32 [#allocation5], 4
      %s50 = int_to_ptr.vmem [resolvable:$true] %s49
      %55 = dma.hbm_to_vmem [thread:$0]  %s3, 512, %s50, [#allocation6], 128, 128, 8
    $region17: #{tft_forward.1} parent=1 // pred_fallthru
      _
    // Predicated region
    $region18: #{tft_forward.1} parent=1 // pred_check
      _
    $region19: #{tft_forward.1} parent=1 // pred_check_branch
      %57 = sbr.rel (0) target = $region21
    $region20: #{tft_forward.1} parent=1 // pred_region
      %s59 = ssub.s32 16, 16
      %60 = vsyncadd [#allocation6], %s59
      %s62 = sshll.u32 [#allocation7], 4
      %s63 = int_to_ptr.vmem [resolvable:$true] %s62
      %65 = dma.hbm_to_vmem [thread:$0]  %s4, 16, %s63, [#allocation6]
    $region21: #{tft_forward.1} parent=1 // pred_fallthru
      _
    // Predicated region
    $region22: #{tft_forward.1} parent=1 // pred_check
      _
    $region23: #{tft_forward.1} parent=1 // pred_check_branch
      %67 = sbr.rel (0) target = $region25
    $region24: #{tft_forward.1} parent=1 // pred_region
      %s69 = ssub.s32 512, 512
      %70 = vsyncadd [#allocation9], %s69
      %s71 = sshll.u32 [#allocation8], 4
      %s72 = int_to_ptr.vmem [resolvable:$true] %s71
      %77 = dma.hbm_to_vmem [thread:$0]  %s5, 512, %s72, [#allocation9], 128, 128, 8
    $region25: #{tft_forward.1} parent=1 // pred_fallthru
      _
    // Predicated region
    $region26: #{tft_forward.1} parent=1 // pred_check
      _
    $region27: #{tft_forward.1} parent=1 // pred_check_branch
      %79 = sbr.rel (0) target = $region29
    $region28: #{tft_forward.1} parent=1 // pred_region
      %s81 = ssub.s32 16, 16
      %82 = vsyncadd [#allocation9], %s81
      %s84 = sshll.u32 [#allocation10], 4
      %s85 = int_to_ptr.vmem [resolvable:$true] %s84
      %87 = dma.hbm_to_vmem [thread:$0]  %s6, 16, %s85, [#allocation9]
    $region29: #{tft_forward.1} parent=1 // pred_fallthru
      _
    // Predicated region
    $region30: #{tft_forward.1} parent=1 // pred_check
      _
    $region31: #{tft_forward.1} parent=1 // pred_check_branch
      %89 = sbr.rel (0) target = $region33
    $region32: #{tft_forward.1} parent=1 // pred_region
      _
    $region33: #{tft_forward.1} parent=1 // pred_fallthru
      _
    // Predicated region
    $region34: #{tft_forward.1} parent=1 // pred_check
      _
    $region35: #{tft_forward.1} parent=1 // pred_check_branch
      %91 = sbr.rel (0) target = $region37
    $region36: #{tft_forward.1} parent=1 // pred_region
      _
    $region37: #{tft_forward.1} parent=1 // pred_fallthru
      _
    // Predicated region
    $region38: #{tft_forward.1} parent=1 // pred_check
      _
    $region39: #{tft_forward.1} parent=1 // pred_check_branch
      %93 = sbr.rel (0) target = $region41
    $region40: #{tft_forward.1} parent=1 // pred_region
      %s95 = ssub.s32 1024, 1024
      %96 = vsyncadd [#allocation12], %s95
      %s97 = sshll.u32 [#allocation11], 4
      %s98 = int_to_ptr.vmem [resolvable:$true] %s97
      %103 = dma.hbm_to_vmem [thread:$0]  %s9, 1024, %s98, [#allocation12], 128, 128, 8
    $region41: #{tft_forward.1} parent=1 // pred_fallthru
      _
    // Predicated region
    $region42: #{tft_forward.1} parent=1 // pred_check
      _
    $region43: #{tft_forward.1} parent=1 // pred_check_branch
      %105 = sbr.rel (0) target = $region45
    $region44: #{tft_forward.1} parent=1 // pred_region
      _
    $region45: #{tft_forward.1} parent=1 // pred_fallthru
      _
    // Predicated region
    $region46: #{tft_forward.1} parent=1 // pred_check
      _
    $region47: #{tft_forward.1} parent=1 // pred_check_branch
      %107 = sbr.rel (0) target = $region49
    $region48: #{tft_forward.1} parent=1 // pred_region
      %s109 = ssub.s32 1024, 1024
      %110 = vsyncadd [#allocation12], %s109
      %s111 = sshll.u32 [#allocation13], 4
      %s112 = int_to_ptr.vmem [resolvable:$true] %s111
      %117 = dma.hbm_to_vmem [thread:$0]  %s11, 1024, %s112, [#allocation12], 128, 128, 8
    $region49: #{tft_forward.1} parent=1 // pred_fallthru
      _
    // Predicated region
    $region50: #{tft_forward.1} parent=1 // pred_check
      _
    $region51: #{tft_forward.1} parent=1 // pred_check_branch
      %119 = sbr.rel (0) target = $region53
    $region52: #{tft_forward.1} parent=1 // pred_region
      _
    $region53: #{tft_forward.1} parent=1 // pred_fallthru
      _
    // Predicated region
    $region54: #{tft_forward.1} parent=1 // pred_check
      _
    $region55: #{tft_forward.1} parent=1 // pred_check_branch
      %121 = sbr.rel (0) target = $region57
    $region56: #{tft_forward.1} parent=1 // pred_region
      _
    $region57: #{tft_forward.1} parent=1 // pred_fallthru
      _
    // Predicated region
    $region58: #{tft_forward.1} parent=1 // pred_check
      _
    $region59: #{tft_forward.1} parent=1 // pred_check_branch
      %123 = sbr.rel (0) target = $region61
    $region60: #{tft_forward.1} parent=1 // pred_region
      _
    $region61: #{tft_forward.1} parent=1 // pred_fallthru
      _
    // Predicated region
    $region62: #{tft_forward.1} parent=1 // pred_check
      _
    $region63: #{tft_forward.1} parent=1 // pred_check_branch
      %125 = sbr.rel (0) target = $region65
    $region64: #{tft_forward.1} parent=1 // pred_region
      %s127 = ssub.s32 512, 512
      %128 = vsyncadd [#allocation15], %s127
      %s129 = sshll.u32 [#allocation14], 4
      %s130 = int_to_ptr.vmem [resolvable:$true] %s129
      %135 = dma.hbm_to_vmem [thread:$0]  %s15, 512, %s130, [#allocation15], 128, 128, 8
    $region65: #{tft_forward.1} parent=1 // pred_fallthru
      _
    // Predicated region
    $region66: #{tft_forward.1} parent=1 // pred_check
      _
    $region67: #{tft_forward.1} parent=1 // pred_check_branch
      %137 = sbr.rel (0) target = $region69
    $region68: #{tft_forward.1} parent=1 // pred_region
      %s139 = ssub.s32 16, 16
      %140 = vsyncadd [#allocation15], %s139
      %s142 = sshll.u32 [#allocation16], 4
      %s143 = int_to_ptr.vmem [resolvable:$true] %s142
      %145 = dma.hbm_to_vmem [thread:$0]  %s16, 16, %s143, [#allocation15]
    $region69: #{tft_forward.1} parent=1 // pred_fallthru
      _
    // Predicated region
    $region70: #{tft_forward.1} parent=1 // pred_check
      _
    $region71: #{tft_forward.1} parent=1 // pred_check_branch
      %147 = sbr.rel (0) target = $region73
    $region72: #{tft_forward.1} parent=1 // pred_region
      %148 = dma.done [#allocation3], 512
    $region73: #{tft_forward.1} parent=1 // pred_fallthru
      _
    // Predicated region
    $region74: #{tft_forward.1} parent=1 // pred_check
      _
    $region75: #{tft_forward.1} parent=1 // pred_check_branch
      %150 = sbr.rel (0) target = $region77
    $region76: #{tft_forward.1} parent=1 // pred_region
      %151 = dma.done [#allocation6], 512
    $region77: #{tft_forward.1} parent=1 // pred_fallthru
      _
    // Predicated region
    $region78: #{tft_forward.1} parent=1 // pred_check
      _
    $region79: #{tft_forward.1} parent=1 // pred_check_branch
      %153 = sbr.rel (0) target = $region81
    $region80: #{tft_forward.1} parent=1 // pred_region
      %154 = dma.done [#allocation6], 16
    $region81: #{tft_forward.1} parent=1 // pred_fallthru
      _
    // Predicated region
    $region82: #{tft_forward.1} parent=1 // pred_check
      _
    $region83: #{tft_forward.1} parent=1 // pred_check_branch
      %156 = sbr.rel (0) target = $region85
    $region84: #{tft_forward.1} parent=1 // pred_region
      %157 = dma.done [#allocation9], 512
    $region85: #{tft_forward.1} parent=1 // pred_fallthru
      _
    // Predicated region
    $region86: #{tft_forward.1} parent=1 // pred_check
      _
    $region87: #{tft_forward.1} parent=1 // pred_check_branch
      %159 = sbr.rel (0) target = $region89
    $region88: #{tft_forward.1} parent=1 // pred_region
      %160 = dma.done [#allocation9], 16
    $region89: #{tft_forward.1} parent=1 // pred_fallthru
      _
    // Predicated region
    $region90: #{tft_forward.1} parent=1 // pred_check
      _
    $region91: #{tft_forward.1} parent=1 // pred_check_branch
      %162 = sbr.rel (0) target = $region93
    $region92: #{tft_forward.1} parent=1 // pred_region
      %163 = dma.done [#allocation12], 1024
    $region93: #{tft_forward.1} parent=1 // pred_fallthru
      _
    // Predicated region
    $region94: #{tft_forward.1} parent=1 // pred_check
      _
    $region95: #{tft_forward.1} parent=1 // pred_check_branch
      %165 = sbr.rel (0) target = $region97
    $region96: #{tft_forward.1} parent=1 // pred_region
      %166 = dma.done [#allocation12], 1024
    $region97: #{tft_forward.1} parent=1 // pred_fallthru
      _
    // Predicated region
    $region98: #{tft_forward.1} parent=1 // pred_check
      _
    $region99: #{tft_forward.1} parent=1 // pred_check_branch
      %168 = sbr.rel (0) target = $region101
    $region100: #{tft_forward.1} parent=1 // pred_region
      %169 = dma.done [#allocation15], 512
    $region101: #{tft_forward.1} parent=1 // pred_fallthru
      _
    // Predicated region
    $region102: #{tft_forward.1} parent=1 // pred_check
      _
    $region103: #{tft_forward.1} parent=1 // pred_check_branch
      %171 = sbr.rel (0) target = $region105
    $region104: #{tft_forward.1} parent=1 // pred_region
      %172 = dma.done [#allocation15], 16
    $region105: #{tft_forward.1} parent=1 // pred_fallthru
      _
    %v173 = vld [vmem:[%s0] sm:$0xff]
    %v174 = vld [vmem:[%s0 + $0x8] sm:$0xff]
    %v175 = vld [vmem:[#allocation2] sm:$0xff]
    %v176 = vld [vmem:[#allocation2 + $0x8] sm:$0xff]
    %v177 = vld [vmem:[#allocation2 + $0x10] sm:$0xff]
    %v178 = vld [vmem:[#allocation2 + $0x18] sm:$0xff]
    %v179 = vld [vmem:[%s2] sm:$0x1]
    %v181 = vlaneseq
    %v182 = vshrl.u32 %v181, 7
    %v183 = vsub.s32 0, %v182
    %v184 = vrot.slane %v179, %v183
    %vm186 = vcmask 261120
    %v188 = vsel %vm186, %v173, 0
    %v191 = vsel %vm186, %v174, 0
    %193 = vmatprep.subr.mxu0 0.0
    %194 = vmatpush1.msra.mxu0 0.0
    %195 = vmatprep.subr.mxu0 0.0
    %196 = vmatpush1.msra.mxu0 0.0
    %197 = vmatprep.subr.mxu0 0.0
    %198 = vmatpush1.msra.mxu0 0.0
    %199 = vmatprep.subr.mxu0 0.0
    %200 = vmatpush1.msra.mxu0 0.0
    %201 = vmatprep.subr.mxu0 0.0
    %202 = vmatpush1.msra.mxu0 0.0
    %203 = vmatprep.subr.mxu0 0.0
    %204 = vmatpush1.msra.mxu0 0.0
    %205 = vmatprep.subr.mxu0 0.0
    %206 = vmatpush1.msra.mxu0 0.0
    %207 = vmatprep.subr.mxu0 0.0
    %208 = vmatpush1.msra.mxu0 0.0
    %209 = vmatprep.subr.mxu0 0.0
    %210 = vmatpush1.msra.mxu0 0.0
    %211 = vmatprep.subr.mxu0 0.0
    %212 = vmatpush1.msra.mxu0 0.0
    %213 = vmatprep.subr.mxu0 0.0
    %214 = vmatpush1.msra.mxu0 0.0
    %215 = vmatprep.subr.mxu0 0.0
    %216 = vmatpush1.msra.mxu0 0.0
    %217 = vmatprep.subr.mxu0 0.0
    %218 = vmatpush1.msra.mxu0 %v178
    %219 = vmatprep.subr.mxu0 0.0
    %220 = vmatpush1.msra.mxu0 %v177
    %221 = vmatprep.subr.mxu0 0.0
    %222 = vmatpush1.msra.mxu0 %v176
    %223 = vmatprep.subr.mxu0 0.0
    %224 = vmatpush1.msra.mxu0 %v175
    %225 = vmatprep.subr.mxu0 0.0
    %226 = vmatpush2.msra.mxu0 0.0
    %227 = vmatprep.subr.mxu0 0.0
    %228 = vmatpush2.msra.mxu0 0.0
    %229 = vmatprep.subr.mxu0 0.0
    %230 = vmatpush2.msra.mxu0 0.0
    %231 = vmatprep.subr.mxu0 0.0
    %232 = vmatpush2.msra.mxu0 0.0
    %233 = vmatprep.subr.mxu0 0.0
    %234 = vmatpush2.msra.mxu0 0.0
    %235 = vmatprep.subr.mxu0 0.0
    %236 = vmatpush2.msra.mxu0 0.0
    %237 = vmatprep.subr.mxu0 0.0
    %238 = vmatpush2.msra.mxu0 0.0
    %239 = vmatprep.subr.mxu0 0.0
    %240 = vmatpush2.msra.mxu0 0.0
    %241 = vmatprep.subr.mxu0 0.0
    %242 = vmatpush2.msra.mxu0 0.0
    %243 = vmatprep.subr.mxu0 0.0
    %244 = vmatpush2.msra.mxu0 0.0
    %245 = vmatprep.subr.mxu0 0.0
    %246 = vmatpush2.msra.mxu0 0.0
    %247 = vmatprep.subr.mxu0 0.0
    %248 = vmatpush2.msra.mxu0 0.0
    %249 = vmatprep.subr.mxu0 0.0
    %250 = vmatpush2.msra.mxu0 0.0
    %251 = vmatprep.subr.mxu0 0.0
    %252 = vmatpush2.msra.mxu0 0.0
    %253 = vmatprep.subr.mxu0 0.0
    %254 = vmatpush2.msra.mxu0 0.0
    %255 = vmatprep.subr.mxu0 0.0
    %256 = vmatpush2.msra.mxu0 0.0
    %257 = vmatprep.mubr.f32.mxu0 0.0
    %258 = vmatmul.mubr.f32.gmra.mxu0 %v188
    %v259 = vpop.f32.mrf.mxu0
    %v260 = vadd.f32 %v184, %v259
    %v261 = vpop.f32.mrf.mxu0
    %262 = vmatprep.mubr.f32.mxu0 0.0
    %263 = vmatmul.mubr.f32.gmra.mxu0 %v191
    %v264 = vpop.f32.mrf.mxu0
    %v265 = vadd.f32 %v184, %v264
    %v266 = vpop.f32.mrf.mxu0
    %267 = vdwg.mxu0
    %vm268 = vcmp.gt.f32.partialorder %v260, 0.0
    %vm269 = vcmp.gt.f32.partialorder %v265, 0.0
    %v270 = vmin.f32 %v260, 0.0
    %v271 = vmin.f32 %v265, 0.0
    %v272 = vmul.f32 %v270, 1.442695
    %v273 = vpow.pop %v272
    %v274 = vmul.f32 %v271, 1.442695
    %v275 = vpow.pop %v274
    %v276 = vsub.f32 %v273, 1.0
    %v277 = vsub.f32 %v275, 1.0
    %v278 = vsel %vm268, %v260, %v276
    %v279 = vsel %vm269, %v265, %v277
    %v280 = vld [vmem:[#allocation5] sm:$0xff]
    %v281 = vld [vmem:[#allocation5 + $0x8] sm:$0xff]
    %v282 = vld [vmem:[#allocation5 + $0x10] sm:$0xff]
    %v283 = vld [vmem:[#allocation5 + $0x18] sm:$0xff]
    %v284 = vld [vmem:[#allocation7] sm:$0x1]
    %v286 = vlaneseq
    %v287 = vshrl.u32 %v286, 7
    %v288 = vsub.s32 0, %v287
    %v289 = vrot.slane %v284, %v288
    %v292 = vsel %vm186, %v278, 0
    %v295 = vsel %vm186, %v279, 0
    %297 = vmatprep.subr.mxu0 0.0
    %298 = vmatpush1.msra.mxu0 0.0
    %299 = vmatprep.subr.mxu0 0.0
    %300 = vmatpush1.msra.mxu0 0.0
    %301 = vmatprep.subr.mxu0 0.0
    %302 = vmatpush1.msra.mxu0 0.0
    %303 = vmatprep.subr.mxu0 0.0
    %304 = vmatpush1.msra.mxu0 0.0
    %305 = vmatprep.subr.mxu0 0.0
    %306 = vmatpush1.msra.mxu0 0.0
    %307 = vmatprep.subr.mxu0 0.0
    %308 = vmatpush1.msra.mxu0 0.0
    %309 = vmatprep.subr.mxu0 0.0
    %310 = vmatpush1.msra.mxu0 0.0
    %311 = vmatprep.subr.mxu0 0.0
    %312 = vmatpush1.msra.mxu0 0.0
    %313 = vmatprep.subr.mxu0 0.0
    %314 = vmatpush1.msra.mxu0 0.0
    %315 = vmatprep.subr.mxu0 0.0
    %316 = vmatpush1.msra.mxu0 0.0
    %317 = vmatprep.subr.mxu0 0.0
    %318 = vmatpush1.msra.mxu0 0.0
    %319 = vmatprep.subr.mxu0 0.0
    %320 = vmatpush1.msra.mxu0 0.0
    %321 = vmatprep.subr.mxu0 0.0
    %322 = vmatpush1.msra.mxu0 %v283
    %323 = vmatprep.subr.mxu0 0.0
    %324 = vmatpush1.msra.mxu0 %v282
    %325 = vmatprep.subr.mxu0 0.0
    %326 = vmatpush1.msra.mxu0 %v281
    %327 = vmatprep.subr.mxu0 0.0
    %328 = vmatpush1.msra.mxu0 %v280
    %329 = vmatprep.subr.mxu0 0.0
    %330 = vmatpush2.msra.mxu0 0.0
    %331 = vmatprep.subr.mxu0 0.0
    %332 = vmatpush2.msra.mxu0 0.0
    %333 = vmatprep.subr.mxu0 0.0
    %334 = vmatpush2.msra.mxu0 0.0
    %335 = vmatprep.subr.mxu0 0.0
    %336 = vmatpush2.msra.mxu0 0.0
    %337 = vmatprep.subr.mxu0 0.0
    %338 = vmatpush2.msra.mxu0 0.0
    %339 = vmatprep.subr.mxu0 0.0
    %340 = vmatpush2.msra.mxu0 0.0
    %341 = vmatprep.subr.mxu0 0.0
    %342 = vmatpush2.msra.mxu0 0.0
    %343 = vmatprep.subr.mxu0 0.0
    %344 = vmatpush2.msra.mxu0 0.0
    %345 = vmatprep.subr.mxu0 0.0
    %346 = vmatpush2.msra.mxu0 0.0
    %347 = vmatprep.subr.mxu0 0.0
    %348 = vmatpush2.msra.mxu0 0.0
    %349 = vmatprep.subr.mxu0 0.0
    %350 = vmatpush2.msra.mxu0 0.0
    %351 = vmatprep.subr.mxu0 0.0
    %352 = vmatpush2.msra.mxu0 0.0
    %353 = vmatprep.subr.mxu0 0.0
    %354 = vmatpush2.msra.mxu0 0.0
    %355 = vmatprep.subr.mxu0 0.0
    %356 = vmatpush2.msra.mxu0 0.0
    %357 = vmatprep.subr.mxu0 0.0
    %358 = vmatpush2.msra.mxu0 0.0
    %359 = vmatprep.subr.mxu0 0.0
    %360 = vmatpush2.msra.mxu0 0.0
    %361 = vmatprep.mubr.f32.mxu0 0.0
    %362 = vmatmul.mubr.f32.gmra.mxu0 %v292
    %v363 = vpop.f32.mrf.mxu0
    %v364 = vadd.f32 %v289, %v363
    %v365 = vpop.f32.mrf.mxu0
    %366 = vmatprep.mubr.f32.mxu0 0.0
    %367 = vmatmul.mubr.f32.gmra.mxu0 %v295
    %v368 = vpop.f32.mrf.mxu0
    %v369 = vadd.f32 %v289, %v368
    %v370 = vpop.f32.mrf.mxu0
    %371 = vdwg.mxu0
    %v372 = vadd.f32 %v364, %v173
    %v373 = vadd.f32 %v369, %v174
    %v374 = vld [vmem:[%s7] sm:$0x1]
    %v375 = vld [vmem:[%s8] sm:$0x1]
    %v376 = vsel %vm186, %v372, 0.0
    %377 = vadd.xlane.f32.xlu0 %v376
    %v378 = vpop.xlane.xlu0 %377
    %v379 = vsel %vm186, %v373, 0.0
    %380 = vadd.xlane.f32.xlu0 %v379
    %v381 = vpop.xlane.xlu0 %380
    %v382 = vrcp.pop 32.0
    %v383 = vmul.f32 %v378, %v382
    %v384 = vmul.f32 %v381, %v382
    %v385 = vsub.f32 %v372, %v383
    %v386 = vsub.f32 %v373, %v384
    %v387 = vmul.f32 %v385, %v385
    %v388 = vmul.f32 %v386, %v386
    %v389 = vsel %vm186, %v387, 0.0
    %390 = vadd.xlane.f32.xlu0 %v389
    %v391 = vpop.xlane.xlu0 %390
    %v392 = vsel %vm186, %v388, 0.0
    %393 = vadd.xlane.f32.xlu0 %v392
    %v394 = vpop.xlane.xlu0 %393
    %v395 = vmul.f32 %v391, %v382
    %v396 = vmul.f32 %v394, %v382
    %v397 = vadd.f32 %v395, 1e-05
    %v398 = vadd.f32 %v396, 1e-05
    %v399 = vrsqrt.pop %v397
    %v400 = vrsqrt.pop %v398
    %v401 = vmul.f32 %v385, %v399
    %v402 = vmul.f32 %v386, %v400
    %v404 = vlaneseq
    %v405 = vshrl.u32 %v404, 7
    %v406 = vsub.s32 0, %v405
    %v407 = vrot.slane %v374, %v406
    %v409 = vmul.f32 %v401, %v407
    %v410 = vmul.f32 %v402, %v407
    %v412 = vlaneseq
    %v413 = vshrl.u32 %v412, 7
    %v414 = vsub.s32 0, %v413
    %v415 = vrot.slane %v375, %v414
    %v417 = vadd.f32 %v409, %v415
    %v418 = vadd.f32 %v410, %v415
    %v419 = vld [vmem:[#allocation8] sm:$0xff]
    %v420 = vld [vmem:[#allocation8 + $0x8] sm:$0xff]
    %v421 = vld [vmem:[#allocation8 + $0x10] sm:$0xff]
    %v422 = vld [vmem:[#allocation8 + $0x18] sm:$0xff]
    %v423 = vld [vmem:[#allocation10] sm:$0x1]
    %v425 = vlaneseq
    %v426 = vshrl.u32 %v425, 7
    %v427 = vsub.s32 0, %v426
    %v428 = vrot.slane %v423, %v427
    %v431 = vsel %vm186, %v417, 0
    %v434 = vsel %vm186, %v418, 0
    %436 = vmatprep.subr.mxu0 0.0
    %437 = vmatpush1.msra.mxu0 0.0
    %438 = vmatprep.subr.mxu0 0.0
    %439 = vmatpush1.msra.mxu0 0.0
    %440 = vmatprep.subr.mxu0 0.0
    %441 = vmatpush1.msra.mxu0 0.0
    %442 = vmatprep.subr.mxu0 0.0
    %443 = vmatpush1.msra.mxu0 0.0
    %444 = vmatprep.subr.mxu0 0.0
    %445 = vmatpush1.msra.mxu0 0.0
    %446 = vmatprep.subr.mxu0 0.0
    %447 = vmatpush1.msra.mxu0 0.0
    %448 = vmatprep.subr.mxu0 0.0
    %449 = vmatpush1.msra.mxu0 0.0
    %450 = vmatprep.subr.mxu0 0.0
    %451 = vmatpush1.msra.mxu0 0.0
    %452 = vmatprep.subr.mxu0 0.0
    %453 = vmatpush1.msra.mxu0 0.0
    %454 = vmatprep.subr.mxu0 0.0
    %455 = vmatpush1.msra.mxu0 0.0
    %456 = vmatprep.subr.mxu0 0.0
    %457 = vmatpush1.msra.mxu0 0.0
    %458 = vmatprep.subr.mxu0 0.0
    %459 = vmatpush1.msra.mxu0 0.0
    %460 = vmatprep.subr.mxu0 0.0
    %461 = vmatpush1.msra.mxu0 %v422
    %462 = vmatprep.subr.mxu0 0.0
    %463 = vmatpush1.msra.mxu0 %v421
    %464 = vmatprep.subr.mxu0 0.0
    %465 = vmatpush1.msra.mxu0 %v420
    %466 = vmatprep.subr.mxu0 0.0
    %467 = vmatpush1.msra.mxu0 %v419
    %468 = vmatprep.subr.mxu0 0.0
    %469 = vmatpush2.msra.mxu0 0.0
    %470 = vmatprep.subr.mxu0 0.0
    %471 = vmatpush2.msra.mxu0 0.0
    %472 = vmatprep.subr.mxu0 0.0
    %473 = vmatpush2.msra.mxu0 0.0
    %474 = vmatprep.subr.mxu0 0.0
    %475 = vmatpush2.msra.mxu0 0.0
    %476 = vmatprep.subr.mxu0 0.0
    %477 = vmatpush2.msra.mxu0 0.0
    %478 = vmatprep.subr.mxu0 0.0
    %479 = vmatpush2.msra.mxu0 0.0
    %480 = vmatprep.subr.mxu0 0.0
    %481 = vmatpush2.msra.mxu0 0.0
    %482 = vmatprep.subr.mxu0 0.0
    %483 = vmatpush2.msra.mxu0 0.0
    %484 = vmatprep.subr.mxu0 0.0
    %485 = vmatpush2.msra.mxu0 0.0
    %486 = vmatprep.subr.mxu0 0.0
    %487 = vmatpush2.msra.mxu0 0.0
    %488 = vmatprep.subr.mxu0 0.0
    %489 = vmatpush2.msra.mxu0 0.0
    %490 = vmatprep.subr.mxu0 0.0
    %491 = vmatpush2.msra.mxu0 0.0
    %492 = vmatprep.subr.mxu0 0.0
    %493 = vmatpush2.msra.mxu0 0.0
    %494 = vmatprep.subr.mxu0 0.0
    %495 = vmatpush2.msra.mxu0 0.0
    %496 = vmatprep.subr.mxu0 0.0
    %497 = vmatpush2.msra.mxu0 0.0
    %498 = vmatprep.subr.mxu0 0.0
    %499 = vmatpush2.msra.mxu0 0.0
    %500 = vmatprep.mubr.f32.mxu0 0.0
    %501 = vmatmul.mubr.f32.gmra.mxu0 %v431
    %v502 = vpop.f32.mrf.mxu0
    %v503 = vadd.f32 %v428, %v502
    %v504 = vpop.f32.mrf.mxu0
    %505 = vmatprep.mubr.f32.mxu0 0.0
    %506 = vmatmul.mubr.f32.gmra.mxu0 %v434
    %v507 = vpop.f32.mrf.mxu0
    %v508 = vadd.f32 %v428, %v507
    %v509 = vpop.f32.mrf.mxu0
    %510 = vdwg.mxu0
    %v511 = vxor.u32 %v503, 2147483648
    %v512 = vxor.u32 %v508, 2147483648
    %v513 = vmul.f32 %v511, 1.442695
    %v514 = vpow.pop %v513
    %v515 = vmul.f32 %v512, 1.442695
    %v516 = vpow.pop %v515
    %v517 = vadd.f32 %v514, 1.0
    %v518 = vadd.f32 %v516, 1.0
    %v519 = vrcp.pop %v517
    %v520 = vmul.f32 1.0, %v519
    %v521 = vrcp.pop %v518
    %v522 = vmul.f32 1.0, %v521
    %v523 = vmul.f32 %v520, %v417
    %v524 = vmul.f32 %v522, %v418
    %v525 = vsub.f32 1.0, %v520
    %v526 = vsub.f32 1.0, %v522
    %v527 = vmul.f32 %v525, %v173
    %v528 = vmul.f32 %v526, %v174
    %v529 = vadd.f32 %v523, %v527
    %v530 = vadd.f32 %v524, %v528
    %v531 = vld [vmem:[#allocation11] sm:$0xff]
    %v532 = vld [vmem:[#allocation11 + $0x8] sm:$0xff]
    %v533 = vld [vmem:[#allocation11 + $0x10] sm:$0xff]
    %v534 = vld [vmem:[#allocation11 + $0x18] sm:$0xff]
    %v535 = vld [vmem:[%s10] sm:$0x1]
    %v537 = vlaneseq
    %v538 = vshrl.u32 %v537, 7
    %v539 = vsub.s32 0, %v538
    %v540 = vrot.slane %v535, %v539
    %v543 = vsel %vm186, %v529, 0
    %v546 = vsel %vm186, %v530, 0
    %548 = vmatprep.subr.mxu0 0.0
    %549 = vmatpush1.msra.mxu0 0.0
    %550 = vmatprep.subr.mxu0 0.0
    %551 = vmatpush1.msra.mxu0 0.0
    %552 = vmatprep.subr.mxu0 0.0
    %553 = vmatpush1.msra.mxu0 0.0
    %554 = vmatprep.subr.mxu0 0.0
    %555 = vmatpush1.msra.mxu0 0.0
    %556 = vmatprep.subr.mxu0 0.0
    %557 = vmatpush1.msra.mxu0 0.0
    %558 = vmatprep.subr.mxu0 0.0
    %559 = vmatpush1.msra.mxu0 0.0
    %560 = vmatprep.subr.mxu0 0.0
    %561 = vmatpush1.msra.mxu0 0.0
    %562 = vmatprep.subr.mxu0 0.0
    %563 = vmatpush1.msra.mxu0 0.0
    %564 = vmatprep.subr.mxu0 0.0
    %565 = vmatpush1.msra.mxu0 0.0
    %566 = vmatprep.subr.mxu0 0.0
    %567 = vmatpush1.msra.mxu0 0.0
    %568 = vmatprep.subr.mxu0 0.0
    %569 = vmatpush1.msra.mxu0 0.0
    %570 = vmatprep.subr.mxu0 0.0
    %571 = vmatpush1.msra.mxu0 0.0
    %572 = vmatprep.subr.mxu0 0.0
    %573 = vmatpush1.msra.mxu0 %v534
    %574 = vmatprep.subr.mxu0 0.0
    %575 = vmatpush1.msra.mxu0 %v533
    %576 = vmatprep.subr.mxu0 0.0
    %577 = vmatpush1.msra.mxu0 %v532
    %578 = vmatprep.subr.mxu0 0.0
    %579 = vmatpush1.msra.mxu0 %v531
    %580 = vmatprep.subr.mxu0 0.0
    %581 = vmatpush2.msra.mxu0 0.0
    %582 = vmatprep.subr.mxu0 0.0
    %583 = vmatpush2.msra.mxu0 0.0
    %584 = vmatprep.subr.mxu0 0.0
    %585 = vmatpush2.msra.mxu0 0.0
    %586 = vmatprep.subr.mxu0 0.0
    %587 = vmatpush2.msra.mxu0 0.0
    %588 = vmatprep.subr.mxu0 0.0
    %589 = vmatpush2.msra.mxu0 0.0
    %590 = vmatprep.subr.mxu0 0.0
    %591 = vmatpush2.msra.mxu0 0.0
    %592 = vmatprep.subr.mxu0 0.0
    %593 = vmatpush2.msra.mxu0 0.0
    %594 = vmatprep.subr.mxu0 0.0
    %595 = vmatpush2.msra.mxu0 0.0
    %596 = vmatprep.subr.mxu0 0.0
    %597 = vmatpush2.msra.mxu0 0.0
    %598 = vmatprep.subr.mxu0 0.0
    %599 = vmatpush2.msra.mxu0 0.0
    %600 = vmatprep.subr.mxu0 0.0
    %601 = vmatpush2.msra.mxu0 0.0
    %602 = vmatprep.subr.mxu0 0.0
    %603 = vmatpush2.msra.mxu0 0.0
    %604 = vmatprep.subr.mxu0 0.0
    %605 = vmatpush2.msra.mxu0 0.0
    %606 = vmatprep.subr.mxu0 0.0
    %607 = vmatpush2.msra.mxu0 0.0
    %608 = vmatprep.subr.mxu0 0.0
    %609 = vmatpush2.msra.mxu0 0.0
    %610 = vmatprep.subr.mxu0 0.0
    %611 = vmatpush2.msra.mxu0 0.0
    %612 = vmatprep.mubr.f32.mxu0 0.0
    %613 = vmatmul.mubr.f32.gmra.mxu0 %v543
    %v614 = vpop.f32.mrf.mxu0
    %v615 = vadd.f32 %v540, %v614
    %v616 = vpop.f32.mrf.mxu0
    %617 = vmatprep.mubr.f32.mxu0 0.0
    %618 = vmatmul.mubr.f32.gmra.mxu0 %v546
    %v619 = vpop.f32.mrf.mxu0
    %v620 = vadd.f32 %v540, %v619
    %v621 = vpop.f32.mrf.mxu0
    %622 = vdwg.mxu0
    %624 = vrot.lane.b32.xlu0 %v615, 96
    %v625 = vpop.permute.xlu0 %624
    %vm626 = vcmask 64512
    %v627 = vsel %vm626, %v615, 0
    %v629 = vsel %vm626, %v625, 0
    %631 = vmatprep.subr.mxu0 0.0
    %632 = vmatpush1.xpose.msra.mxu0 0.0
    %633 = vmatprep.subr.mxu0 0.0
    %634 = vmatpush1.xpose.msra.mxu0 0.0
    %635 = vmatprep.subr.mxu0 0.0
    %636 = vmatpush1.xpose.msra.mxu0 0.0
    %637 = vmatprep.subr.mxu0 0.0
    %638 = vmatpush1.xpose.msra.mxu0 0.0
    %639 = vmatprep.subr.mxu0 0.0
    %640 = vmatpush1.xpose.msra.mxu0 0.0
    %641 = vmatprep.subr.mxu0 0.0
    %642 = vmatpush1.xpose.msra.mxu0 0.0
    %643 = vmatprep.subr.mxu0 0.0
    %644 = vmatpush1.xpose.msra.mxu0 0.0
    %645 = vmatprep.subr.mxu0 0.0
    %646 = vmatpush1.xpose.msra.mxu0 0.0
    %647 = vmatprep.subr.mxu0 0.0
    %648 = vmatpush1.xpose.msra.mxu0 0.0
    %649 = vmatprep.subr.mxu0 0.0
    %650 = vmatpush1.xpose.msra.mxu0 0.0
    %651 = vmatprep.subr.mxu0 0.0
    %652 = vmatpush1.xpose.msra.mxu0 0.0
    %653 = vmatprep.subr.mxu0 0.0
    %654 = vmatpush1.xpose.msra.mxu0 0.0
    %655 = vmatprep.subr.mxu0 0.0
    %656 = vmatpush1.xpose.msra.mxu0 0.0
    %657 = vmatprep.subr.mxu0 0.0
    %658 = vmatpush1.xpose.msra.mxu0 0.0
    %659 = vmatprep.subr.mxu0 0.0
    %660 = vmatpush1.xpose.msra.mxu0 0.0
    %661 = vmatprep.subr.mxu0 0.0
    %662 = vmatpush1.xpose.msra.mxu0 %v629
    %663 = vmatprep.subr.mxu0 0.0
    %664 = vmatpush2.xpose.msra.mxu0 0.0
    %665 = vmatprep.subr.mxu0 0.0
    %666 = vmatpush2.xpose.msra.mxu0 0.0
    %667 = vmatprep.subr.mxu0 0.0
    %668 = vmatpush2.xpose.msra.mxu0 0.0
    %669 = vmatprep.subr.mxu0 0.0
    %670 = vmatpush2.xpose.msra.mxu0 0.0
    %671 = vmatprep.subr.mxu0 0.0
    %672 = vmatpush2.xpose.msra.mxu0 0.0
    %673 = vmatprep.subr.mxu0 0.0
    %674 = vmatpush2.xpose.msra.mxu0 0.0
    %675 = vmatprep.subr.mxu0 0.0
    %676 = vmatpush2.xpose.msra.mxu0 0.0
    %677 = vmatprep.subr.mxu0 0.0
    %678 = vmatpush2.xpose.msra.mxu0 0.0
    %679 = vmatprep.subr.mxu0 0.0
    %680 = vmatpush2.xpose.msra.mxu0 0.0
    %681 = vmatprep.subr.mxu0 0.0
    %682 = vmatpush2.xpose.msra.mxu0 0.0
    %683 = vmatprep.subr.mxu0 0.0
    %684 = vmatpush2.xpose.msra.mxu0 0.0
    %685 = vmatprep.subr.mxu0 0.0
    %686 = vmatpush2.xpose.msra.mxu0 0.0
    %687 = vmatprep.subr.mxu0 0.0
    %688 = vmatpush2.xpose.msra.mxu0 0.0
    %689 = vmatprep.subr.mxu0 0.0
    %690 = vmatpush2.xpose.msra.mxu0 0.0
    %691 = vmatprep.subr.mxu0 0.0
    %692 = vmatpush2.xpose.msra.mxu0 0.0
    %693 = vmatprep.subr.mxu0 0.0
    %694 = vmatpush2.xpose.msra.mxu0 0.0
    %695 = vmatprep.mubr.f32.mxu0 0.0
    %696 = vmatmul.mubr.f32.gmra.mxu0 %v627
    %v697 = vpop.f32.mrf.mxu0
    %v698 = vadd.f32 0.0, %v697
    %v699 = vpop.f32.mrf.mxu0
    %700 = vdwg.mxu0
    %702 = vrot.lane.b32.xlu0 %v620, 96
    %v703 = vpop.permute.xlu0 %702
    %v704 = vsel %vm626, %v620, 0
    %v706 = vsel %vm626, %v703, 0
    %708 = vmatprep.subr.mxu0 0.0
    %709 = vmatpush1.xpose.msra.mxu0 0.0
    %710 = vmatprep.subr.mxu0 0.0
    %711 = vmatpush1.xpose.msra.mxu0 0.0
    %712 = vmatprep.subr.mxu0 0.0
    %713 = vmatpush1.xpose.msra.mxu0 0.0
    %714 = vmatprep.subr.mxu0 0.0
    %715 = vmatpush1.xpose.msra.mxu0 0.0
    %716 = vmatprep.subr.mxu0 0.0
    %717 = vmatpush1.xpose.msra.mxu0 0.0
    %718 = vmatprep.subr.mxu0 0.0
    %719 = vmatpush1.xpose.msra.mxu0 0.0
    %720 = vmatprep.subr.mxu0 0.0
    %721 = vmatpush1.xpose.msra.mxu0 0.0
    %722 = vmatprep.subr.mxu0 0.0
    %723 = vmatpush1.xpose.msra.mxu0 0.0
    %724 = vmatprep.subr.mxu0 0.0
    %725 = vmatpush1.xpose.msra.mxu0 0.0
    %726 = vmatprep.subr.mxu0 0.0
    %727 = vmatpush1.xpose.msra.mxu0 0.0
    %728 = vmatprep.subr.mxu0 0.0
    %729 = vmatpush1.xpose.msra.mxu0 0.0
    %730 = vmatprep.subr.mxu0 0.0
    %731 = vmatpush1.xpose.msra.mxu0 0.0
    %732 = vmatprep.subr.mxu0 0.0
    %733 = vmatpush1.xpose.msra.mxu0 0.0
    %734 = vmatprep.subr.mxu0 0.0
    %735 = vmatpush1.xpose.msra.mxu0 0.0
    %736 = vmatprep.subr.mxu0 0.0
    %737 = vmatpush1.xpose.msra.mxu0 0.0
    %738 = vmatprep.subr.mxu0 0.0
    %739 = vmatpush1.xpose.msra.mxu0 %v706
    %740 = vmatprep.subr.mxu0 0.0
    %741 = vmatpush2.xpose.msra.mxu0 0.0
    %742 = vmatprep.subr.mxu0 0.0
    %743 = vmatpush2.xpose.msra.mxu0 0.0
    %744 = vmatprep.subr.mxu0 0.0
    %745 = vmatpush2.xpose.msra.mxu0 0.0
    %746 = vmatprep.subr.mxu0 0.0
    %747 = vmatpush2.xpose.msra.mxu0 0.0
    %748 = vmatprep.subr.mxu0 0.0
    %749 = vmatpush2.xpose.msra.mxu0 0.0
    %750 = vmatprep.subr.mxu0 0.0
    %751 = vmatpush2.xpose.msra.mxu0 0.0
    %752 = vmatprep.subr.mxu0 0.0
    %753 = vmatpush2.xpose.msra.mxu0 0.0
    %754 = vmatprep.subr.mxu0 0.0
    %755 = vmatpush2.xpose.msra.mxu0 0.0
    %756 = vmatprep.subr.mxu0 0.0
    %757 = vmatpush2.xpose.msra.mxu0 0.0
    %758 = vmatprep.subr.mxu0 0.0
    %759 = vmatpush2.xpose.msra.mxu0 0.0
    %760 = vmatprep.subr.mxu0 0.0
    %761 = vmatpush2.xpose.msra.mxu0 0.0
    %762 = vmatprep.subr.mxu0 0.0
    %763 = vmatpush2.xpose.msra.mxu0 0.0
    %764 = vmatprep.subr.mxu0 0.0
    %765 = vmatpush2.xpose.msra.mxu0 0.0
    %766 = vmatprep.subr.mxu0 0.0
    %767 = vmatpush2.xpose.msra.mxu0 0.0
    %768 = vmatprep.subr.mxu0 0.0
    %769 = vmatpush2.xpose.msra.mxu0 0.0
    %770 = vmatprep.subr.mxu0 0.0
    %771 = vmatpush2.xpose.msra.mxu0 0.0
    %772 = vmatprep.mubr.f32.mxu0 0.0
    %773 = vmatmul.mubr.f32.gmra.mxu0 %v704
    %v774 = vpop.f32.mrf.mxu0
    %v775 = vadd.f32 0.0, %v774
    %v776 = vpop.f32.mrf.mxu0
    %777 = vdwg.mxu0
    %v778 = vmul.f32 %v698, 0.35355338
    %v779 = vmul.f32 %v775, 0.35355338
    %v780 = vsel %vm626, %v778, -inf
    %781 = vmax.xlane.f32.xlu0 %v780
    %v782 = vpop.xlane.xlu0 %781
    %v783 = vsel %vm626, %v779, -inf
    %784 = vmax.xlane.f32.xlu0 %v783
    %v785 = vpop.xlane.xlu0 %784
    %v786 = vsub.f32 %v778, %v782
    %v787 = vsub.f32 %v779, %v785
    %v788 = vmul.f32 %v786, 1.442695
    %v789 = vpow.pop %v788
    %v790 = vmul.f32 %v787, 1.442695
    %v791 = vpow.pop %v790
    %v792 = vsel %vm626, %v789, 0.0
    %793 = vadd.xlane.f32.xlu0 %v792
    %v794 = vpop.xlane.xlu0 %793
    %v795 = vsel %vm626, %v791, 0.0
    %796 = vadd.xlane.f32.xlu0 %v795
    %v797 = vpop.xlane.xlu0 %796
    %v798 = vrcp.pop %v794
    %v799 = vrcp.pop %v797
    %v800 = vmul.f32 %v789, %v798
    %v801 = vmul.f32 %v791, %v799
    %802 = vrot.lane.b32.xlu0 %v615, 64
    %v803 = vpop.permute.xlu0 %802
    %v806 = vsel %vm626, %v800, 0
    %808 = vmatprep.subr.mxu0 0.0
    %809 = vmatpush1.msra.mxu0 0.0
    %810 = vmatprep.subr.mxu0 0.0
    %811 = vmatpush1.msra.mxu0 0.0
    %812 = vmatprep.subr.mxu0 0.0
    %813 = vmatpush1.msra.mxu0 0.0
    %814 = vmatprep.subr.mxu0 0.0
    %815 = vmatpush1.msra.mxu0 0.0
    %816 = vmatprep.subr.mxu0 0.0
    %817 = vmatpush1.msra.mxu0 0.0
    %818 = vmatprep.subr.mxu0 0.0
    %819 = vmatpush1.msra.mxu0 0.0
    %820 = vmatprep.subr.mxu0 0.0
    %821 = vmatpush1.msra.mxu0 0.0
    %822 = vmatprep.subr.mxu0 0.0
    %823 = vmatpush1.msra.mxu0 0.0
    %824 = vmatprep.subr.mxu0 0.0
    %825 = vmatpush1.msra.mxu0 0.0
    %826 = vmatprep.subr.mxu0 0.0
    %827 = vmatpush1.msra.mxu0 0.0
    %828 = vmatprep.subr.mxu0 0.0
    %829 = vmatpush1.msra.mxu0 0.0
    %830 = vmatprep.subr.mxu0 0.0
    %831 = vmatpush1.msra.mxu0 0.0
    %832 = vmatprep.subr.mxu0 0.0
    %833 = vmatpush1.msra.mxu0 0.0
    %834 = vmatprep.subr.mxu0 0.0
    %835 = vmatpush1.msra.mxu0 0.0
    %836 = vmatprep.subr.mxu0 0.0
    %837 = vmatpush1.msra.mxu0 0.0
    %838 = vmatprep.subr.mxu0 0.0
    %839 = vmatpush1.msra.mxu0 %v803
    %840 = vmatprep.subr.mxu0 0.0
    %841 = vmatpush2.msra.mxu0 0.0
    %842 = vmatprep.subr.mxu0 0.0
    %843 = vmatpush2.msra.mxu0 0.0
    %844 = vmatprep.subr.mxu0 0.0
    %845 = vmatpush2.msra.mxu0 0.0
    %846 = vmatprep.subr.mxu0 0.0
    %847 = vmatpush2.msra.mxu0 0.0
    %848 = vmatprep.subr.mxu0 0.0
    %849 = vmatpush2.msra.mxu0 0.0
    %850 = vmatprep.subr.mxu0 0.0
    %851 = vmatpush2.msra.mxu0 0.0
    %852 = vmatprep.subr.mxu0 0.0
    %853 = vmatpush2.msra.mxu0 0.0
    %854 = vmatprep.subr.mxu0 0.0
    %855 = vmatpush2.msra.mxu0 0.0
    %856 = vmatprep.subr.mxu0 0.0
    %857 = vmatpush2.msra.mxu0 0.0
    %858 = vmatprep.subr.mxu0 0.0
    %859 = vmatpush2.msra.mxu0 0.0
    %860 = vmatprep.subr.mxu0 0.0
    %861 = vmatpush2.msra.mxu0 0.0
    %862 = vmatprep.subr.mxu0 0.0
    %863 = vmatpush2.msra.mxu0 0.0
    %864 = vmatprep.subr.mxu0 0.0
    %865 = vmatpush2.msra.mxu0 0.0
    %866 = vmatprep.subr.mxu0 0.0
    %867 = vmatpush2.msra.mxu0 0.0
    %868 = vmatprep.subr.mxu0 0.0
    %869 = vmatpush2.msra.mxu0 0.0
    %870 = vmatprep.subr.mxu0 0.0
    %871 = vmatpush2.msra.mxu0 0.0
    %872 = vmatprep.mubr.f32.mxu0 0.0
    %873 = vmatmul.mubr.f32.gmra.mxu0 %v806
    %v874 = vpop.f32.mrf.mxu0
    %v875 = vadd.f32 0.0, %v874
    %v876 = vpop.f32.mrf.mxu0
    %877 = vdwg.mxu0
    %878 = vrot.lane.b32.xlu0 %v620, 64
    %v879 = vpop.permute.xlu0 %878
    %v882 = vsel %vm626, %v801, 0
    %884 = vmatprep.subr.mxu0 0.0
    %885 = vmatpush1.msra.mxu0 0.0
    %886 = vmatprep.subr.mxu0 0.0
    %887 = vmatpush1.msra.mxu0 0.0
    %888 = vmatprep.subr.mxu0 0.0
    %889 = vmatpush1.msra.mxu0 0.0
    %890 = vmatprep.subr.mxu0 0.0
    %891 = vmatpush1.msra.mxu0 0.0
    %892 = vmatprep.subr.mxu0 0.0
    %893 = vmatpush1.msra.mxu0 0.0
    %894 = vmatprep.subr.mxu0 0.0
    %895 = vmatpush1.msra.mxu0 0.0
    %896 = vmatprep.subr.mxu0 0.0
    %897 = vmatpush1.msra.mxu0 0.0
    %898 = vmatprep.subr.mxu0 0.0
    %899 = vmatpush1.msra.mxu0 0.0
    %900 = vmatprep.subr.mxu0 0.0
    %901 = vmatpush1.msra.mxu0 0.0
    %902 = vmatprep.subr.mxu0 0.0
    %903 = vmatpush1.msra.mxu0 0.0
    %904 = vmatprep.subr.mxu0 0.0
    %905 = vmatpush1.msra.mxu0 0.0
    %906 = vmatprep.subr.mxu0 0.0
    %907 = vmatpush1.msra.mxu0 0.0
    %908 = vmatprep.subr.mxu0 0.0
    %909 = vmatpush1.msra.mxu0 0.0
    %910 = vmatprep.subr.mxu0 0.0
    %911 = vmatpush1.msra.mxu0 0.0
    %912 = vmatprep.subr.mxu0 0.0
    %913 = vmatpush1.msra.mxu0 0.0
    %914 = vmatprep.subr.mxu0 0.0
    %915 = vmatpush1.msra.mxu0 %v879
    %916 = vmatprep.subr.mxu0 0.0
    %917 = vmatpush2.msra.mxu0 0.0
    %918 = vmatprep.subr.mxu0 0.0
    %919 = vmatpush2.msra.mxu0 0.0
    %920 = vmatprep.subr.mxu0 0.0
    %921 = vmatpush2.msra.mxu0 0.0
    %922 = vmatprep.subr.mxu0 0.0
    %923 = vmatpush2.msra.mxu0 0.0
    %924 = vmatprep.subr.mxu0 0.0
    %925 = vmatpush2.msra.mxu0 0.0
    %926 = vmatprep.subr.mxu0 0.0
    %927 = vmatpush2.msra.mxu0 0.0
    %928 = vmatprep.subr.mxu0 0.0
    %929 = vmatpush2.msra.mxu0 0.0
    %930 = vmatprep.subr.mxu0 0.0
    %931 = vmatpush2.msra.mxu0 0.0
    %932 = vmatprep.subr.mxu0 0.0
    %933 = vmatpush2.msra.mxu0 0.0
    %934 = vmatprep.subr.mxu0 0.0
    %935 = vmatpush2.msra.mxu0 0.0
    %936 = vmatprep.subr.mxu0 0.0
    %937 = vmatpush2.msra.mxu0 0.0
    %938 = vmatprep.subr.mxu0 0.0
    %939 = vmatpush2.msra.mxu0 0.0
    %940 = vmatprep.subr.mxu0 0.0
    %941 = vmatpush2.msra.mxu0 0.0
    %942 = vmatprep.subr.mxu0 0.0
    %943 = vmatpush2.msra.mxu0 0.0
    %944 = vmatprep.subr.mxu0 0.0
    %945 = vmatpush2.msra.mxu0 0.0
    %946 = vmatprep.subr.mxu0 0.0
    %947 = vmatpush2.msra.mxu0 0.0
    %948 = vmatprep.mubr.f32.mxu0 0.0
    %949 = vmatmul.mubr.f32.gmra.mxu0 %v882
    %v950 = vpop.f32.mrf.mxu0
    %v951 = vadd.f32 0.0, %v950
    %v952 = vpop.f32.mrf.mxu0
    %953 = vdwg.mxu0
    %954 = vrot.lane.b32.xlu0 %v615, 120
    %v955 = vpop.permute.xlu0 %954
    %956 = vrot.lane.b32.xlu0 %v615, 88
    %v957 = vpop.permute.xlu0 %956
    %v958 = vsel %vm626, %v955, 0
    %v960 = vsel %vm626, %v957, 0
    %962 = vmatprep.subr.mxu0 0.0
    %963 = vmatpush1.xpose.msra.mxu0 0.0
    %964 = vmatprep.subr.mxu0 0.0
    %965 = vmatpush1.xpose.msra.mxu0 0.0
    %966 = vmatprep.subr.mxu0 0.0
    %967 = vmatpush1.xpose.msra.mxu0 0.0
    %968 = vmatprep.subr.mxu0 0.0
    %969 = vmatpush1.xpose.msra.mxu0 0.0
    %970 = vmatprep.subr.mxu0 0.0
    %971 = vmatpush1.xpose.msra.mxu0 0.0
    %972 = vmatprep.subr.mxu0 0.0
    %973 = vmatpush1.xpose.msra.mxu0 0.0
    %974 = vmatprep.subr.mxu0 0.0
    %975 = vmatpush1.xpose.msra.mxu0 0.0
    %976 = vmatprep.subr.mxu0 0.0
    %977 = vmatpush1.xpose.msra.mxu0 0.0
    %978 = vmatprep.subr.mxu0 0.0
    %979 = vmatpush1.xpose.msra.mxu0 0.0
    %980 = vmatprep.subr.mxu0 0.0
    %981 = vmatpush1.xpose.msra.mxu0 0.0
    %982 = vmatprep.subr.mxu0 0.0
    %983 = vmatpush1.xpose.msra.mxu0 0.0
    %984 = vmatprep.subr.mxu0 0.0
    %985 = vmatpush1.xpose.msra.mxu0 0.0
    %986 = vmatprep.subr.mxu0 0.0
    %987 = vmatpush1.xpose.msra.mxu0 0.0
    %988 = vmatprep.subr.mxu0 0.0
    %989 = vmatpush1.xpose.msra.mxu0 0.0
    %990 = vmatprep.subr.mxu0 0.0
    %991 = vmatpush1.xpose.msra.mxu0 0.0
    %992 = vmatprep.subr.mxu0 0.0
    %993 = vmatpush1.xpose.msra.mxu0 %v960
    %994 = vmatprep.subr.mxu0 0.0
    %995 = vmatpush2.xpose.msra.mxu0 0.0
    %996 = vmatprep.subr.mxu0 0.0
    %997 = vmatpush2.xpose.msra.mxu0 0.0
    %998 = vmatprep.subr.mxu0 0.0
    %999 = vmatpush2.xpose.msra.mxu0 0.0
    %1000 = vmatprep.subr.mxu0 0.0
    %1001 = vmatpush2.xpose.msra.mxu0 0.0
    %1002 = vmatprep.subr.mxu0 0.0
    %1003 = vmatpush2.xpose.msra.mxu0 0.0
    %1004 = vmatprep.subr.mxu0 0.0
    %1005 = vmatpush2.xpose.msra.mxu0 0.0
    %1006 = vmatprep.subr.mxu0 0.0
    %1007 = vmatpush2.xpose.msra.mxu0 0.0
    %1008 = vmatprep.subr.mxu0 0.0
    %1009 = vmatpush2.xpose.msra.mxu0 0.0
    %1010 = vmatprep.subr.mxu0 0.0
    %1011 = vmatpush2.xpose.msra.mxu0 0.0
    %1012 = vmatprep.subr.mxu0 0.0
    %1013 = vmatpush2.xpose.msra.mxu0 0.0
    %1014 = vmatprep.subr.mxu0 0.0
    %1015 = vmatpush2.xpose.msra.mxu0 0.0
    %1016 = vmatprep.subr.mxu0 0.0
    %1017 = vmatpush2.xpose.msra.mxu0 0.0
    %1018 = vmatprep.subr.mxu0 0.0
    %1019 = vmatpush2.xpose.msra.mxu0 0.0
    %1020 = vmatprep.subr.mxu0 0.0
    %1021 = vmatpush2.xpose.msra.mxu0 0.0
    %1022 = vmatprep.subr.mxu0 0.0
    %1023 = vmatpush2.xpose.msra.mxu0 0.0
    %1024 = vmatprep.subr.mxu0 0.0
    %1025 = vmatpush2.xpose.msra.mxu0 0.0
    %1026 = vmatprep.mubr.f32.mxu0 0.0
    %1027 = vmatmul.mubr.f32.gmra.mxu0 %v958
    %v1028 = vpop.f32.mrf.mxu0
    %v1029 = vadd.f32 0.0, %v1028
    %v1030 = vpop.f32.mrf.mxu0
    %1031 = vdwg.mxu0
    %1032 = vrot.lane.b32.xlu0 %v620, 120
    %v1033 = vpop.permute.xlu0 %1032
    %1034 = vrot.lane.b32.xlu0 %v620, 88
    %v1035 = vpop.permute.xlu0 %1034
    %v1036 = vsel %vm626, %v1033, 0
    %v1038 = vsel %vm626, %v1035, 0
    %1040 = vmatprep.subr.mxu0 0.0
    %1041 = vmatpush1.xpose.msra.mxu0 0.0
    %1042 = vmatprep.subr.mxu0 0.0
    %1043 = vmatpush1.xpose.msra.mxu0 0.0
    %1044 = vmatprep.subr.mxu0 0.0
    %1045 = vmatpush1.xpose.msra.mxu0 0.0
    %1046 = vmatprep.subr.mxu0 0.0
    %1047 = vmatpush1.xpose.msra.mxu0 0.0
    %1048 = vmatprep.subr.mxu0 0.0
    %1049 = vmatpush1.xpose.msra.mxu0 0.0
    %1050 = vmatprep.subr.mxu0 0.0
    %1051 = vmatpush1.xpose.msra.mxu0 0.0
    %1052 = vmatprep.subr.mxu0 0.0
    %1053 = vmatpush1.xpose.msra.mxu0 0.0
    %1054 = vmatprep.subr.mxu0 0.0
    %1055 = vmatpush1.xpose.msra.mxu0 0.0
    %1056 = vmatprep.subr.mxu0 0.0
    %1057 = vmatpush1.xpose.msra.mxu0 0.0
    %1058 = vmatprep.subr.mxu0 0.0
    %1059 = vmatpush1.xpose.msra.mxu0 0.0
    %1060 = vmatprep.subr.mxu0 0.0
    %1061 = vmatpush1.xpose.msra.mxu0 0.0
    %1062 = vmatprep.subr.mxu0 0.0
    %1063 = vmatpush1.xpose.msra.mxu0 0.0
    %1064 = vmatprep.subr.mxu0 0.0
    %1065 = vmatpush1.xpose.msra.mxu0 0.0
    %1066 = vmatprep.subr.mxu0 0.0
    %1067 = vmatpush1.xpose.msra.mxu0 0.0
    %1068 = vmatprep.subr.mxu0 0.0
    %1069 = vmatpush1.xpose.msra.mxu0 0.0
    %1070 = vmatprep.subr.mxu0 0.0
    %1071 = vmatpush1.xpose.msra.mxu0 %v1038
    %1072 = vmatprep.subr.mxu0 0.0
    %1073 = vmatpush2.xpose.msra.mxu0 0.0
    %1074 = vmatprep.subr.mxu0 0.0
    %1075 = vmatpush2.xpose.msra.mxu0 0.0
    %1076 = vmatprep.subr.mxu0 0.0
    %1077 = vmatpush2.xpose.msra.mxu0 0.0
    %1078 = vmatprep.subr.mxu0 0.0
    %1079 = vmatpush2.xpose.msra.mxu0 0.0
    %1080 = vmatprep.subr.mxu0 0.0
    %1081 = vmatpush2.xpose.msra.mxu0 0.0
    %1082 = vmatprep.subr.mxu0 0.0
    %1083 = vmatpush2.xpose.msra.mxu0 0.0
    %1084 = vmatprep.subr.mxu0 0.0
    %1085 = vmatpush2.xpose.msra.mxu0 0.0
    %1086 = vmatprep.subr.mxu0 0.0
    %1087 = vmatpush2.xpose.msra.mxu0 0.0
    %1088 = vmatprep.subr.mxu0 0.0
    %1089 = vmatpush2.xpose.msra.mxu0 0.0
    %1090 = vmatprep.subr.mxu0 0.0
    %1091 = vmatpush2.xpose.msra.mxu0 0.0
    %1092 = vmatprep.subr.mxu0 0.0
    %1093 = vmatpush2.xpose.msra.mxu0 0.0
    %1094 = vmatprep.subr.mxu0 0.0
    %1095 = vmatpush2.xpose.msra.mxu0 0.0
    %1096 = vmatprep.subr.mxu0 0.0
    %1097 = vmatpush2.xpose.msra.mxu0 0.0
    %1098 = vmatprep.subr.mxu0 0.0
    %1099 = vmatpush2.xpose.msra.mxu0 0.0
    %1100 = vmatprep.subr.mxu0 0.0
    %1101 = vmatpush2.xpose.msra.mxu0 0.0
    %1102 = vmatprep.subr.mxu0 0.0
    %1103 = vmatpush2.xpose.msra.mxu0 0.0
    %1104 = vmatprep.mubr.f32.mxu0 0.0
    %1105 = vmatmul.mubr.f32.gmra.mxu0 %v1036
    %v1106 = vpop.f32.mrf.mxu0
    %v1107 = vadd.f32 0.0, %v1106
    %v1108 = vpop.f32.mrf.mxu0
    %1109 = vdwg.mxu0
    %v1110 = vmul.f32 %v1029, 0.35355338
    %v1111 = vmul.f32 %v1107, 0.35355338
    %v1112 = vsel %vm626, %v1110, -inf
    %1113 = vmax.xlane.f32.xlu0 %v1112
    %v1114 = vpop.xlane.xlu0 %1113
    %v1115 = vsel %vm626, %v1111, -inf
    %1116 = vmax.xlane.f32.xlu0 %v1115
    %v1117 = vpop.xlane.xlu0 %1116
    %v1118 = vsub.f32 %v1110, %v1114
    %v1119 = vsub.f32 %v1111, %v1117
    %v1120 = vmul.f32 %v1118, 1.442695
    %v1121 = vpow.pop %v1120
    %v1122 = vmul.f32 %v1119, 1.442695
    %v1123 = vpow.pop %v1122
    %v1124 = vsel %vm626, %v1121, 0.0
    %1125 = vadd.xlane.f32.xlu0 %v1124
    %v1126 = vpop.xlane.xlu0 %1125
    %v1127 = vsel %vm626, %v1123, 0.0
    %1128 = vadd.xlane.f32.xlu0 %v1127
    %v1129 = vpop.xlane.xlu0 %1128
    %v1130 = vrcp.pop %v1126
    %v1131 = vrcp.pop %v1129
    %v1132 = vmul.f32 %v1121, %v1130
    %v1133 = vmul.f32 %v1123, %v1131
    %1134 = vrot.lane.b32.xlu0 %v615, 56
    %v1135 = vpop.permute.xlu0 %1134
    %v1138 = vsel %vm626, %v1132, 0
    %1140 = vmatprep.subr.mxu0 0.0
    %1141 = vmatpush1.msra.mxu0 0.0
    %1142 = vmatprep.subr.mxu0 0.0
    %1143 = vmatpush1.msra.mxu0 0.0
    %1144 = vmatprep.subr.mxu0 0.0
    %1145 = vmatpush1.msra.mxu0 0.0
    %1146 = vmatprep.subr.mxu0 0.0
    %1147 = vmatpush1.msra.mxu0 0.0
    %1148 = vmatprep.subr.mxu0 0.0
    %1149 = vmatpush1.msra.mxu0 0.0
    %1150 = vmatprep.subr.mxu0 0.0
    %1151 = vmatpush1.msra.mxu0 0.0
    %1152 = vmatprep.subr.mxu0 0.0
    %1153 = vmatpush1.msra.mxu0 0.0
    %1154 = vmatprep.subr.mxu0 0.0
    %1155 = vmatpush1.msra.mxu0 0.0
    %1156 = vmatprep.subr.mxu0 0.0
    %1157 = vmatpush1.msra.mxu0 0.0
    %1158 = vmatprep.subr.mxu0 0.0
    %1159 = vmatpush1.msra.mxu0 0.0
    %1160 = vmatprep.subr.mxu0 0.0
    %1161 = vmatpush1.msra.mxu0 0.0
    %1162 = vmatprep.subr.mxu0 0.0
    %1163 = vmatpush1.msra.mxu0 0.0
    %1164 = vmatprep.subr.mxu0 0.0
    %1165 = vmatpush1.msra.mxu0 0.0
    %1166 = vmatprep.subr.mxu0 0.0
    %1167 = vmatpush1.msra.mxu0 0.0
    %1168 = vmatprep.subr.mxu0 0.0
    %1169 = vmatpush1.msra.mxu0 0.0
    %1170 = vmatprep.subr.mxu0 0.0
    %1171 = vmatpush1.msra.mxu0 %v1135
    %1172 = vmatprep.subr.mxu0 0.0
    %1173 = vmatpush2.msra.mxu0 0.0
    %1174 = vmatprep.subr.mxu0 0.0
    %1175 = vmatpush2.msra.mxu0 0.0
    %1176 = vmatprep.subr.mxu0 0.0
    %1177 = vmatpush2.msra.mxu0 0.0
    %1178 = vmatprep.subr.mxu0 0.0
    %1179 = vmatpush2.msra.mxu0 0.0
    %1180 = vmatprep.subr.mxu0 0.0
    %1181 = vmatpush2.msra.mxu0 0.0
    %1182 = vmatprep.subr.mxu0 0.0
    %1183 = vmatpush2.msra.mxu0 0.0
    %1184 = vmatprep.subr.mxu0 0.0
    %1185 = vmatpush2.msra.mxu0 0.0
    %1186 = vmatprep.subr.mxu0 0.0
    %1187 = vmatpush2.msra.mxu0 0.0
    %1188 = vmatprep.subr.mxu0 0.0
    %1189 = vmatpush2.msra.mxu0 0.0
    %1190 = vmatprep.subr.mxu0 0.0
    %1191 = vmatpush2.msra.mxu0 0.0
    %1192 = vmatprep.subr.mxu0 0.0
    %1193 = vmatpush2.msra.mxu0 0.0
    %1194 = vmatprep.subr.mxu0 0.0
    %1195 = vmatpush2.msra.mxu0 0.0
    %1196 = vmatprep.subr.mxu0 0.0
    %1197 = vmatpush2.msra.mxu0 0.0
    %1198 = vmatprep.subr.mxu0 0.0
    %1199 = vmatpush2.msra.mxu0 0.0
    %1200 = vmatprep.subr.mxu0 0.0
    %1201 = vmatpush2.msra.mxu0 0.0
    %1202 = vmatprep.subr.mxu0 0.0
    %1203 = vmatpush2.msra.mxu0 0.0
    %1204 = vmatprep.mubr.f32.mxu0 0.0
    %1205 = vmatmul.mubr.f32.gmra.mxu0 %v1138
    %v1206 = vpop.f32.mrf.mxu0
    %v1207 = vadd.f32 0.0, %v1206
    %v1208 = vpop.f32.mrf.mxu0
    %1209 = vdwg.mxu0
    %1210 = vrot.lane.b32.xlu0 %v620, 56
    %v1211 = vpop.permute.xlu0 %1210
    %v1214 = vsel %vm626, %v1133, 0
    %1216 = vmatprep.subr.mxu0 0.0
    %1217 = vmatpush1.msra.mxu0 0.0
    %1218 = vmatprep.subr.mxu0 0.0
    %1219 = vmatpush1.msra.mxu0 0.0
    %1220 = vmatprep.subr.mxu0 0.0
    %1221 = vmatpush1.msra.mxu0 0.0
    %1222 = vmatprep.subr.mxu0 0.0
    %1223 = vmatpush1.msra.mxu0 0.0
    %1224 = vmatprep.subr.mxu0 0.0
    %1225 = vmatpush1.msra.mxu0 0.0
    %1226 = vmatprep.subr.mxu0 0.0
    %1227 = vmatpush1.msra.mxu0 0.0
    %1228 = vmatprep.subr.mxu0 0.0
    %1229 = vmatpush1.msra.mxu0 0.0
    %1230 = vmatprep.subr.mxu0 0.0
    %1231 = vmatpush1.msra.mxu0 0.0
    %1232 = vmatprep.subr.mxu0 0.0
    %1233 = vmatpush1.msra.mxu0 0.0
    %1234 = vmatprep.subr.mxu0 0.0
    %1235 = vmatpush1.msra.mxu0 0.0
    %1236 = vmatprep.subr.mxu0 0.0
    %1237 = vmatpush1.msra.mxu0 0.0
    %1238 = vmatprep.subr.mxu0 0.0
    %1239 = vmatpush1.msra.mxu0 0.0
    %1240 = vmatprep.subr.mxu0 0.0
    %1241 = vmatpush1.msra.mxu0 0.0
    %1242 = vmatprep.subr.mxu0 0.0
    %1243 = vmatpush1.msra.mxu0 0.0
    %1244 = vmatprep.subr.mxu0 0.0
    %1245 = vmatpush1.msra.mxu0 0.0
    %1246 = vmatprep.subr.mxu0 0.0
    %1247 = vmatpush1.msra.mxu0 %v1211
    %1248 = vmatprep.subr.mxu0 0.0
    %1249 = vmatpush2.msra.mxu0 0.0
    %1250 = vmatprep.subr.mxu0 0.0
    %1251 = vmatpush2.msra.mxu0 0.0
    %1252 = vmatprep.subr.mxu0 0.0
    %1253 = vmatpush2.msra.mxu0 0.0
    %1254 = vmatprep.subr.mxu0 0.0
    %1255 = vmatpush2.msra.mxu0 0.0
    %1256 = vmatprep.subr.mxu0 0.0
    %1257 = vmatpush2.msra.mxu0 0.0
    %1258 = vmatprep.subr.mxu0 0.0
    %1259 = vmatpush2.msra.mxu0 0.0
    %1260 = vmatprep.subr.mxu0 0.0
    %1261 = vmatpush2.msra.mxu0 0.0
    %1262 = vmatprep.subr.mxu0 0.0
    %1263 = vmatpush2.msra.mxu0 0.0
    %1264 = vmatprep.subr.mxu0 0.0
    %1265 = vmatpush2.msra.mxu0 0.0
    %1266 = vmatprep.subr.mxu0 0.0
    %1267 = vmatpush2.msra.mxu0 0.0
    %1268 = vmatprep.subr.mxu0 0.0
    %1269 = vmatpush2.msra.mxu0 0.0
    %1270 = vmatprep.subr.mxu0 0.0
    %1271 = vmatpush2.msra.mxu0 0.0
    %1272 = vmatprep.subr.mxu0 0.0
    %1273 = vmatpush2.msra.mxu0 0.0
    %1274 = vmatprep.subr.mxu0 0.0
    %1275 = vmatpush2.msra.mxu0 0.0
    %1276 = vmatprep.subr.mxu0 0.0
    %1277 = vmatpush2.msra.mxu0 0.0
    %1278 = vmatprep.subr.mxu0 0.0
    %1279 = vmatpush2.msra.mxu0 0.0
    %1280 = vmatprep.mubr.f32.mxu0 0.0
    %1281 = vmatmul.mubr.f32.gmra.mxu0 %v1214
    %v1282 = vpop.f32.mrf.mxu0
    %v1283 = vadd.f32 0.0, %v1282
    %v1284 = vpop.f32.mrf.mxu0
    %1285 = vdwg.mxu0
    %1286 = vrot.lane.b32.xlu0 %v615, 112
    %v1287 = vpop.permute.xlu0 %1286
    %1288 = vrot.lane.b32.xlu0 %v615, 80
    %v1289 = vpop.permute.xlu0 %1288
    %v1290 = vsel %vm626, %v1287, 0
    %v1292 = vsel %vm626, %v1289, 0
    %1294 = vmatprep.subr.mxu0 0.0
    %1295 = vmatpush1.xpose.msra.mxu0 0.0
    %1296 = vmatprep.subr.mxu0 0.0
    %1297 = vmatpush1.xpose.msra.mxu0 0.0
    %1298 = vmatprep.subr.mxu0 0.0
    %1299 = vmatpush1.xpose.msra.mxu0 0.0
    %1300 = vmatprep.subr.mxu0 0.0
    %1301 = vmatpush1.xpose.msra.mxu0 0.0
    %1302 = vmatprep.subr.mxu0 0.0
    %1303 = vmatpush1.xpose.msra.mxu0 0.0
    %1304 = vmatprep.subr.mxu0 0.0
    %1305 = vmatpush1.xpose.msra.mxu0 0.0
    %1306 = vmatprep.subr.mxu0 0.0
    %1307 = vmatpush1.xpose.msra.mxu0 0.0
    %1308 = vmatprep.subr.mxu0 0.0
    %1309 = vmatpush1.xpose.msra.mxu0 0.0
    %1310 = vmatprep.subr.mxu0 0.0
    %1311 = vmatpush1.xpose.msra.mxu0 0.0
    %1312 = vmatprep.subr.mxu0 0.0
    %1313 = vmatpush1.xpose.msra.mxu0 0.0
    %1314 = vmatprep.subr.mxu0 0.0
    %1315 = vmatpush1.xpose.msra.mxu0 0.0
    %1316 = vmatprep.subr.mxu0 0.0
    %1317 = vmatpush1.xpose.msra.mxu0 0.0
    %1318 = vmatprep.subr.mxu0 0.0
    %1319 = vmatpush1.xpose.msra.mxu0 0.0
    %1320 = vmatprep.subr.mxu0 0.0
    %1321 = vmatpush1.xpose.msra.mxu0 0.0
    %1322 = vmatprep.subr.mxu0 0.0
    %1323 = vmatpush1.xpose.msra.mxu0 0.0
    %1324 = vmatprep.subr.mxu0 0.0
    %1325 = vmatpush1.xpose.msra.mxu0 %v1292
    %1326 = vmatprep.subr.mxu0 0.0
    %1327 = vmatpush2.xpose.msra.mxu0 0.0
    %1328 = vmatprep.subr.mxu0 0.0
    %1329 = vmatpush2.xpose.msra.mxu0 0.0
    %1330 = vmatprep.subr.mxu0 0.0
    %1331 = vmatpush2.xpose.msra.mxu0 0.0
    %1332 = vmatprep.subr.mxu0 0.0
    %1333 = vmatpush2.xpose.msra.mxu0 0.0
    %1334 = vmatprep.subr.mxu0 0.0
    %1335 = vmatpush2.xpose.msra.mxu0 0.0
    %1336 = vmatprep.subr.mxu0 0.0
    %1337 = vmatpush2.xpose.msra.mxu0 0.0
    %1338 = vmatprep.subr.mxu0 0.0
    %1339 = vmatpush2.xpose.msra.mxu0 0.0
    %1340 = vmatprep.subr.mxu0 0.0
    %1341 = vmatpush2.xpose.msra.mxu0 0.0
    %1342 = vmatprep.subr.mxu0 0.0
    %1343 = vmatpush2.xpose.msra.mxu0 0.0
    %1344 = vmatprep.subr.mxu0 0.0
    %1345 = vmatpush2.xpose.msra.mxu0 0.0
    %1346 = vmatprep.subr.mxu0 0.0
    %1347 = vmatpush2.xpose.msra.mxu0 0.0
    %1348 = vmatprep.subr.mxu0 0.0
    %1349 = vmatpush2.xpose.msra.mxu0 0.0
    %1350 = vmatprep.subr.mxu0 0.0
    %1351 = vmatpush2.xpose.msra.mxu0 0.0
    %1352 = vmatprep.subr.mxu0 0.0
    %1353 = vmatpush2.xpose.msra.mxu0 0.0
    %1354 = vmatprep.subr.mxu0 0.0
    %1355 = vmatpush2.xpose.msra.mxu0 0.0
    %1356 = vmatprep.subr.mxu0 0.0
    %1357 = vmatpush2.xpose.msra.mxu0 0.0
    %1358 = vmatprep.mubr.f32.mxu0 0.0
    %1359 = vmatmul.mubr.f32.gmra.mxu0 %v1290
    %v1360 = vpop.f32.mrf.mxu0
    %v1361 = vadd.f32 0.0, %v1360
    %v1362 = vpop.f32.mrf.mxu0
    %1363 = vdwg.mxu0
    %1364 = vrot.lane.b32.xlu0 %v620, 112
    %v1365 = vpop.permute.xlu0 %1364
    %1366 = vrot.lane.b32.xlu0 %v620, 80
    %v1367 = vpop.permute.xlu0 %1366
    %v1368 = vsel %vm626, %v1365, 0
    %v1370 = vsel %vm626, %v1367, 0
    %1372 = vmatprep.subr.mxu0 0.0
    %1373 = vmatpush1.xpose.msra.mxu0 0.0
    %1374 = vmatprep.subr.mxu0 0.0
    %1375 = vmatpush1.xpose.msra.mxu0 0.0
    %1376 = vmatprep.subr.mxu0 0.0
    %1377 = vmatpush1.xpose.msra.mxu0 0.0
    %1378 = vmatprep.subr.mxu0 0.0
    %1379 = vmatpush1.xpose.msra.mxu0 0.0
    %1380 = vmatprep.subr.mxu0 0.0
    %1381 = vmatpush1.xpose.msra.mxu0 0.0
    %1382 = vmatprep.subr.mxu0 0.0
    %1383 = vmatpush1.xpose.msra.mxu0 0.0
    %1384 = vmatprep.subr.mxu0 0.0
    %1385 = vmatpush1.xpose.msra.mxu0 0.0
    %1386 = vmatprep.subr.mxu0 0.0
    %1387 = vmatpush1.xpose.msra.mxu0 0.0
    %1388 = vmatprep.subr.mxu0 0.0
    %1389 = vmatpush1.xpose.msra.mxu0 0.0
    %1390 = vmatprep.subr.mxu0 0.0
    %1391 = vmatpush1.xpose.msra.mxu0 0.0
    %1392 = vmatprep.subr.mxu0 0.0
    %1393 = vmatpush1.xpose.msra.mxu0 0.0
    %1394 = vmatprep.subr.mxu0 0.0
    %1395 = vmatpush1.xpose.msra.mxu0 0.0
    %1396 = vmatprep.subr.mxu0 0.0
    %1397 = vmatpush1.xpose.msra.mxu0 0.0
    %1398 = vmatprep.subr.mxu0 0.0
    %1399 = vmatpush1.xpose.msra.mxu0 0.0
    %1400 = vmatprep.subr.mxu0 0.0
    %1401 = vmatpush1.xpose.msra.mxu0 0.0
    %1402 = vmatprep.subr.mxu0 0.0
    %1403 = vmatpush1.xpose.msra.mxu0 %v1370
    %1404 = vmatprep.subr.mxu0 0.0
    %1405 = vmatpush2.xpose.msra.mxu0 0.0
    %1406 = vmatprep.subr.mxu0 0.0
    %1407 = vmatpush2.xpose.msra.mxu0 0.0
    %1408 = vmatprep.subr.mxu0 0.0
    %1409 = vmatpush2.xpose.msra.mxu0 0.0
    %1410 = vmatprep.subr.mxu0 0.0
    %1411 = vmatpush2.xpose.msra.mxu0 0.0
    %1412 = vmatprep.subr.mxu0 0.0
    %1413 = vmatpush2.xpose.msra.mxu0 0.0
    %1414 = vmatprep.subr.mxu0 0.0
    %1415 = vmatpush2.xpose.msra.mxu0 0.0
    %1416 = vmatprep.subr.mxu0 0.0
    %1417 = vmatpush2.xpose.msra.mxu0 0.0
    %1418 = vmatprep.subr.mxu0 0.0
    %1419 = vmatpush2.xpose.msra.mxu0 0.0
    %1420 = vmatprep.subr.mxu0 0.0
    %1421 = vmatpush2.xpose.msra.mxu0 0.0
    %1422 = vmatprep.subr.mxu0 0.0
    %1423 = vmatpush2.xpose.msra.mxu0 0.0
    %1424 = vmatprep.subr.mxu0 0.0
    %1425 = vmatpush2.xpose.msra.mxu0 0.0
    %1426 = vmatprep.subr.mxu0 0.0
    %1427 = vmatpush2.xpose.msra.mxu0 0.0
    %1428 = vmatprep.subr.mxu0 0.0
    %1429 = vmatpush2.xpose.msra.mxu0 0.0
    %1430 = vmatprep.subr.mxu0 0.0
    %1431 = vmatpush2.xpose.msra.mxu0 0.0
    %1432 = vmatprep.subr.mxu0 0.0
    %1433 = vmatpush2.xpose.msra.mxu0 0.0
    %1434 = vmatprep.subr.mxu0 0.0
    %1435 = vmatpush2.xpose.msra.mxu0 0.0
    %1436 = vmatprep.mubr.f32.mxu0 0.0
    %1437 = vmatmul.mubr.f32.gmra.mxu0 %v1368
    %v1438 = vpop.f32.mrf.mxu0
    %v1439 = vadd.f32 0.0, %v1438
    %v1440 = vpop.f32.mrf.mxu0
    %1441 = vdwg.mxu0
    %v1442 = vmul.f32 %v1361, 0.35355338
    %v1443 = vmul.f32 %v1439, 0.35355338
    %v1444 = vsel %vm626, %v1442, -inf
    %1445 = vmax.xlane.f32.xlu0 %v1444
    %v1446 = vpop.xlane.xlu0 %1445
    %v1447 = vsel %vm626, %v1443, -inf
    %1448 = vmax.xlane.f32.xlu0 %v1447
    %v1449 = vpop.xlane.xlu0 %1448
    %v1450 = vsub.f32 %v1442, %v1446
    %v1451 = vsub.f32 %v1443, %v1449
    %v1452 = vmul.f32 %v1450, 1.442695
    %v1453 = vpow.pop %v1452
    %v1454 = vmul.f32 %v1451, 1.442695
    %v1455 = vpow.pop %v1454
    %v1456 = vsel %vm626, %v1453, 0.0
    %1457 = vadd.xlane.f32.xlu0 %v1456
    %v1458 = vpop.xlane.xlu0 %1457
    %v1459 = vsel %vm626, %v1455, 0.0
    %1460 = vadd.xlane.f32.xlu0 %v1459
    %v1461 = vpop.xlane.xlu0 %1460
    %v1462 = vrcp.pop %v1458
    %v1463 = vrcp.pop %v1461
    %v1464 = vmul.f32 %v1453, %v1462
    %v1465 = vmul.f32 %v1455, %v1463
    %1466 = vrot.lane.b32.xlu0 %v615, 48
    %v1467 = vpop.permute.xlu0 %1466
    %v1470 = vsel %vm626, %v1464, 0
    %1472 = vmatprep.subr.mxu0 0.0
    %1473 = vmatpush1.msra.mxu0 0.0
    %1474 = vmatprep.subr.mxu0 0.0
    %1475 = vmatpush1.msra.mxu0 0.0
    %1476 = vmatprep.subr.mxu0 0.0
    %1477 = vmatpush1.msra.mxu0 0.0
    %1478 = vmatprep.subr.mxu0 0.0
    %1479 = vmatpush1.msra.mxu0 0.0
    %1480 = vmatprep.subr.mxu0 0.0
    %1481 = vmatpush1.msra.mxu0 0.0
    %1482 = vmatprep.subr.mxu0 0.0
    %1483 = vmatpush1.msra.mxu0 0.0
    %1484 = vmatprep.subr.mxu0 0.0
    %1485 = vmatpush1.msra.mxu0 0.0
    %1486 = vmatprep.subr.mxu0 0.0
    %1487 = vmatpush1.msra.mxu0 0.0
    %1488 = vmatprep.subr.mxu0 0.0
    %1489 = vmatpush1.msra.mxu0 0.0
    %1490 = vmatprep.subr.mxu0 0.0
    %1491 = vmatpush1.msra.mxu0 0.0
    %1492 = vmatprep.subr.mxu0 0.0
    %1493 = vmatpush1.msra.mxu0 0.0
    %1494 = vmatprep.subr.mxu0 0.0
    %1495 = vmatpush1.msra.mxu0 0.0
    %1496 = vmatprep.subr.mxu0 0.0
    %1497 = vmatpush1.msra.mxu0 0.0
    %1498 = vmatprep.subr.mxu0 0.0
    %1499 = vmatpush1.msra.mxu0 0.0
    %1500 = vmatprep.subr.mxu0 0.0
    %1501 = vmatpush1.msra.mxu0 0.0
    %1502 = vmatprep.subr.mxu0 0.0
    %1503 = vmatpush1.msra.mxu0 %v1467
    %1504 = vmatprep.subr.mxu0 0.0
    %1505 = vmatpush2.msra.mxu0 0.0
    %1506 = vmatprep.subr.mxu0 0.0
    %1507 = vmatpush2.msra.mxu0 0.0
    %1508 = vmatprep.subr.mxu0 0.0
    %1509 = vmatpush2.msra.mxu0 0.0
    %1510 = vmatprep.subr.mxu0 0.0
    %1511 = vmatpush2.msra.mxu0 0.0
    %1512 = vmatprep.subr.mxu0 0.0
    %1513 = vmatpush2.msra.mxu0 0.0
    %1514 = vmatprep.subr.mxu0 0.0
    %1515 = vmatpush2.msra.mxu0 0.0
    %1516 = vmatprep.subr.mxu0 0.0
    %1517 = vmatpush2.msra.mxu0 0.0
    %1518 = vmatprep.subr.mxu0 0.0
    %1519 = vmatpush2.msra.mxu0 0.0
    %1520 = vmatprep.subr.mxu0 0.0
    %1521 = vmatpush2.msra.mxu0 0.0
    %1522 = vmatprep.subr.mxu0 0.0
    %1523 = vmatpush2.msra.mxu0 0.0
    %1524 = vmatprep.subr.mxu0 0.0
    %1525 = vmatpush2.msra.mxu0 0.0
    %1526 = vmatprep.subr.mxu0 0.0
    %1527 = vmatpush2.msra.mxu0 0.0
    %1528 = vmatprep.subr.mxu0 0.0
    %1529 = vmatpush2.msra.mxu0 0.0
    %1530 = vmatprep.subr.mxu0 0.0
    %1531 = vmatpush2.msra.mxu0 0.0
    %1532 = vmatprep.subr.mxu0 0.0
    %1533 = vmatpush2.msra.mxu0 0.0
    %1534 = vmatprep.subr.mxu0 0.0
    %1535 = vmatpush2.msra.mxu0 0.0
    %1536 = vmatprep.mubr.f32.mxu0 0.0
    %1537 = vmatmul.mubr.f32.gmra.mxu0 %v1470
    %v1538 = vpop.f32.mrf.mxu0
    %v1539 = vadd.f32 0.0, %v1538
    %v1540 = vpop.f32.mrf.mxu0
    %1541 = vdwg.mxu0
    %1542 = vrot.lane.b32.xlu0 %v620, 48
    %v1543 = vpop.permute.xlu0 %1542
    %v1546 = vsel %vm626, %v1465, 0
    %1548 = vmatprep.subr.mxu0 0.0
    %1549 = vmatpush1.msra.mxu0 0.0
    %1550 = vmatprep.subr.mxu0 0.0
    %1551 = vmatpush1.msra.mxu0 0.0
    %1552 = vmatprep.subr.mxu0 0.0
    %1553 = vmatpush1.msra.mxu0 0.0
    %1554 = vmatprep.subr.mxu0 0.0
    %1555 = vmatpush1.msra.mxu0 0.0
    %1556 = vmatprep.subr.mxu0 0.0
    %1557 = vmatpush1.msra.mxu0 0.0
    %1558 = vmatprep.subr.mxu0 0.0
    %1559 = vmatpush1.msra.mxu0 0.0
    %1560 = vmatprep.subr.mxu0 0.0
    %1561 = vmatpush1.msra.mxu0 0.0
    %1562 = vmatprep.subr.mxu0 0.0
    %1563 = vmatpush1.msra.mxu0 0.0
    %1564 = vmatprep.subr.mxu0 0.0
    %1565 = vmatpush1.msra.mxu0 0.0
    %1566 = vmatprep.subr.mxu0 0.0
    %1567 = vmatpush1.msra.mxu0 0.0
    %1568 = vmatprep.subr.mxu0 0.0
    %1569 = vmatpush1.msra.mxu0 0.0
    %1570 = vmatprep.subr.mxu0 0.0
    %1571 = vmatpush1.msra.mxu0 0.0
    %1572 = vmatprep.subr.mxu0 0.0
    %1573 = vmatpush1.msra.mxu0 0.0
    %1574 = vmatprep.subr.mxu0 0.0
    %1575 = vmatpush1.msra.mxu0 0.0
    %1576 = vmatprep.subr.mxu0 0.0
    %1577 = vmatpush1.msra.mxu0 0.0
    %1578 = vmatprep.subr.mxu0 0.0
    %1579 = vmatpush1.msra.mxu0 %v1543
    %1580 = vmatprep.subr.mxu0 0.0
    %1581 = vmatpush2.msra.mxu0 0.0
    %1582 = vmatprep.subr.mxu0 0.0
    %1583 = vmatpush2.msra.mxu0 0.0
    %1584 = vmatprep.subr.mxu0 0.0
    %1585 = vmatpush2.msra.mxu0 0.0
    %1586 = vmatprep.subr.mxu0 0.0
    %1587 = vmatpush2.msra.mxu0 0.0
    %1588 = vmatprep.subr.mxu0 0.0
    %1589 = vmatpush2.msra.mxu0 0.0
    %1590 = vmatprep.subr.mxu0 0.0
    %1591 = vmatpush2.msra.mxu0 0.0
    %1592 = vmatprep.subr.mxu0 0.0
    %1593 = vmatpush2.msra.mxu0 0.0
    %1594 = vmatprep.subr.mxu0 0.0
    %1595 = vmatpush2.msra.mxu0 0.0
    %1596 = vmatprep.subr.mxu0 0.0
    %1597 = vmatpush2.msra.mxu0 0.0
    %1598 = vmatprep.subr.mxu0 0.0
    %1599 = vmatpush2.msra.mxu0 0.0
    %1600 = vmatprep.subr.mxu0 0.0
    %1601 = vmatpush2.msra.mxu0 0.0
    %1602 = vmatprep.subr.mxu0 0.0
    %1603 = vmatpush2.msra.mxu0 0.0
    %1604 = vmatprep.subr.mxu0 0.0
    %1605 = vmatpush2.msra.mxu0 0.0
    %1606 = vmatprep.subr.mxu0 0.0
    %1607 = vmatpush2.msra.mxu0 0.0
    %1608 = vmatprep.subr.mxu0 0.0
    %1609 = vmatpush2.msra.mxu0 0.0
    %1610 = vmatprep.subr.mxu0 0.0
    %1611 = vmatpush2.msra.mxu0 0.0
    %1612 = vmatprep.mubr.f32.mxu0 0.0
    %1613 = vmatmul.mubr.f32.gmra.mxu0 %v1546
    %v1614 = vpop.f32.mrf.mxu0
    %v1615 = vadd.f32 0.0, %v1614
    %v1616 = vpop.f32.mrf.mxu0
    %1617 = vdwg.mxu0
    %1618 = vrot.lane.b32.xlu0 %v615, 104
    %v1619 = vpop.permute.xlu0 %1618
    %1620 = vrot.lane.b32.xlu0 %v615, 72
    %v1621 = vpop.permute.xlu0 %1620
    %v1622 = vsel %vm626, %v1619, 0
    %v1624 = vsel %vm626, %v1621, 0
    %1626 = vmatprep.subr.mxu0 0.0
    %1627 = vmatpush1.xpose.msra.mxu0 0.0
    %1628 = vmatprep.subr.mxu0 0.0
    %1629 = vmatpush1.xpose.msra.mxu0 0.0
    %1630 = vmatprep.subr.mxu0 0.0
    %1631 = vmatpush1.xpose.msra.mxu0 0.0
    %1632 = vmatprep.subr.mxu0 0.0
    %1633 = vmatpush1.xpose.msra.mxu0 0.0
    %1634 = vmatprep.subr.mxu0 0.0
    %1635 = vmatpush1.xpose.msra.mxu0 0.0
    %1636 = vmatprep.subr.mxu0 0.0
    %1637 = vmatpush1.xpose.msra.mxu0 0.0
    %1638 = vmatprep.subr.mxu0 0.0
    %1639 = vmatpush1.xpose.msra.mxu0 0.0
    %1640 = vmatprep.subr.mxu0 0.0
    %1641 = vmatpush1.xpose.msra.mxu0 0.0
    %1642 = vmatprep.subr.mxu0 0.0
    %1643 = vmatpush1.xpose.msra.mxu0 0.0
    %1644 = vmatprep.subr.mxu0 0.0
    %1645 = vmatpush1.xpose.msra.mxu0 0.0
    %1646 = vmatprep.subr.mxu0 0.0
    %1647 = vmatpush1.xpose.msra.mxu0 0.0
    %1648 = vmatprep.subr.mxu0 0.0
    %1649 = vmatpush1.xpose.msra.mxu0 0.0
    %1650 = vmatprep.subr.mxu0 0.0
    %1651 = vmatpush1.xpose.msra.mxu0 0.0
    %1652 = vmatprep.subr.mxu0 0.0
    %1653 = vmatpush1.xpose.msra.mxu0 0.0
    %1654 = vmatprep.subr.mxu0 0.0
    %1655 = vmatpush1.xpose.msra.mxu0 0.0
    %1656 = vmatprep.subr.mxu0 0.0
    %1657 = vmatpush1.xpose.msra.mxu0 %v1624
    %1658 = vmatprep.subr.mxu0 0.0
    %1659 = vmatpush2.xpose.msra.mxu0 0.0
    %1660 = vmatprep.subr.mxu0 0.0
    %1661 = vmatpush2.xpose.msra.mxu0 0.0
    %1662 = vmatprep.subr.mxu0 0.0
    %1663 = vmatpush2.xpose.msra.mxu0 0.0
    %1664 = vmatprep.subr.mxu0 0.0
    %1665 = vmatpush2.xpose.msra.mxu0 0.0
    %1666 = vmatprep.subr.mxu0 0.0
    %1667 = vmatpush2.xpose.msra.mxu0 0.0
    %1668 = vmatprep.subr.mxu0 0.0
    %1669 = vmatpush2.xpose.msra.mxu0 0.0
    %1670 = vmatprep.subr.mxu0 0.0
    %1671 = vmatpush2.xpose.msra.mxu0 0.0
    %1672 = vmatprep.subr.mxu0 0.0
    %1673 = vmatpush2.xpose.msra.mxu0 0.0
    %1674 = vmatprep.subr.mxu0 0.0
    %1675 = vmatpush2.xpose.msra.mxu0 0.0
    %1676 = vmatprep.subr.mxu0 0.0
    %1677 = vmatpush2.xpose.msra.mxu0 0.0
    %1678 = vmatprep.subr.mxu0 0.0
    %1679 = vmatpush2.xpose.msra.mxu0 0.0
    %1680 = vmatprep.subr.mxu0 0.0
    %1681 = vmatpush2.xpose.msra.mxu0 0.0
    %1682 = vmatprep.subr.mxu0 0.0
    %1683 = vmatpush2.xpose.msra.mxu0 0.0
    %1684 = vmatprep.subr.mxu0 0.0
    %1685 = vmatpush2.xpose.msra.mxu0 0.0
    %1686 = vmatprep.subr.mxu0 0.0
    %1687 = vmatpush2.xpose.msra.mxu0 0.0
    %1688 = vmatprep.subr.mxu0 0.0
    %1689 = vmatpush2.xpose.msra.mxu0 0.0
    %1690 = vmatprep.mubr.f32.mxu0 0.0
    %1691 = vmatmul.mubr.f32.gmra.mxu0 %v1622
    %v1692 = vpop.f32.mrf.mxu0
    %v1693 = vadd.f32 0.0, %v1692
    %v1694 = vpop.f32.mrf.mxu0
    %1695 = vdwg.mxu0
    %1696 = vrot.lane.b32.xlu0 %v620, 104
    %v1697 = vpop.permute.xlu0 %1696
    %1698 = vrot.lane.b32.xlu0 %v620, 72
    %v1699 = vpop.permute.xlu0 %1698
    %v1700 = vsel %vm626, %v1697, 0
    %v1702 = vsel %vm626, %v1699, 0
    %1704 = vmatprep.subr.mxu0 0.0
    %1705 = vmatpush1.xpose.msra.mxu0 0.0
    %1706 = vmatprep.subr.mxu0 0.0
    %1707 = vmatpush1.xpose.msra.mxu0 0.0
    %1708 = vmatprep.subr.mxu0 0.0
    %1709 = vmatpush1.xpose.msra.mxu0 0.0
    %1710 = vmatprep.subr.mxu0 0.0
    %1711 = vmatpush1.xpose.msra.mxu0 0.0
    %1712 = vmatprep.subr.mxu0 0.0
    %1713 = vmatpush1.xpose.msra.mxu0 0.0
    %1714 = vmatprep.subr.mxu0 0.0
    %1715 = vmatpush1.xpose.msra.mxu0 0.0
    %1716 = vmatprep.subr.mxu0 0.0
    %1717 = vmatpush1.xpose.msra.mxu0 0.0
    %1718 = vmatprep.subr.mxu0 0.0
    %1719 = vmatpush1.xpose.msra.mxu0 0.0
    %1720 = vmatprep.subr.mxu0 0.0
    %1721 = vmatpush1.xpose.msra.mxu0 0.0
    %1722 = vmatprep.subr.mxu0 0.0
    %1723 = vmatpush1.xpose.msra.mxu0 0.0
    %1724 = vmatprep.subr.mxu0 0.0
    %1725 = vmatpush1.xpose.msra.mxu0 0.0
    %1726 = vmatprep.subr.mxu0 0.0
    %1727 = vmatpush1.xpose.msra.mxu0 0.0
    %1728 = vmatprep.subr.mxu0 0.0
    %1729 = vmatpush1.xpose.msra.mxu0 0.0
    %1730 = vmatprep.subr.mxu0 0.0
    %1731 = vmatpush1.xpose.msra.mxu0 0.0
    %1732 = vmatprep.subr.mxu0 0.0
    %1733 = vmatpush1.xpose.msra.mxu0 0.0
    %1734 = vmatprep.subr.mxu0 0.0
    %1735 = vmatpush1.xpose.msra.mxu0 %v1702
    %1736 = vmatprep.subr.mxu0 0.0
    %1737 = vmatpush2.xpose.msra.mxu0 0.0
    %1738 = vmatprep.subr.mxu0 0.0
    %1739 = vmatpush2.xpose.msra.mxu0 0.0
    %1740 = vmatprep.subr.mxu0 0.0
    %1741 = vmatpush2.xpose.msra.mxu0 0.0
    %1742 = vmatprep.subr.mxu0 0.0
    %1743 = vmatpush2.xpose.msra.mxu0 0.0
    %1744 = vmatprep.subr.mxu0 0.0
    %1745 = vmatpush2.xpose.msra.mxu0 0.0
    %1746 = vmatprep.subr.mxu0 0.0
    %1747 = vmatpush2.xpose.msra.mxu0 0.0
    %1748 = vmatprep.subr.mxu0 0.0
    %1749 = vmatpush2.xpose.msra.mxu0 0.0
    %1750 = vmatprep.subr.mxu0 0.0
    %1751 = vmatpush2.xpose.msra.mxu0 0.0
    %1752 = vmatprep.subr.mxu0 0.0
    %1753 = vmatpush2.xpose.msra.mxu0 0.0
    %1754 = vmatprep.subr.mxu0 0.0
    %1755 = vmatpush2.xpose.msra.mxu0 0.0
    %1756 = vmatprep.subr.mxu0 0.0
    %1757 = vmatpush2.xpose.msra.mxu0 0.0
    %1758 = vmatprep.subr.mxu0 0.0
    %1759 = vmatpush2.xpose.msra.mxu0 0.0
    %1760 = vmatprep.subr.mxu0 0.0
    %1761 = vmatpush2.xpose.msra.mxu0 0.0
    %1762 = vmatprep.subr.mxu0 0.0
    %1763 = vmatpush2.xpose.msra.mxu0 0.0
    %1764 = vmatprep.subr.mxu0 0.0
    %1765 = vmatpush2.xpose.msra.mxu0 0.0
    %1766 = vmatprep.subr.mxu0 0.0
    %1767 = vmatpush2.xpose.msra.mxu0 0.0
    %1768 = vmatprep.mubr.f32.mxu0 0.0
    %1769 = vmatmul.mubr.f32.gmra.mxu0 %v1700
    %v1770 = vpop.f32.mrf.mxu0
    %v1771 = vadd.f32 0.0, %v1770
    %v1772 = vpop.f32.mrf.mxu0
    %1773 = vdwg.mxu0
    %v1774 = vmul.f32 %v1693, 0.35355338
    %v1775 = vmul.f32 %v1771, 0.35355338
    %v1776 = vsel %vm626, %v1774, -inf
    %1777 = vmax.xlane.f32.xlu0 %v1776
    %v1778 = vpop.xlane.xlu0 %1777
    %v1779 = vsel %vm626, %v1775, -inf
    %1780 = vmax.xlane.f32.xlu0 %v1779
    %v1781 = vpop.xlane.xlu0 %1780
    %v1782 = vsub.f32 %v1774, %v1778
    %v1783 = vsub.f32 %v1775, %v1781
    %v1784 = vmul.f32 %v1782, 1.442695
    %v1785 = vpow.pop %v1784
    %v1786 = vmul.f32 %v1783, 1.442695
    %v1787 = vpow.pop %v1786
    %v1788 = vsel %vm626, %v1785, 0.0
    %1789 = vadd.xlane.f32.xlu0 %v1788
    %v1790 = vpop.xlane.xlu0 %1789
    %v1791 = vsel %vm626, %v1787, 0.0
    %1792 = vadd.xlane.f32.xlu0 %v1791
    %v1793 = vpop.xlane.xlu0 %1792
    %v1794 = vrcp.pop %v1790
    %v1795 = vrcp.pop %v1793
    %v1796 = vmul.f32 %v1785, %v1794
    %v1797 = vmul.f32 %v1787, %v1795
    %1798 = vrot.lane.b32.xlu0 %v615, 40
    %v1799 = vpop.permute.xlu0 %1798
    %v1802 = vsel %vm626, %v1796, 0
    %1804 = vmatprep.subr.mxu0 0.0
    %1805 = vmatpush1.msra.mxu0 0.0
    %1806 = vmatprep.subr.mxu0 0.0
    %1807 = vmatpush1.msra.mxu0 0.0
    %1808 = vmatprep.subr.mxu0 0.0
    %1809 = vmatpush1.msra.mxu0 0.0
    %1810 = vmatprep.subr.mxu0 0.0
    %1811 = vmatpush1.msra.mxu0 0.0
    %1812 = vmatprep.subr.mxu0 0.0
    %1813 = vmatpush1.msra.mxu0 0.0
    %1814 = vmatprep.subr.mxu0 0.0
    %1815 = vmatpush1.msra.mxu0 0.0
    %1816 = vmatprep.subr.mxu0 0.0
    %1817 = vmatpush1.msra.mxu0 0.0
    %1818 = vmatprep.subr.mxu0 0.0
    %1819 = vmatpush1.msra.mxu0 0.0
    %1820 = vmatprep.subr.mxu0 0.0
    %1821 = vmatpush1.msra.mxu0 0.0
    %1822 = vmatprep.subr.mxu0 0.0
    %1823 = vmatpush1.msra.mxu0 0.0
    %1824 = vmatprep.subr.mxu0 0.0
    %1825 = vmatpush1.msra.mxu0 0.0
    %1826 = vmatprep.subr.mxu0 0.0
    %1827 = vmatpush1.msra.mxu0 0.0
    %1828 = vmatprep.subr.mxu0 0.0
    %1829 = vmatpush1.msra.mxu0 0.0
    %1830 = vmatprep.subr.mxu0 0.0
    %1831 = vmatpush1.msra.mxu0 0.0
    %1832 = vmatprep.subr.mxu0 0.0
    %1833 = vmatpush1.msra.mxu0 0.0
    %1834 = vmatprep.subr.mxu0 0.0
    %1835 = vmatpush1.msra.mxu0 %v1799
    %1836 = vmatprep.subr.mxu0 0.0
    %1837 = vmatpush2.msra.mxu0 0.0
    %1838 = vmatprep.subr.mxu0 0.0
    %1839 = vmatpush2.msra.mxu0 0.0
    %1840 = vmatprep.subr.mxu0 0.0
    %1841 = vmatpush2.msra.mxu0 0.0
    %1842 = vmatprep.subr.mxu0 0.0
    %1843 = vmatpush2.msra.mxu0 0.0
    %1844 = vmatprep.subr.mxu0 0.0
    %1845 = vmatpush2.msra.mxu0 0.0
    %1846 = vmatprep.subr.mxu0 0.0
    %1847 = vmatpush2.msra.mxu0 0.0
    %1848 = vmatprep.subr.mxu0 0.0
    %1849 = vmatpush2.msra.mxu0 0.0
    %1850 = vmatprep.subr.mxu0 0.0
    %1851 = vmatpush2.msra.mxu0 0.0
    %1852 = vmatprep.subr.mxu0 0.0
    %1853 = vmatpush2.msra.mxu0 0.0
    %1854 = vmatprep.subr.mxu0 0.0
    %1855 = vmatpush2.msra.mxu0 0.0
    %1856 = vmatprep.subr.mxu0 0.0
    %1857 = vmatpush2.msra.mxu0 0.0
    %1858 = vmatprep.subr.mxu0 0.0
    %1859 = vmatpush2.msra.mxu0 0.0
    %1860 = vmatprep.subr.mxu0 0.0
    %1861 = vmatpush2.msra.mxu0 0.0
    %1862 = vmatprep.subr.mxu0 0.0
    %1863 = vmatpush2.msra.mxu0 0.0
    %1864 = vmatprep.subr.mxu0 0.0
    %1865 = vmatpush2.msra.mxu0 0.0
    %1866 = vmatprep.subr.mxu0 0.0
    %1867 = vmatpush2.msra.mxu0 0.0
    %1868 = vmatprep.mubr.f32.mxu0 0.0
    %1869 = vmatmul.mubr.f32.gmra.mxu0 %v1802
    %v1870 = vpop.f32.mrf.mxu0
    %v1871 = vadd.f32 0.0, %v1870
    %v1872 = vpop.f32.mrf.mxu0
    %1873 = vdwg.mxu0
    %1874 = vrot.lane.b32.xlu0 %v620, 40
    %v1875 = vpop.permute.xlu0 %1874
    %v1878 = vsel %vm626, %v1797, 0
    %1880 = vmatprep.subr.mxu0 0.0
    %1881 = vmatpush1.msra.mxu0 0.0
    %1882 = vmatprep.subr.mxu0 0.0
    %1883 = vmatpush1.msra.mxu0 0.0
    %1884 = vmatprep.subr.mxu0 0.0
    %1885 = vmatpush1.msra.mxu0 0.0
    %1886 = vmatprep.subr.mxu0 0.0
    %1887 = vmatpush1.msra.mxu0 0.0
    %1888 = vmatprep.subr.mxu0 0.0
    %1889 = vmatpush1.msra.mxu0 0.0
    %1890 = vmatprep.subr.mxu0 0.0
    %1891 = vmatpush1.msra.mxu0 0.0
    %1892 = vmatprep.subr.mxu0 0.0
    %1893 = vmatpush1.msra.mxu0 0.0
    %1894 = vmatprep.subr.mxu0 0.0
    %1895 = vmatpush1.msra.mxu0 0.0
    %1896 = vmatprep.subr.mxu0 0.0
    %1897 = vmatpush1.msra.mxu0 0.0
    %1898 = vmatprep.subr.mxu0 0.0
    %1899 = vmatpush1.msra.mxu0 0.0
    %1900 = vmatprep.subr.mxu0 0.0
    %1901 = vmatpush1.msra.mxu0 0.0
    %1902 = vmatprep.subr.mxu0 0.0
    %1903 = vmatpush1.msra.mxu0 0.0
    %1904 = vmatprep.subr.mxu0 0.0
    %1905 = vmatpush1.msra.mxu0 0.0
    %1906 = vmatprep.subr.mxu0 0.0
    %1907 = vmatpush1.msra.mxu0 0.0
    %1908 = vmatprep.subr.mxu0 0.0
    %1909 = vmatpush1.msra.mxu0 0.0
    %1910 = vmatprep.subr.mxu0 0.0
    %1911 = vmatpush1.msra.mxu0 %v1875
    %1912 = vmatprep.subr.mxu0 0.0
    %1913 = vmatpush2.msra.mxu0 0.0
    %1914 = vmatprep.subr.mxu0 0.0
    %1915 = vmatpush2.msra.mxu0 0.0
    %1916 = vmatprep.subr.mxu0 0.0
    %1917 = vmatpush2.msra.mxu0 0.0
    %1918 = vmatprep.subr.mxu0 0.0
    %1919 = vmatpush2.msra.mxu0 0.0
    %1920 = vmatprep.subr.mxu0 0.0
    %1921 = vmatpush2.msra.mxu0 0.0
    %1922 = vmatprep.subr.mxu0 0.0
    %1923 = vmatpush2.msra.mxu0 0.0
    %1924 = vmatprep.subr.mxu0 0.0
    %1925 = vmatpush2.msra.mxu0 0.0
    %1926 = vmatprep.subr.mxu0 0.0
    %1927 = vmatpush2.msra.mxu0 0.0
    %1928 = vmatprep.subr.mxu0 0.0
    %1929 = vmatpush2.msra.mxu0 0.0
    %1930 = vmatprep.subr.mxu0 0.0
    %1931 = vmatpush2.msra.mxu0 0.0
    %1932 = vmatprep.subr.mxu0 0.0
    %1933 = vmatpush2.msra.mxu0 0.0
    %1934 = vmatprep.subr.mxu0 0.0
    %1935 = vmatpush2.msra.mxu0 0.0
    %1936 = vmatprep.subr.mxu0 0.0
    %1937 = vmatpush2.msra.mxu0 0.0
    %1938 = vmatprep.subr.mxu0 0.0
    %1939 = vmatpush2.msra.mxu0 0.0
    %1940 = vmatprep.subr.mxu0 0.0
    %1941 = vmatpush2.msra.mxu0 0.0
    %1942 = vmatprep.subr.mxu0 0.0
    %1943 = vmatpush2.msra.mxu0 0.0
    %1944 = vmatprep.mubr.f32.mxu0 0.0
    %1945 = vmatmul.mubr.f32.gmra.mxu0 %v1878
    %v1946 = vpop.f32.mrf.mxu0
    %v1947 = vadd.f32 0.0, %v1946
    %v1948 = vpop.f32.mrf.mxu0
    %1949 = vdwg.mxu0
    %1952 = vrot.lane.b32.xlu0 %v1207, 8
    %v1953 = vpop.permute.xlu0 %1952
    %1954 = vrot.lane.b32.xlu0 %v1283, 8
    %v1955 = vpop.permute.xlu0 %1954
    %1960 = vrot.lane.b32.xlu0 %v1539, 16
    %v1961 = vpop.permute.xlu0 %1960
    %1962 = vrot.lane.b32.xlu0 %v1615, 16
    %v1963 = vpop.permute.xlu0 %1962
    %1968 = vrot.lane.b32.xlu0 %v1871, 24
    %v1969 = vpop.permute.xlu0 %1968
    %1970 = vrot.lane.b32.xlu0 %v1947, 24
    %v1971 = vpop.permute.xlu0 %1970
    %v1974 = vsel %vm626, %v875, %v1953
    %v1975 = vsel %vm626, %v951, %v1955
    %vm1976 = vcmask 130048
    %v1977 = vsel %vm1976, %v1974, %v1961
    %v1978 = vsel %vm1976, %v1975, %v1963
    %vm1979 = vcmask 195584
    %v1980 = vsel %vm1979, %v1977, %v1969
    %v1981 = vsel %vm1979, %v1978, %v1971
    %v1982 = vld [vmem:[#allocation13] sm:$0xff]
    %v1983 = vld [vmem:[#allocation13 + $0x8] sm:$0xff]
    %v1984 = vld [vmem:[#allocation13 + $0x10] sm:$0xff]
    %v1985 = vld [vmem:[#allocation13 + $0x18] sm:$0xff]
    %v1986 = vld [vmem:[%s12] sm:$0x1]
    %v1988 = vlaneseq
    %v1989 = vshrl.u32 %v1988, 7
    %v1990 = vsub.s32 0, %v1989
    %v1991 = vrot.slane %v1986, %v1990
    %v1994 = vsel %vm186, %v1980, 0
    %v1997 = vsel %vm186, %v1981, 0
    %1999 = vmatprep.subr.mxu0 0.0
    %2000 = vmatpush1.msra.mxu0 0.0
    %2001 = vmatprep.subr.mxu0 0.0
    %2002 = vmatpush1.msra.mxu0 0.0
    %2003 = vmatprep.subr.mxu0 0.0
    %2004 = vmatpush1.msra.mxu0 0.0
    %2005 = vmatprep.subr.mxu0 0.0
    %2006 = vmatpush1.msra.mxu0 0.0
    %2007 = vmatprep.subr.mxu0 0.0
    %2008 = vmatpush1.msra.mxu0 0.0
    %2009 = vmatprep.subr.mxu0 0.0
    %2010 = vmatpush1.msra.mxu0 0.0
    %2011 = vmatprep.subr.mxu0 0.0
    %2012 = vmatpush1.msra.mxu0 0.0
    %2013 = vmatprep.subr.mxu0 0.0
    %2014 = vmatpush1.msra.mxu0 0.0
    %2015 = vmatprep.subr.mxu0 0.0
    %2016 = vmatpush1.msra.mxu0 0.0
    %2017 = vmatprep.subr.mxu0 0.0
    %2018 = vmatpush1.msra.mxu0 0.0
    %2019 = vmatprep.subr.mxu0 0.0
    %2020 = vmatpush1.msra.mxu0 0.0
    %2021 = vmatprep.subr.mxu0 0.0
    %2022 = vmatpush1.msra.mxu0 0.0
    %2023 = vmatprep.subr.mxu0 0.0
    %2024 = vmatpush1.msra.mxu0 %v1985
    %2025 = vmatprep.subr.mxu0 0.0
    %2026 = vmatpush1.msra.mxu0 %v1984
    %2027 = vmatprep.subr.mxu0 0.0
    %2028 = vmatpush1.msra.mxu0 %v1983
    %2029 = vmatprep.subr.mxu0 0.0
    %2030 = vmatpush1.msra.mxu0 %v1982
    %2031 = vmatprep.subr.mxu0 0.0
    %2032 = vmatpush2.msra.mxu0 0.0
    %2033 = vmatprep.subr.mxu0 0.0
    %2034 = vmatpush2.msra.mxu0 0.0
    %2035 = vmatprep.subr.mxu0 0.0
    %2036 = vmatpush2.msra.mxu0 0.0
    %2037 = vmatprep.subr.mxu0 0.0
    %2038 = vmatpush2.msra.mxu0 0.0
    %2039 = vmatprep.subr.mxu0 0.0
    %2040 = vmatpush2.msra.mxu0 0.0
    %2041 = vmatprep.subr.mxu0 0.0
    %2042 = vmatpush2.msra.mxu0 0.0
    %2043 = vmatprep.subr.mxu0 0.0
    %2044 = vmatpush2.msra.mxu0 0.0
    %2045 = vmatprep.subr.mxu0 0.0
    %2046 = vmatpush2.msra.mxu0 0.0
    %2047 = vmatprep.subr.mxu0 0.0
    %2048 = vmatpush2.msra.mxu0 0.0
    %2049 = vmatprep.subr.mxu0 0.0
    %2050 = vmatpush2.msra.mxu0 0.0
    %2051 = vmatprep.subr.mxu0 0.0
    %2052 = vmatpush2.msra.mxu0 0.0
    %2053 = vmatprep.subr.mxu0 0.0
    %2054 = vmatpush2.msra.mxu0 0.0
    %2055 = vmatprep.subr.mxu0 0.0
    %2056 = vmatpush2.msra.mxu0 0.0
    %2057 = vmatprep.subr.mxu0 0.0
    %2058 = vmatpush2.msra.mxu0 0.0
    %2059 = vmatprep.subr.mxu0 0.0
    %2060 = vmatpush2.msra.mxu0 0.0
    %2061 = vmatprep.subr.mxu0 0.0
    %2062 = vmatpush2.msra.mxu0 0.0
    %2063 = vmatprep.mubr.f32.mxu0 0.0
    %2064 = vmatmul.mubr.f32.gmra.mxu0 %v1994
    %v2065 = vpop.f32.mrf.mxu0
    %v2066 = vadd.f32 %v1991, %v2065
    %v2067 = vpop.f32.mrf.mxu0
    %2068 = vmatprep.mubr.f32.mxu0 0.0
    %2069 = vmatmul.mubr.f32.gmra.mxu0 %v1997
    %v2070 = vpop.f32.mrf.mxu0
    %v2071 = vadd.f32 %v1991, %v2070
    %v2072 = vpop.f32.mrf.mxu0
    %2073 = vdwg.mxu0
    %v2074 = vadd.f32 %v529, %v2066
    %v2075 = vadd.f32 %v530, %v2071
    %v2076 = vld [vmem:[%s13] sm:$0x1]
    %v2077 = vld [vmem:[%s14] sm:$0x1]
    %v2078 = vsel %vm186, %v2074, 0.0
    %2079 = vadd.xlane.f32.xlu0 %v2078
    %v2080 = vpop.xlane.xlu0 %2079
    %v2081 = vsel %vm186, %v2075, 0.0
    %2082 = vadd.xlane.f32.xlu0 %v2081
    %v2083 = vpop.xlane.xlu0 %2082
    %v2084 = vmul.f32 %v2080, %v382
    %v2085 = vmul.f32 %v2083, %v382
    %v2086 = vsub.f32 %v2074, %v2084
    %v2087 = vsub.f32 %v2075, %v2085
    %v2088 = vmul.f32 %v2086, %v2086
    %v2089 = vmul.f32 %v2087, %v2087
    %v2090 = vsel %vm186, %v2088, 0.0
    %2091 = vadd.xlane.f32.xlu0 %v2090
    %v2092 = vpop.xlane.xlu0 %2091
    %v2093 = vsel %vm186, %v2089, 0.0
    %2094 = vadd.xlane.f32.xlu0 %v2093
    %v2095 = vpop.xlane.xlu0 %2094
    %v2096 = vmul.f32 %v2092, %v382
    %v2097 = vmul.f32 %v2095, %v382
    %v2098 = vadd.f32 %v2096, 1e-05
    %v2099 = vadd.f32 %v2097, 1e-05
    %v2100 = vrsqrt.pop %v2098
    %v2101 = vrsqrt.pop %v2099
    %v2102 = vmul.f32 %v2086, %v2100
    %v2103 = vmul.f32 %v2087, %v2101
    %v2105 = vlaneseq
    %v2106 = vshrl.u32 %v2105, 7
    %v2107 = vsub.s32 0, %v2106
    %v2108 = vrot.slane %v2076, %v2107
    %v2110 = vmul.f32 %v2102, %v2108
    %v2111 = vmul.f32 %v2103, %v2108
    %v2113 = vlaneseq
    %v2114 = vshrl.u32 %v2113, 7
    %v2115 = vsub.s32 0, %v2114
    %v2116 = vrot.slane %v2077, %v2115
    %v2118 = vadd.f32 %v2110, %v2116
    %v2119 = vadd.f32 %v2111, %v2116
    %s2120 = scalar_lea.vmem [#allocation11], 32
    %v2121 = vld [vmem:[%s2120] sm:$0xff]
    %v2122 = vld [vmem:[%s2120 + $0x8] sm:$0xff]
    %v2123 = vld [vmem:[%s2120 + $0x10] sm:$0xff]
    %v2124 = vld [vmem:[%s2120 + $0x18] sm:$0xff]
    %s2125 = scalar_lea.vmem %s10, 1
    %v2126 = vld [vmem:[%s2125] sm:$0x1]
    %v2128 = vlaneseq
    %v2129 = vshrl.u32 %v2128, 7
    %v2130 = vsub.s32 0, %v2129
    %v2131 = vrot.slane %v2126, %v2130
    %v2134 = vsel %vm186, %v2118, 0
    %v2137 = vsel %vm186, %v2119, 0
    %2139 = vmatprep.subr.mxu0 0.0
    %2140 = vmatpush1.msra.mxu0 0.0
    %2141 = vmatprep.subr.mxu0 0.0
    %2142 = vmatpush1.msra.mxu0 0.0
    %2143 = vmatprep.subr.mxu0 0.0
    %2144 = vmatpush1.msra.mxu0 0.0
    %2145 = vmatprep.subr.mxu0 0.0
    %2146 = vmatpush1.msra.mxu0 0.0
    %2147 = vmatprep.subr.mxu0 0.0
    %2148 = vmatpush1.msra.mxu0 0.0
    %2149 = vmatprep.subr.mxu0 0.0
    %2150 = vmatpush1.msra.mxu0 0.0
    %2151 = vmatprep.subr.mxu0 0.0
    %2152 = vmatpush1.msra.mxu0 0.0
    %2153 = vmatprep.subr.mxu0 0.0
    %2154 = vmatpush1.msra.mxu0 0.0
    %2155 = vmatprep.subr.mxu0 0.0
    %2156 = vmatpush1.msra.mxu0 0.0
    %2157 = vmatprep.subr.mxu0 0.0
    %2158 = vmatpush1.msra.mxu0 0.0
    %2159 = vmatprep.subr.mxu0 0.0
    %2160 = vmatpush1.msra.mxu0 0.0
    %2161 = vmatprep.subr.mxu0 0.0
    %2162 = vmatpush1.msra.mxu0 0.0
    %2163 = vmatprep.subr.mxu0 0.0
    %2164 = vmatpush1.msra.mxu0 %v2124
    %2165 = vmatprep.subr.mxu0 0.0
    %2166 = vmatpush1.msra.mxu0 %v2123
    %2167 = vmatprep.subr.mxu0 0.0
    %2168 = vmatpush1.msra.mxu0 %v2122
    %2169 = vmatprep.subr.mxu0 0.0
    %2170 = vmatpush1.msra.mxu0 %v2121
    %2171 = vmatprep.subr.mxu0 0.0
    %2172 = vmatpush2.msra.mxu0 0.0
    %2173 = vmatprep.subr.mxu0 0.0
    %2174 = vmatpush2.msra.mxu0 0.0
    %2175 = vmatprep.subr.mxu0 0.0
    %2176 = vmatpush2.msra.mxu0 0.0
    %2177 = vmatprep.subr.mxu0 0.0
    %2178 = vmatpush2.msra.mxu0 0.0
    %2179 = vmatprep.subr.mxu0 0.0
    %2180 = vmatpush2.msra.mxu0 0.0
    %2181 = vmatprep.subr.mxu0 0.0
    %2182 = vmatpush2.msra.mxu0 0.0
    %2183 = vmatprep.subr.mxu0 0.0
    %2184 = vmatpush2.msra.mxu0 0.0
    %2185 = vmatprep.subr.mxu0 0.0
    %2186 = vmatpush2.msra.mxu0 0.0
    %2187 = vmatprep.subr.mxu0 0.0
    %2188 = vmatpush2.msra.mxu0 0.0
    %2189 = vmatprep.subr.mxu0 0.0
    %2190 = vmatpush2.msra.mxu0 0.0
    %2191 = vmatprep.subr.mxu0 0.0
    %2192 = vmatpush2.msra.mxu0 0.0
    %2193 = vmatprep.subr.mxu0 0.0
    %2194 = vmatpush2.msra.mxu0 0.0
    %2195 = vmatprep.subr.mxu0 0.0
    %2196 = vmatpush2.msra.mxu0 0.0
    %2197 = vmatprep.subr.mxu0 0.0
    %2198 = vmatpush2.msra.mxu0 0.0
    %2199 = vmatprep.subr.mxu0 0.0
    %2200 = vmatpush2.msra.mxu0 0.0
    %2201 = vmatprep.subr.mxu0 0.0
    %2202 = vmatpush2.msra.mxu0 0.0
    %2203 = vmatprep.mubr.f32.mxu0 0.0
    %2204 = vmatmul.mubr.f32.gmra.mxu0 %v2134
    %v2205 = vpop.f32.mrf.mxu0
    %v2206 = vadd.f32 %v2131, %v2205
    %v2207 = vpop.f32.mrf.mxu0
    %2208 = vmatprep.mubr.f32.mxu0 0.0
    %2209 = vmatmul.mubr.f32.gmra.mxu0 %v2137
    %v2210 = vpop.f32.mrf.mxu0
    %v2211 = vadd.f32 %v2131, %v2210
    %v2212 = vpop.f32.mrf.mxu0
    %2213 = vdwg.mxu0
    %2215 = vrot.lane.b32.xlu0 %v2206, 96
    %v2216 = vpop.permute.xlu0 %2215
    %v2217 = vsel %vm626, %v2206, 0
    %v2219 = vsel %vm626, %v2216, 0
    %2221 = vmatprep.subr.mxu0 0.0
    %2222 = vmatpush1.xpose.msra.mxu0 0.0
    %2223 = vmatprep.subr.mxu0 0.0
    %2224 = vmatpush1.xpose.msra.mxu0 0.0
    %2225 = vmatprep.subr.mxu0 0.0
    %2226 = vmatpush1.xpose.msra.mxu0 0.0
    %2227 = vmatprep.subr.mxu0 0.0
    %2228 = vmatpush1.xpose.msra.mxu0 0.0
    %2229 = vmatprep.subr.mxu0 0.0
    %2230 = vmatpush1.xpose.msra.mxu0 0.0
    %2231 = vmatprep.subr.mxu0 0.0
    %2232 = vmatpush1.xpose.msra.mxu0 0.0
    %2233 = vmatprep.subr.mxu0 0.0
    %2234 = vmatpush1.xpose.msra.mxu0 0.0
    %2235 = vmatprep.subr.mxu0 0.0
    %2236 = vmatpush1.xpose.msra.mxu0 0.0
    %2237 = vmatprep.subr.mxu0 0.0
    %2238 = vmatpush1.xpose.msra.mxu0 0.0
    %2239 = vmatprep.subr.mxu0 0.0
    %2240 = vmatpush1.xpose.msra.mxu0 0.0
    %2241 = vmatprep.subr.mxu0 0.0
    %2242 = vmatpush1.xpose.msra.mxu0 0.0
    %2243 = vmatprep.subr.mxu0 0.0
    %2244 = vmatpush1.xpose.msra.mxu0 0.0
    %2245 = vmatprep.subr.mxu0 0.0
    %2246 = vmatpush1.xpose.msra.mxu0 0.0
    %2247 = vmatprep.subr.mxu0 0.0
    %2248 = vmatpush1.xpose.msra.mxu0 0.0
    %2249 = vmatprep.subr.mxu0 0.0
    %2250 = vmatpush1.xpose.msra.mxu0 0.0
    %2251 = vmatprep.subr.mxu0 0.0
    %2252 = vmatpush1.xpose.msra.mxu0 %v2219
    %2253 = vmatprep.subr.mxu0 0.0
    %2254 = vmatpush2.xpose.msra.mxu0 0.0
    %2255 = vmatprep.subr.mxu0 0.0
    %2256 = vmatpush2.xpose.msra.mxu0 0.0
    %2257 = vmatprep.subr.mxu0 0.0
    %2258 = vmatpush2.xpose.msra.mxu0 0.0
    %2259 = vmatprep.subr.mxu0 0.0
    %2260 = vmatpush2.xpose.msra.mxu0 0.0
    %2261 = vmatprep.subr.mxu0 0.0
    %2262 = vmatpush2.xpose.msra.mxu0 0.0
    %2263 = vmatprep.subr.mxu0 0.0
    %2264 = vmatpush2.xpose.msra.mxu0 0.0
    %2265 = vmatprep.subr.mxu0 0.0
    %2266 = vmatpush2.xpose.msra.mxu0 0.0
    %2267 = vmatprep.subr.mxu0 0.0
    %2268 = vmatpush2.xpose.msra.mxu0 0.0
    %2269 = vmatprep.subr.mxu0 0.0
    %2270 = vmatpush2.xpose.msra.mxu0 0.0
    %2271 = vmatprep.subr.mxu0 0.0
    %2272 = vmatpush2.xpose.msra.mxu0 0.0
    %2273 = vmatprep.subr.mxu0 0.0
    %2274 = vmatpush2.xpose.msra.mxu0 0.0
    %2275 = vmatprep.subr.mxu0 0.0
    %2276 = vmatpush2.xpose.msra.mxu0 0.0
    %2277 = vmatprep.subr.mxu0 0.0
    %2278 = vmatpush2.xpose.msra.mxu0 0.0
    %2279 = vmatprep.subr.mxu0 0.0
    %2280 = vmatpush2.xpose.msra.mxu0 0.0
    %2281 = vmatprep.subr.mxu0 0.0
    %2282 = vmatpush2.xpose.msra.mxu0 0.0
    %2283 = vmatprep.subr.mxu0 0.0
    %2284 = vmatpush2.xpose.msra.mxu0 0.0
    %2285 = vmatprep.mubr.f32.mxu0 0.0
    %2286 = vmatmul.mubr.f32.gmra.mxu0 %v2217
    %v2287 = vpop.f32.mrf.mxu0
    %v2288 = vadd.f32 0.0, %v2287
    %v2289 = vpop.f32.mrf.mxu0
    %2290 = vdwg.mxu0
    %2292 = vrot.lane.b32.xlu0 %v2211, 96
    %v2293 = vpop.permute.xlu0 %2292
    %v2294 = vsel %vm626, %v2211, 0
    %v2296 = vsel %vm626, %v2293, 0
    %2298 = vmatprep.subr.mxu0 0.0
    %2299 = vmatpush1.xpose.msra.mxu0 0.0
    %2300 = vmatprep.subr.mxu0 0.0
    %2301 = vmatpush1.xpose.msra.mxu0 0.0
    %2302 = vmatprep.subr.mxu0 0.0
    %2303 = vmatpush1.xpose.msra.mxu0 0.0
    %2304 = vmatprep.subr.mxu0 0.0
    %2305 = vmatpush1.xpose.msra.mxu0 0.0
    %2306 = vmatprep.subr.mxu0 0.0
    %2307 = vmatpush1.xpose.msra.mxu0 0.0
    %2308 = vmatprep.subr.mxu0 0.0
    %2309 = vmatpush1.xpose.msra.mxu0 0.0
    %2310 = vmatprep.subr.mxu0 0.0
    %2311 = vmatpush1.xpose.msra.mxu0 0.0
    %2312 = vmatprep.subr.mxu0 0.0
    %2313 = vmatpush1.xpose.msra.mxu0 0.0
    %2314 = vmatprep.subr.mxu0 0.0
    %2315 = vmatpush1.xpose.msra.mxu0 0.0
    %2316 = vmatprep.subr.mxu0 0.0
    %2317 = vmatpush1.xpose.msra.mxu0 0.0
    %2318 = vmatprep.subr.mxu0 0.0
    %2319 = vmatpush1.xpose.msra.mxu0 0.0
    %2320 = vmatprep.subr.mxu0 0.0
    %2321 = vmatpush1.xpose.msra.mxu0 0.0
    %2322 = vmatprep.subr.mxu0 0.0
    %2323 = vmatpush1.xpose.msra.mxu0 0.0
    %2324 = vmatprep.subr.mxu0 0.0
    %2325 = vmatpush1.xpose.msra.mxu0 0.0
    %2326 = vmatprep.subr.mxu0 0.0
    %2327 = vmatpush1.xpose.msra.mxu0 0.0
    %2328 = vmatprep.subr.mxu0 0.0
    %2329 = vmatpush1.xpose.msra.mxu0 %v2296
    %2330 = vmatprep.subr.mxu0 0.0
    %2331 = vmatpush2.xpose.msra.mxu0 0.0
    %2332 = vmatprep.subr.mxu0 0.0
    %2333 = vmatpush2.xpose.msra.mxu0 0.0
    %2334 = vmatprep.subr.mxu0 0.0
    %2335 = vmatpush2.xpose.msra.mxu0 0.0
    %2336 = vmatprep.subr.mxu0 0.0
    %2337 = vmatpush2.xpose.msra.mxu0 0.0
    %2338 = vmatprep.subr.mxu0 0.0
    %2339 = vmatpush2.xpose.msra.mxu0 0.0
    %2340 = vmatprep.subr.mxu0 0.0
    %2341 = vmatpush2.xpose.msra.mxu0 0.0
    %2342 = vmatprep.subr.mxu0 0.0
    %2343 = vmatpush2.xpose.msra.mxu0 0.0
    %2344 = vmatprep.subr.mxu0 0.0
    %2345 = vmatpush2.xpose.msra.mxu0 0.0
    %2346 = vmatprep.subr.mxu0 0.0
    %2347 = vmatpush2.xpose.msra.mxu0 0.0
    %2348 = vmatprep.subr.mxu0 0.0
    %2349 = vmatpush2.xpose.msra.mxu0 0.0
    %2350 = vmatprep.subr.mxu0 0.0
    %2351 = vmatpush2.xpose.msra.mxu0 0.0
    %2352 = vmatprep.subr.mxu0 0.0
    %2353 = vmatpush2.xpose.msra.mxu0 0.0
    %2354 = vmatprep.subr.mxu0 0.0
    %2355 = vmatpush2.xpose.msra.mxu0 0.0
    %2356 = vmatprep.subr.mxu0 0.0
    %2357 = vmatpush2.xpose.msra.mxu0 0.0
    %2358 = vmatprep.subr.mxu0 0.0
    %2359 = vmatpush2.xpose.msra.mxu0 0.0
    %2360 = vmatprep.subr.mxu0 0.0
    %2361 = vmatpush2.xpose.msra.mxu0 0.0
    %2362 = vmatprep.mubr.f32.mxu0 0.0
    %2363 = vmatmul.mubr.f32.gmra.mxu0 %v2294
    %v2364 = vpop.f32.mrf.mxu0
    %v2365 = vadd.f32 0.0, %v2364
    %v2366 = vpop.f32.mrf.mxu0
    %2367 = vdwg.mxu0
    %v2368 = vmul.f32 %v2288, 0.35355338
    %v2369 = vmul.f32 %v2365, 0.35355338
    %v2370 = vsel %vm626, %v2368, -inf
    %2371 = vmax.xlane.f32.xlu0 %v2370
    %v2372 = vpop.xlane.xlu0 %2371
    %v2373 = vsel %vm626, %v2369, -inf
    %2374 = vmax.xlane.f32.xlu0 %v2373
    %v2375 = vpop.xlane.xlu0 %2374
    %v2376 = vsub.f32 %v2368, %v2372
    %v2377 = vsub.f32 %v2369, %v2375
    %v2378 = vmul.f32 %v2376, 1.442695
    %v2379 = vpow.pop %v2378
    %v2380 = vmul.f32 %v2377, 1.442695
    %v2381 = vpow.pop %v2380
    %v2382 = vsel %vm626, %v2379, 0.0
    %2383 = vadd.xlane.f32.xlu0 %v2382
    %v2384 = vpop.xlane.xlu0 %2383
    %v2385 = vsel %vm626, %v2381, 0.0
    %2386 = vadd.xlane.f32.xlu0 %v2385
    %v2387 = vpop.xlane.xlu0 %2386
    %v2388 = vrcp.pop %v2384
    %v2389 = vrcp.pop %v2387
    %v2390 = vmul.f32 %v2379, %v2388
    %v2391 = vmul.f32 %v2381, %v2389
    %2392 = vrot.lane.b32.xlu0 %v2206, 64
    %v2393 = vpop.permute.xlu0 %2392
    %v2396 = vsel %vm626, %v2390, 0
    %2398 = vmatprep.subr.mxu0 0.0
    %2399 = vmatpush1.msra.mxu0 0.0
    %2400 = vmatprep.subr.mxu0 0.0
    %2401 = vmatpush1.msra.mxu0 0.0
    %2402 = vmatprep.subr.mxu0 0.0
    %2403 = vmatpush1.msra.mxu0 0.0
    %2404 = vmatprep.subr.mxu0 0.0
    %2405 = vmatpush1.msra.mxu0 0.0
    %2406 = vmatprep.subr.mxu0 0.0
    %2407 = vmatpush1.msra.mxu0 0.0
    %2408 = vmatprep.subr.mxu0 0.0
    %2409 = vmatpush1.msra.mxu0 0.0
    %2410 = vmatprep.subr.mxu0 0.0
    %2411 = vmatpush1.msra.mxu0 0.0
    %2412 = vmatprep.subr.mxu0 0.0
    %2413 = vmatpush1.msra.mxu0 0.0
    %2414 = vmatprep.subr.mxu0 0.0
    %2415 = vmatpush1.msra.mxu0 0.0
    %2416 = vmatprep.subr.mxu0 0.0
    %2417 = vmatpush1.msra.mxu0 0.0
    %2418 = vmatprep.subr.mxu0 0.0
    %2419 = vmatpush1.msra.mxu0 0.0
    %2420 = vmatprep.subr.mxu0 0.0
    %2421 = vmatpush1.msra.mxu0 0.0
    %2422 = vmatprep.subr.mxu0 0.0
    %2423 = vmatpush1.msra.mxu0 0.0
    %2424 = vmatprep.subr.mxu0 0.0
    %2425 = vmatpush1.msra.mxu0 0.0
    %2426 = vmatprep.subr.mxu0 0.0
    %2427 = vmatpush1.msra.mxu0 0.0
    %2428 = vmatprep.subr.mxu0 0.0
    %2429 = vmatpush1.msra.mxu0 %v2393
    %2430 = vmatprep.subr.mxu0 0.0
    %2431 = vmatpush2.msra.mxu0 0.0
    %2432 = vmatprep.subr.mxu0 0.0
    %2433 = vmatpush2.msra.mxu0 0.0
    %2434 = vmatprep.subr.mxu0 0.0
    %2435 = vmatpush2.msra.mxu0 0.0
    %2436 = vmatprep.subr.mxu0 0.0
    %2437 = vmatpush2.msra.mxu0 0.0
    %2438 = vmatprep.subr.mxu0 0.0
    %2439 = vmatpush2.msra.mxu0 0.0
    %2440 = vmatprep.subr.mxu0 0.0
    %2441 = vmatpush2.msra.mxu0 0.0
    %2442 = vmatprep.subr.mxu0 0.0
    %2443 = vmatpush2.msra.mxu0 0.0
    %2444 = vmatprep.subr.mxu0 0.0
    %2445 = vmatpush2.msra.mxu0 0.0
    %2446 = vmatprep.subr.mxu0 0.0
    %2447 = vmatpush2.msra.mxu0 0.0
    %2448 = vmatprep.subr.mxu0 0.0
    %2449 = vmatpush2.msra.mxu0 0.0
    %2450 = vmatprep.subr.mxu0 0.0
    %2451 = vmatpush2.msra.mxu0 0.0
    %2452 = vmatprep.subr.mxu0 0.0
    %2453 = vmatpush2.msra.mxu0 0.0
    %2454 = vmatprep.subr.mxu0 0.0
    %2455 = vmatpush2.msra.mxu0 0.0
    %2456 = vmatprep.subr.mxu0 0.0
    %2457 = vmatpush2.msra.mxu0 0.0
    %2458 = vmatprep.subr.mxu0 0.0
    %2459 = vmatpush2.msra.mxu0 0.0
    %2460 = vmatprep.subr.mxu0 0.0
    %2461 = vmatpush2.msra.mxu0 0.0
    %2462 = vmatprep.mubr.f32.mxu0 0.0
    %2463 = vmatmul.mubr.f32.gmra.mxu0 %v2396
    %v2464 = vpop.f32.mrf.mxu0
    %v2465 = vadd.f32 0.0, %v2464
    %v2466 = vpop.f32.mrf.mxu0
    %2467 = vdwg.mxu0
    %2468 = vrot.lane.b32.xlu0 %v2211, 64
    %v2469 = vpop.permute.xlu0 %2468
    %v2472 = vsel %vm626, %v2391, 0
    %2474 = vmatprep.subr.mxu0 0.0
    %2475 = vmatpush1.msra.mxu0 0.0
    %2476 = vmatprep.subr.mxu0 0.0
    %2477 = vmatpush1.msra.mxu0 0.0
    %2478 = vmatprep.subr.mxu0 0.0
    %2479 = vmatpush1.msra.mxu0 0.0
    %2480 = vmatprep.subr.mxu0 0.0
    %2481 = vmatpush1.msra.mxu0 0.0
    %2482 = vmatprep.subr.mxu0 0.0
    %2483 = vmatpush1.msra.mxu0 0.0
    %2484 = vmatprep.subr.mxu0 0.0
    %2485 = vmatpush1.msra.mxu0 0.0
    %2486 = vmatprep.subr.mxu0 0.0
    %2487 = vmatpush1.msra.mxu0 0.0
    %2488 = vmatprep.subr.mxu0 0.0
    %2489 = vmatpush1.msra.mxu0 0.0
    %2490 = vmatprep.subr.mxu0 0.0
    %2491 = vmatpush1.msra.mxu0 0.0
    %2492 = vmatprep.subr.mxu0 0.0
    %2493 = vmatpush1.msra.mxu0 0.0
    %2494 = vmatprep.subr.mxu0 0.0
    %2495 = vmatpush1.msra.mxu0 0.0
    %2496 = vmatprep.subr.mxu0 0.0
    %2497 = vmatpush1.msra.mxu0 0.0
    %2498 = vmatprep.subr.mxu0 0.0
    %2499 = vmatpush1.msra.mxu0 0.0
    %2500 = vmatprep.subr.mxu0 0.0
    %2501 = vmatpush1.msra.mxu0 0.0
    %2502 = vmatprep.subr.mxu0 0.0
    %2503 = vmatpush1.msra.mxu0 0.0
    %2504 = vmatprep.subr.mxu0 0.0
    %2505 = vmatpush1.msra.mxu0 %v2469
    %2506 = vmatprep.subr.mxu0 0.0
    %2507 = vmatpush2.msra.mxu0 0.0
    %2508 = vmatprep.subr.mxu0 0.0
    %2509 = vmatpush2.msra.mxu0 0.0
    %2510 = vmatprep.subr.mxu0 0.0
    %2511 = vmatpush2.msra.mxu0 0.0
    %2512 = vmatprep.subr.mxu0 0.0
    %2513 = vmatpush2.msra.mxu0 0.0
    %2514 = vmatprep.subr.mxu0 0.0
    %2515 = vmatpush2.msra.mxu0 0.0
    %2516 = vmatprep.subr.mxu0 0.0
    %2517 = vmatpush2.msra.mxu0 0.0
    %2518 = vmatprep.subr.mxu0 0.0
    %2519 = vmatpush2.msra.mxu0 0.0
    %2520 = vmatprep.subr.mxu0 0.0
    %2521 = vmatpush2.msra.mxu0 0.0
    %2522 = vmatprep.subr.mxu0 0.0
    %2523 = vmatpush2.msra.mxu0 0.0
    %2524 = vmatprep.subr.mxu0 0.0
    %2525 = vmatpush2.msra.mxu0 0.0
    %2526 = vmatprep.subr.mxu0 0.0
    %2527 = vmatpush2.msra.mxu0 0.0
    %2528 = vmatprep.subr.mxu0 0.0
    %2529 = vmatpush2.msra.mxu0 0.0
    %2530 = vmatprep.subr.mxu0 0.0
    %2531 = vmatpush2.msra.mxu0 0.0
    %2532 = vmatprep.subr.mxu0 0.0
    %2533 = vmatpush2.msra.mxu0 0.0
    %2534 = vmatprep.subr.mxu0 0.0
    %2535 = vmatpush2.msra.mxu0 0.0
    %2536 = vmatprep.subr.mxu0 0.0
    %2537 = vmatpush2.msra.mxu0 0.0
    %2538 = vmatprep.mubr.f32.mxu0 0.0
    %2539 = vmatmul.mubr.f32.gmra.mxu0 %v2472
    %v2540 = vpop.f32.mrf.mxu0
    %v2541 = vadd.f32 0.0, %v2540
    %v2542 = vpop.f32.mrf.mxu0
    %2543 = vdwg.mxu0
    %2544 = vrot.lane.b32.xlu0 %v2206, 120
    %v2545 = vpop.permute.xlu0 %2544
    %2546 = vrot.lane.b32.xlu0 %v2206, 88
    %v2547 = vpop.permute.xlu0 %2546
    %v2548 = vsel %vm626, %v2545, 0
    %v2550 = vsel %vm626, %v2547, 0
    %2552 = vmatprep.subr.mxu0 0.0
    %2553 = vmatpush1.xpose.msra.mxu0 0.0
    %2554 = vmatprep.subr.mxu0 0.0
    %2555 = vmatpush1.xpose.msra.mxu0 0.0
    %2556 = vmatprep.subr.mxu0 0.0
    %2557 = vmatpush1.xpose.msra.mxu0 0.0
    %2558 = vmatprep.subr.mxu0 0.0
    %2559 = vmatpush1.xpose.msra.mxu0 0.0
    %2560 = vmatprep.subr.mxu0 0.0
    %2561 = vmatpush1.xpose.msra.mxu0 0.0
    %2562 = vmatprep.subr.mxu0 0.0
    %2563 = vmatpush1.xpose.msra.mxu0 0.0
    %2564 = vmatprep.subr.mxu0 0.0
    %2565 = vmatpush1.xpose.msra.mxu0 0.0
    %2566 = vmatprep.subr.mxu0 0.0
    %2567 = vmatpush1.xpose.msra.mxu0 0.0
    %2568 = vmatprep.subr.mxu0 0.0
    %2569 = vmatpush1.xpose.msra.mxu0 0.0
    %2570 = vmatprep.subr.mxu0 0.0
    %2571 = vmatpush1.xpose.msra.mxu0 0.0
    %2572 = vmatprep.subr.mxu0 0.0
    %2573 = vmatpush1.xpose.msra.mxu0 0.0
    %2574 = vmatprep.subr.mxu0 0.0
    %2575 = vmatpush1.xpose.msra.mxu0 0.0
    %2576 = vmatprep.subr.mxu0 0.0
    %2577 = vmatpush1.xpose.msra.mxu0 0.0
    %2578 = vmatprep.subr.mxu0 0.0
    %2579 = vmatpush1.xpose.msra.mxu0 0.0
    %2580 = vmatprep.subr.mxu0 0.0
    %2581 = vmatpush1.xpose.msra.mxu0 0.0
    %2582 = vmatprep.subr.mxu0 0.0
    %2583 = vmatpush1.xpose.msra.mxu0 %v2550
    %2584 = vmatprep.subr.mxu0 0.0
    %2585 = vmatpush2.xpose.msra.mxu0 0.0
    %2586 = vmatprep.subr.mxu0 0.0
    %2587 = vmatpush2.xpose.msra.mxu0 0.0
    %2588 = vmatprep.subr.mxu0 0.0
    %2589 = vmatpush2.xpose.msra.mxu0 0.0
    %2590 = vmatprep.subr.mxu0 0.0
    %2591 = vmatpush2.xpose.msra.mxu0 0.0
    %2592 = vmatprep.subr.mxu0 0.0
    %2593 = vmatpush2.xpose.msra.mxu0 0.0
    %2594 = vmatprep.subr.mxu0 0.0
    %2595 = vmatpush2.xpose.msra.mxu0 0.0
    %2596 = vmatprep.subr.mxu0 0.0
    %2597 = vmatpush2.xpose.msra.mxu0 0.0
    %2598 = vmatprep.subr.mxu0 0.0
    %2599 = vmatpush2.xpose.msra.mxu0 0.0
    %2600 = vmatprep.subr.mxu0 0.0
    %2601 = vmatpush2.xpose.msra.mxu0 0.0
    %2602 = vmatprep.subr.mxu0 0.0
    %2603 = vmatpush2.xpose.msra.mxu0 0.0
    %2604 = vmatprep.subr.mxu0 0.0
    %2605 = vmatpush2.xpose.msra.mxu0 0.0
    %2606 = vmatprep.subr.mxu0 0.0
    %2607 = vmatpush2.xpose.msra.mxu0 0.0
    %2608 = vmatprep.subr.mxu0 0.0
    %2609 = vmatpush2.xpose.msra.mxu0 0.0
    %2610 = vmatprep.subr.mxu0 0.0
    %2611 = vmatpush2.xpose.msra.mxu0 0.0
    %2612 = vmatprep.subr.mxu0 0.0
    %2613 = vmatpush2.xpose.msra.mxu0 0.0
    %2614 = vmatprep.subr.mxu0 0.0
    %2615 = vmatpush2.xpose.msra.mxu0 0.0
    %2616 = vmatprep.mubr.f32.mxu0 0.0
    %2617 = vmatmul.mubr.f32.gmra.mxu0 %v2548
    %v2618 = vpop.f32.mrf.mxu0
    %v2619 = vadd.f32 0.0, %v2618
    %v2620 = vpop.f32.mrf.mxu0
    %2621 = vdwg.mxu0
    %2622 = vrot.lane.b32.xlu0 %v2211, 120
    %v2623 = vpop.permute.xlu0 %2622
    %2624 = vrot.lane.b32.xlu0 %v2211, 88
    %v2625 = vpop.permute.xlu0 %2624
    %v2626 = vsel %vm626, %v2623, 0
    %v2628 = vsel %vm626, %v2625, 0
    %2630 = vmatprep.subr.mxu0 0.0
    %2631 = vmatpush1.xpose.msra.mxu0 0.0
    %2632 = vmatprep.subr.mxu0 0.0
    %2633 = vmatpush1.xpose.msra.mxu0 0.0
    %2634 = vmatprep.subr.mxu0 0.0
    %2635 = vmatpush1.xpose.msra.mxu0 0.0
    %2636 = vmatprep.subr.mxu0 0.0
    %2637 = vmatpush1.xpose.msra.mxu0 0.0
    %2638 = vmatprep.subr.mxu0 0.0
    %2639 = vmatpush1.xpose.msra.mxu0 0.0
    %2640 = vmatprep.subr.mxu0 0.0
    %2641 = vmatpush1.xpose.msra.mxu0 0.0
    %2642 = vmatprep.subr.mxu0 0.0
    %2643 = vmatpush1.xpose.msra.mxu0 0.0
    %2644 = vmatprep.subr.mxu0 0.0
    %2645 = vmatpush1.xpose.msra.mxu0 0.0
    %2646 = vmatprep.subr.mxu0 0.0
    %2647 = vmatpush1.xpose.msra.mxu0 0.0
    %2648 = vmatprep.subr.mxu0 0.0
    %2649 = vmatpush1.xpose.msra.mxu0 0.0
    %2650 = vmatprep.subr.mxu0 0.0
    %2651 = vmatpush1.xpose.msra.mxu0 0.0
    %2652 = vmatprep.subr.mxu0 0.0
    %2653 = vmatpush1.xpose.msra.mxu0 0.0
    %2654 = vmatprep.subr.mxu0 0.0
    %2655 = vmatpush1.xpose.msra.mxu0 0.0
    %2656 = vmatprep.subr.mxu0 0.0
    %2657 = vmatpush1.xpose.msra.mxu0 0.0
    %2658 = vmatprep.subr.mxu0 0.0
    %2659 = vmatpush1.xpose.msra.mxu0 0.0
    %2660 = vmatprep.subr.mxu0 0.0
    %2661 = vmatpush1.xpose.msra.mxu0 %v2628
    %2662 = vmatprep.subr.mxu0 0.0
    %2663 = vmatpush2.xpose.msra.mxu0 0.0
    %2664 = vmatprep.subr.mxu0 0.0
    %2665 = vmatpush2.xpose.msra.mxu0 0.0
    %2666 = vmatprep.subr.mxu0 0.0
    %2667 = vmatpush2.xpose.msra.mxu0 0.0
    %2668 = vmatprep.subr.mxu0 0.0
    %2669 = vmatpush2.xpose.msra.mxu0 0.0
    %2670 = vmatprep.subr.mxu0 0.0
    %2671 = vmatpush2.xpose.msra.mxu0 0.0
    %2672 = vmatprep.subr.mxu0 0.0
    %2673 = vmatpush2.xpose.msra.mxu0 0.0
    %2674 = vmatprep.subr.mxu0 0.0
    %2675 = vmatpush2.xpose.msra.mxu0 0.0
    %2676 = vmatprep.subr.mxu0 0.0
    %2677 = vmatpush2.xpose.msra.mxu0 0.0
    %2678 = vmatprep.subr.mxu0 0.0
    %2679 = vmatpush2.xpose.msra.mxu0 0.0
    %2680 = vmatprep.subr.mxu0 0.0
    %2681 = vmatpush2.xpose.msra.mxu0 0.0
    %2682 = vmatprep.subr.mxu0 0.0
    %2683 = vmatpush2.xpose.msra.mxu0 0.0
    %2684 = vmatprep.subr.mxu0 0.0
    %2685 = vmatpush2.xpose.msra.mxu0 0.0
    %2686 = vmatprep.subr.mxu0 0.0
    %2687 = vmatpush2.xpose.msra.mxu0 0.0
    %2688 = vmatprep.subr.mxu0 0.0
    %2689 = vmatpush2.xpose.msra.mxu0 0.0
    %2690 = vmatprep.subr.mxu0 0.0
    %2691 = vmatpush2.xpose.msra.mxu0 0.0
    %2692 = vmatprep.subr.mxu0 0.0
    %2693 = vmatpush2.xpose.msra.mxu0 0.0
    %2694 = vmatprep.mubr.f32.mxu0 0.0
    %2695 = vmatmul.mubr.f32.gmra.mxu0 %v2626
    %v2696 = vpop.f32.mrf.mxu0
    %v2697 = vadd.f32 0.0, %v2696
    %v2698 = vpop.f32.mrf.mxu0
    %2699 = vdwg.mxu0
    %v2700 = vmul.f32 %v2619, 0.35355338
    %v2701 = vmul.f32 %v2697, 0.35355338
    %v2702 = vsel %vm626, %v2700, -inf
    %2703 = vmax.xlane.f32.xlu0 %v2702
    %v2704 = vpop.xlane.xlu0 %2703
    %v2705 = vsel %vm626, %v2701, -inf
    %2706 = vmax.xlane.f32.xlu0 %v2705
    %v2707 = vpop.xlane.xlu0 %2706
    %v2708 = vsub.f32 %v2700, %v2704
    %v2709 = vsub.f32 %v2701, %v2707
    %v2710 = vmul.f32 %v2708, 1.442695
    %v2711 = vpow.pop %v2710
    %v2712 = vmul.f32 %v2709, 1.442695
    %v2713 = vpow.pop %v2712
    %v2714 = vsel %vm626, %v2711, 0.0
    %2715 = vadd.xlane.f32.xlu0 %v2714
    %v2716 = vpop.xlane.xlu0 %2715
    %v2717 = vsel %vm626, %v2713, 0.0
    %2718 = vadd.xlane.f32.xlu0 %v2717
    %v2719 = vpop.xlane.xlu0 %2718
    %v2720 = vrcp.pop %v2716
    %v2721 = vrcp.pop %v2719
    %v2722 = vmul.f32 %v2711, %v2720
    %v2723 = vmul.f32 %v2713, %v2721
    %2724 = vrot.lane.b32.xlu0 %v2206, 56
    %v2725 = vpop.permute.xlu0 %2724
    %v2728 = vsel %vm626, %v2722, 0
    %2730 = vmatprep.subr.mxu0 0.0
    %2731 = vmatpush1.msra.mxu0 0.0
    %2732 = vmatprep.subr.mxu0 0.0
    %2733 = vmatpush1.msra.mxu0 0.0
    %2734 = vmatprep.subr.mxu0 0.0
    %2735 = vmatpush1.msra.mxu0 0.0
    %2736 = vmatprep.subr.mxu0 0.0
    %2737 = vmatpush1.msra.mxu0 0.0
    %2738 = vmatprep.subr.mxu0 0.0
    %2739 = vmatpush1.msra.mxu0 0.0
    %2740 = vmatprep.subr.mxu0 0.0
    %2741 = vmatpush1.msra.mxu0 0.0
    %2742 = vmatprep.subr.mxu0 0.0
    %2743 = vmatpush1.msra.mxu0 0.0
    %2744 = vmatprep.subr.mxu0 0.0
    %2745 = vmatpush1.msra.mxu0 0.0
    %2746 = vmatprep.subr.mxu0 0.0
    %2747 = vmatpush1.msra.mxu0 0.0
    %2748 = vmatprep.subr.mxu0 0.0
    %2749 = vmatpush1.msra.mxu0 0.0
    %2750 = vmatprep.subr.mxu0 0.0
    %2751 = vmatpush1.msra.mxu0 0.0
    %2752 = vmatprep.subr.mxu0 0.0
    %2753 = vmatpush1.msra.mxu0 0.0
    %2754 = vmatprep.subr.mxu0 0.0
    %2755 = vmatpush1.msra.mxu0 0.0
    %2756 = vmatprep.subr.mxu0 0.0
    %2757 = vmatpush1.msra.mxu0 0.0
    %2758 = vmatprep.subr.mxu0 0.0
    %2759 = vmatpush1.msra.mxu0 0.0
    %2760 = vmatprep.subr.mxu0 0.0
    %2761 = vmatpush1.msra.mxu0 %v2725
    %2762 = vmatprep.subr.mxu0 0.0
    %2763 = vmatpush2.msra.mxu0 0.0
    %2764 = vmatprep.subr.mxu0 0.0
    %2765 = vmatpush2.msra.mxu0 0.0
    %2766 = vmatprep.subr.mxu0 0.0
    %2767 = vmatpush2.msra.mxu0 0.0
    %2768 = vmatprep.subr.mxu0 0.0
    %2769 = vmatpush2.msra.mxu0 0.0
    %2770 = vmatprep.subr.mxu0 0.0
    %2771 = vmatpush2.msra.mxu0 0.0
    %2772 = vmatprep.subr.mxu0 0.0
    %2773 = vmatpush2.msra.mxu0 0.0
    %2774 = vmatprep.subr.mxu0 0.0
    %2775 = vmatpush2.msra.mxu0 0.0
    %2776 = vmatprep.subr.mxu0 0.0
    %2777 = vmatpush2.msra.mxu0 0.0
    %2778 = vmatprep.subr.mxu0 0.0
    %2779 = vmatpush2.msra.mxu0 0.0
    %2780 = vmatprep.subr.mxu0 0.0
    %2781 = vmatpush2.msra.mxu0 0.0
    %2782 = vmatprep.subr.mxu0 0.0
    %2783 = vmatpush2.msra.mxu0 0.0
    %2784 = vmatprep.subr.mxu0 0.0
    %2785 = vmatpush2.msra.mxu0 0.0
    %2786 = vmatprep.subr.mxu0 0.0
    %2787 = vmatpush2.msra.mxu0 0.0
    %2788 = vmatprep.subr.mxu0 0.0
    %2789 = vmatpush2.msra.mxu0 0.0
    %2790 = vmatprep.subr.mxu0 0.0
    %2791 = vmatpush2.msra.mxu0 0.0
    %2792 = vmatprep.subr.mxu0 0.0
    %2793 = vmatpush2.msra.mxu0 0.0
    %2794 = vmatprep.mubr.f32.mxu0 0.0
    %2795 = vmatmul.mubr.f32.gmra.mxu0 %v2728
    %v2796 = vpop.f32.mrf.mxu0
    %v2797 = vadd.f32 0.0, %v2796
    %v2798 = vpop.f32.mrf.mxu0
    %2799 = vdwg.mxu0
    %2800 = vrot.lane.b32.xlu0 %v2211, 56
    %v2801 = vpop.permute.xlu0 %2800
    %v2804 = vsel %vm626, %v2723, 0
    %2806 = vmatprep.subr.mxu0 0.0
    %2807 = vmatpush1.msra.mxu0 0.0
    %2808 = vmatprep.subr.mxu0 0.0
    %2809 = vmatpush1.msra.mxu0 0.0
    %2810 = vmatprep.subr.mxu0 0.0
    %2811 = vmatpush1.msra.mxu0 0.0
    %2812 = vmatprep.subr.mxu0 0.0
    %2813 = vmatpush1.msra.mxu0 0.0
    %2814 = vmatprep.subr.mxu0 0.0
    %2815 = vmatpush1.msra.mxu0 0.0
    %2816 = vmatprep.subr.mxu0 0.0
    %2817 = vmatpush1.msra.mxu0 0.0
    %2818 = vmatprep.subr.mxu0 0.0
    %2819 = vmatpush1.msra.mxu0 0.0
    %2820 = vmatprep.subr.mxu0 0.0
    %2821 = vmatpush1.msra.mxu0 0.0
    %2822 = vmatprep.subr.mxu0 0.0
    %2823 = vmatpush1.msra.mxu0 0.0
    %2824 = vmatprep.subr.mxu0 0.0
    %2825 = vmatpush1.msra.mxu0 0.0
    %2826 = vmatprep.subr.mxu0 0.0
    %2827 = vmatpush1.msra.mxu0 0.0
    %2828 = vmatprep.subr.mxu0 0.0
    %2829 = vmatpush1.msra.mxu0 0.0
    %2830 = vmatprep.subr.mxu0 0.0
    %2831 = vmatpush1.msra.mxu0 0.0
    %2832 = vmatprep.subr.mxu0 0.0
    %2833 = vmatpush1.msra.mxu0 0.0
    %2834 = vmatprep.subr.mxu0 0.0
    %2835 = vmatpush1.msra.mxu0 0.0
    %2836 = vmatprep.subr.mxu0 0.0
    %2837 = vmatpush1.msra.mxu0 %v2801
    %2838 = vmatprep.subr.mxu0 0.0
    %2839 = vmatpush2.msra.mxu0 0.0
    %2840 = vmatprep.subr.mxu0 0.0
    %2841 = vmatpush2.msra.mxu0 0.0
    %2842 = vmatprep.subr.mxu0 0.0
    %2843 = vmatpush2.msra.mxu0 0.0
    %2844 = vmatprep.subr.mxu0 0.0
    %2845 = vmatpush2.msra.mxu0 0.0
    %2846 = vmatprep.subr.mxu0 0.0
    %2847 = vmatpush2.msra.mxu0 0.0
    %2848 = vmatprep.subr.mxu0 0.0
    %2849 = vmatpush2.msra.mxu0 0.0
    %2850 = vmatprep.subr.mxu0 0.0
    %2851 = vmatpush2.msra.mxu0 0.0
    %2852 = vmatprep.subr.mxu0 0.0
    %2853 = vmatpush2.msra.mxu0 0.0
    %2854 = vmatprep.subr.mxu0 0.0
    %2855 = vmatpush2.msra.mxu0 0.0
    %2856 = vmatprep.subr.mxu0 0.0
    %2857 = vmatpush2.msra.mxu0 0.0
    %2858 = vmatprep.subr.mxu0 0.0
    %2859 = vmatpush2.msra.mxu0 0.0
    %2860 = vmatprep.subr.mxu0 0.0
    %2861 = vmatpush2.msra.mxu0 0.0
    %2862 = vmatprep.subr.mxu0 0.0
    %2863 = vmatpush2.msra.mxu0 0.0
    %2864 = vmatprep.subr.mxu0 0.0
    %2865 = vmatpush2.msra.mxu0 0.0
    %2866 = vmatprep.subr.mxu0 0.0
    %2867 = vmatpush2.msra.mxu0 0.0
    %2868 = vmatprep.subr.mxu0 0.0
    %2869 = vmatpush2.msra.mxu0 0.0
    %2870 = vmatprep.mubr.f32.mxu0 0.0
    %2871 = vmatmul.mubr.f32.gmra.mxu0 %v2804
    %v2872 = vpop.f32.mrf.mxu0
    %v2873 = vadd.f32 0.0, %v2872
    %v2874 = vpop.f32.mrf.mxu0
    %2875 = vdwg.mxu0
    %2876 = vrot.lane.b32.xlu0 %v2206, 112
    %v2877 = vpop.permute.xlu0 %2876
    %2878 = vrot.lane.b32.xlu0 %v2206, 80
    %v2879 = vpop.permute.xlu0 %2878
    %v2880 = vsel %vm626, %v2877, 0
    %v2882 = vsel %vm626, %v2879, 0
    %2884 = vmatprep.subr.mxu0 0.0
    %2885 = vmatpush1.xpose.msra.mxu0 0.0
    %2886 = vmatprep.subr.mxu0 0.0
    %2887 = vmatpush1.xpose.msra.mxu0 0.0
    %2888 = vmatprep.subr.mxu0 0.0
    %2889 = vmatpush1.xpose.msra.mxu0 0.0
    %2890 = vmatprep.subr.mxu0 0.0
    %2891 = vmatpush1.xpose.msra.mxu0 0.0
    %2892 = vmatprep.subr.mxu0 0.0
    %2893 = vmatpush1.xpose.msra.mxu0 0.0
    %2894 = vmatprep.subr.mxu0 0.0
    %2895 = vmatpush1.xpose.msra.mxu0 0.0
    %2896 = vmatprep.subr.mxu0 0.0
    %2897 = vmatpush1.xpose.msra.mxu0 0.0
    %2898 = vmatprep.subr.mxu0 0.0
    %2899 = vmatpush1.xpose.msra.mxu0 0.0
    %2900 = vmatprep.subr.mxu0 0.0
    %2901 = vmatpush1.xpose.msra.mxu0 0.0
    %2902 = vmatprep.subr.mxu0 0.0
    %2903 = vmatpush1.xpose.msra.mxu0 0.0
    %2904 = vmatprep.subr.mxu0 0.0
    %2905 = vmatpush1.xpose.msra.mxu0 0.0
    %2906 = vmatprep.subr.mxu0 0.0
    %2907 = vmatpush1.xpose.msra.mxu0 0.0
    %2908 = vmatprep.subr.mxu0 0.0
    %2909 = vmatpush1.xpose.msra.mxu0 0.0
    %2910 = vmatprep.subr.mxu0 0.0
    %2911 = vmatpush1.xpose.msra.mxu0 0.0
    %2912 = vmatprep.subr.mxu0 0.0
    %2913 = vmatpush1.xpose.msra.mxu0 0.0
    %2914 = vmatprep.subr.mxu0 0.0
    %2915 = vmatpush1.xpose.msra.mxu0 %v2882
    %2916 = vmatprep.subr.mxu0 0.0
    %2917 = vmatpush2.xpose.msra.mxu0 0.0
    %2918 = vmatprep.subr.mxu0 0.0
    %2919 = vmatpush2.xpose.msra.mxu0 0.0
    %2920 = vmatprep.subr.mxu0 0.0
    %2921 = vmatpush2.xpose.msra.mxu0 0.0
    %2922 = vmatprep.subr.mxu0 0.0
    %2923 = vmatpush2.xpose.msra.mxu0 0.0
    %2924 = vmatprep.subr.mxu0 0.0
    %2925 = vmatpush2.xpose.msra.mxu0 0.0
    %2926 = vmatprep.subr.mxu0 0.0
    %2927 = vmatpush2.xpose.msra.mxu0 0.0
    %2928 = vmatprep.subr.mxu0 0.0
    %2929 = vmatpush2.xpose.msra.mxu0 0.0
    %2930 = vmatprep.subr.mxu0 0.0
    %2931 = vmatpush2.xpose.msra.mxu0 0.0
    %2932 = vmatprep.subr.mxu0 0.0
    %2933 = vmatpush2.xpose.msra.mxu0 0.0
    %2934 = vmatprep.subr.mxu0 0.0
    %2935 = vmatpush2.xpose.msra.mxu0 0.0
    %2936 = vmatprep.subr.mxu0 0.0
    %2937 = vmatpush2.xpose.msra.mxu0 0.0
    %2938 = vmatprep.subr.mxu0 0.0
    %2939 = vmatpush2.xpose.msra.mxu0 0.0
    %2940 = vmatprep.subr.mxu0 0.0
    %2941 = vmatpush2.xpose.msra.mxu0 0.0
    %2942 = vmatprep.subr.mxu0 0.0
    %2943 = vmatpush2.xpose.msra.mxu0 0.0
    %2944 = vmatprep.subr.mxu0 0.0
    %2945 = vmatpush2.xpose.msra.mxu0 0.0
    %2946 = vmatprep.subr.mxu0 0.0
    %2947 = vmatpush2.xpose.msra.mxu0 0.0
    %2948 = vmatprep.mubr.f32.mxu0 0.0
    %2949 = vmatmul.mubr.f32.gmra.mxu0 %v2880
    %v2950 = vpop.f32.mrf.mxu0
    %v2951 = vadd.f32 0.0, %v2950
    %v2952 = vpop.f32.mrf.mxu0
    %2953 = vdwg.mxu0
    %2954 = vrot.lane.b32.xlu0 %v2211, 112
    %v2955 = vpop.permute.xlu0 %2954
    %2956 = vrot.lane.b32.xlu0 %v2211, 80
    %v2957 = vpop.permute.xlu0 %2956
    %v2958 = vsel %vm626, %v2955, 0
    %v2960 = vsel %vm626, %v2957, 0
    %2962 = vmatprep.subr.mxu0 0.0
    %2963 = vmatpush1.xpose.msra.mxu0 0.0
    %2964 = vmatprep.subr.mxu0 0.0
    %2965 = vmatpush1.xpose.msra.mxu0 0.0
    %2966 = vmatprep.subr.mxu0 0.0
    %2967 = vmatpush1.xpose.msra.mxu0 0.0
    %2968 = vmatprep.subr.mxu0 0.0
    %2969 = vmatpush1.xpose.msra.mxu0 0.0
    %2970 = vmatprep.subr.mxu0 0.0
    %2971 = vmatpush1.xpose.msra.mxu0 0.0
    %2972 = vmatprep.subr.mxu0 0.0
    %2973 = vmatpush1.xpose.msra.mxu0 0.0
    %2974 = vmatprep.subr.mxu0 0.0
    %2975 = vmatpush1.xpose.msra.mxu0 0.0
    %2976 = vmatprep.subr.mxu0 0.0
    %2977 = vmatpush1.xpose.msra.mxu0 0.0
    %2978 = vmatprep.subr.mxu0 0.0
    %2979 = vmatpush1.xpose.msra.mxu0 0.0
    %2980 = vmatprep.subr.mxu0 0.0
    %2981 = vmatpush1.xpose.msra.mxu0 0.0
    %2982 = vmatprep.subr.mxu0 0.0
    %2983 = vmatpush1.xpose.msra.mxu0 0.0
    %2984 = vmatprep.subr.mxu0 0.0
    %2985 = vmatpush1.xpose.msra.mxu0 0.0
    %2986 = vmatprep.subr.mxu0 0.0
    %2987 = vmatpush1.xpose.msra.mxu0 0.0
    %2988 = vmatprep.subr.mxu0 0.0
    %2989 = vmatpush1.xpose.msra.mxu0 0.0
    %2990 = vmatprep.subr.mxu0 0.0
    %2991 = vmatpush1.xpose.msra.mxu0 0.0
    %2992 = vmatprep.subr.mxu0 0.0
    %2993 = vmatpush1.xpose.msra.mxu0 %v2960
    %2994 = vmatprep.subr.mxu0 0.0
    %2995 = vmatpush2.xpose.msra.mxu0 0.0
    %2996 = vmatprep.subr.mxu0 0.0
    %2997 = vmatpush2.xpose.msra.mxu0 0.0
    %2998 = vmatprep.subr.mxu0 0.0
    %2999 = vmatpush2.xpose.msra.mxu0 0.0
    %3000 = vmatprep.subr.mxu0 0.0
    %3001 = vmatpush2.xpose.msra.mxu0 0.0
    %3002 = vmatprep.subr.mxu0 0.0
    %3003 = vmatpush2.xpose.msra.mxu0 0.0
    %3004 = vmatprep.subr.mxu0 0.0
    %3005 = vmatpush2.xpose.msra.mxu0 0.0
    %3006 = vmatprep.subr.mxu0 0.0
    %3007 = vmatpush2.xpose.msra.mxu0 0.0
    %3008 = vmatprep.subr.mxu0 0.0
    %3009 = vmatpush2.xpose.msra.mxu0 0.0
    %3010 = vmatprep.subr.mxu0 0.0
    %3011 = vmatpush2.xpose.msra.mxu0 0.0
    %3012 = vmatprep.subr.mxu0 0.0
    %3013 = vmatpush2.xpose.msra.mxu0 0.0
    %3014 = vmatprep.subr.mxu0 0.0
    %3015 = vmatpush2.xpose.msra.mxu0 0.0
    %3016 = vmatprep.subr.mxu0 0.0
    %3017 = vmatpush2.xpose.msra.mxu0 0.0
    %3018 = vmatprep.subr.mxu0 0.0
    %3019 = vmatpush2.xpose.msra.mxu0 0.0
    %3020 = vmatprep.subr.mxu0 0.0
    %3021 = vmatpush2.xpose.msra.mxu0 0.0
    %3022 = vmatprep.subr.mxu0 0.0
    %3023 = vmatpush2.xpose.msra.mxu0 0.0
    %3024 = vmatprep.subr.mxu0 0.0
    %3025 = vmatpush2.xpose.msra.mxu0 0.0
    %3026 = vmatprep.mubr.f32.mxu0 0.0
    %3027 = vmatmul.mubr.f32.gmra.mxu0 %v2958
    %v3028 = vpop.f32.mrf.mxu0
    %v3029 = vadd.f32 0.0, %v3028
    %v3030 = vpop.f32.mrf.mxu0
    %3031 = vdwg.mxu0
    %v3032 = vmul.f32 %v2951, 0.35355338
    %v3033 = vmul.f32 %v3029, 0.35355338
    %v3034 = vsel %vm626, %v3032, -inf
    %3035 = vmax.xlane.f32.xlu0 %v3034
    %v3036 = vpop.xlane.xlu0 %3035
    %v3037 = vsel %vm626, %v3033, -inf
    %3038 = vmax.xlane.f32.xlu0 %v3037
    %v3039 = vpop.xlane.xlu0 %3038
    %v3040 = vsub.f32 %v3032, %v3036
    %v3041 = vsub.f32 %v3033, %v3039
    %v3042 = vmul.f32 %v3040, 1.442695
    %v3043 = vpow.pop %v3042
    %v3044 = vmul.f32 %v3041, 1.442695
    %v3045 = vpow.pop %v3044
    %v3046 = vsel %vm626, %v3043, 0.0
    %3047 = vadd.xlane.f32.xlu0 %v3046
    %v3048 = vpop.xlane.xlu0 %3047
    %v3049 = vsel %vm626, %v3045, 0.0
    %3050 = vadd.xlane.f32.xlu0 %v3049
    %v3051 = vpop.xlane.xlu0 %3050
    %v3052 = vrcp.pop %v3048
    %v3053 = vrcp.pop %v3051
    %v3054 = vmul.f32 %v3043, %v3052
    %v3055 = vmul.f32 %v3045, %v3053
    %3056 = vrot.lane.b32.xlu0 %v2206, 48
    %v3057 = vpop.permute.xlu0 %3056
    %v3060 = vsel %vm626, %v3054, 0
    %3062 = vmatprep.subr.mxu0 0.0
    %3063 = vmatpush1.msra.mxu0 0.0
    %3064 = vmatprep.subr.mxu0 0.0
    %3065 = vmatpush1.msra.mxu0 0.0
    %3066 = vmatprep.subr.mxu0 0.0
    %3067 = vmatpush1.msra.mxu0 0.0
    %3068 = vmatprep.subr.mxu0 0.0
    %3069 = vmatpush1.msra.mxu0 0.0
    %3070 = vmatprep.subr.mxu0 0.0
    %3071 = vmatpush1.msra.mxu0 0.0
    %3072 = vmatprep.subr.mxu0 0.0
    %3073 = vmatpush1.msra.mxu0 0.0
    %3074 = vmatprep.subr.mxu0 0.0
    %3075 = vmatpush1.msra.mxu0 0.0
    %3076 = vmatprep.subr.mxu0 0.0
    %3077 = vmatpush1.msra.mxu0 0.0
    %3078 = vmatprep.subr.mxu0 0.0
    %3079 = vmatpush1.msra.mxu0 0.0
    %3080 = vmatprep.subr.mxu0 0.0
    %3081 = vmatpush1.msra.mxu0 0.0
    %3082 = vmatprep.subr.mxu0 0.0
    %3083 = vmatpush1.msra.mxu0 0.0
    %3084 = vmatprep.subr.mxu0 0.0
    %3085 = vmatpush1.msra.mxu0 0.0
    %3086 = vmatprep.subr.mxu0 0.0
    %3087 = vmatpush1.msra.mxu0 0.0
    %3088 = vmatprep.subr.mxu0 0.0
    %3089 = vmatpush1.msra.mxu0 0.0
    %3090 = vmatprep.subr.mxu0 0.0
    %3091 = vmatpush1.msra.mxu0 0.0
    %3092 = vmatprep.subr.mxu0 0.0
    %3093 = vmatpush1.msra.mxu0 %v3057
    %3094 = vmatprep.subr.mxu0 0.0
    %3095 = vmatpush2.msra.mxu0 0.0
    %3096 = vmatprep.subr.mxu0 0.0
    %3097 = vmatpush2.msra.mxu0 0.0
    %3098 = vmatprep.subr.mxu0 0.0
    %3099 = vmatpush2.msra.mxu0 0.0
    %3100 = vmatprep.subr.mxu0 0.0
    %3101 = vmatpush2.msra.mxu0 0.0
    %3102 = vmatprep.subr.mxu0 0.0
    %3103 = vmatpush2.msra.mxu0 0.0
    %3104 = vmatprep.subr.mxu0 0.0
    %3105 = vmatpush2.msra.mxu0 0.0
    %3106 = vmatprep.subr.mxu0 0.0
    %3107 = vmatpush2.msra.mxu0 0.0
    %3108 = vmatprep.subr.mxu0 0.0
    %3109 = vmatpush2.msra.mxu0 0.0
    %3110 = vmatprep.subr.mxu0 0.0
    %3111 = vmatpush2.msra.mxu0 0.0
    %3112 = vmatprep.subr.mxu0 0.0
    %3113 = vmatpush2.msra.mxu0 0.0
    %3114 = vmatprep.subr.mxu0 0.0
    %3115 = vmatpush2.msra.mxu0 0.0
    %3116 = vmatprep.subr.mxu0 0.0
    %3117 = vmatpush2.msra.mxu0 0.0
    %3118 = vmatprep.subr.mxu0 0.0
    %3119 = vmatpush2.msra.mxu0 0.0
    %3120 = vmatprep.subr.mxu0 0.0
    %3121 = vmatpush2.msra.mxu0 0.0
    %3122 = vmatprep.subr.mxu0 0.0
    %3123 = vmatpush2.msra.mxu0 0.0
    %3124 = vmatprep.subr.mxu0 0.0
    %3125 = vmatpush2.msra.mxu0 0.0
    %3126 = vmatprep.mubr.f32.mxu0 0.0
    %3127 = vmatmul.mubr.f32.gmra.mxu0 %v3060
    %v3128 = vpop.f32.mrf.mxu0
    %v3129 = vadd.f32 0.0, %v3128
    %v3130 = vpop.f32.mrf.mxu0
    %3131 = vdwg.mxu0
    %3132 = vrot.lane.b32.xlu0 %v2211, 48
    %v3133 = vpop.permute.xlu0 %3132
    %v3136 = vsel %vm626, %v3055, 0
    %3138 = vmatprep.subr.mxu0 0.0
    %3139 = vmatpush1.msra.mxu0 0.0
    %3140 = vmatprep.subr.mxu0 0.0
    %3141 = vmatpush1.msra.mxu0 0.0
    %3142 = vmatprep.subr.mxu0 0.0
    %3143 = vmatpush1.msra.mxu0 0.0
    %3144 = vmatprep.subr.mxu0 0.0
    %3145 = vmatpush1.msra.mxu0 0.0
    %3146 = vmatprep.subr.mxu0 0.0
    %3147 = vmatpush1.msra.mxu0 0.0
    %3148 = vmatprep.subr.mxu0 0.0
    %3149 = vmatpush1.msra.mxu0 0.0
    %3150 = vmatprep.subr.mxu0 0.0
    %3151 = vmatpush1.msra.mxu0 0.0
    %3152 = vmatprep.subr.mxu0 0.0
    %3153 = vmatpush1.msra.mxu0 0.0
    %3154 = vmatprep.subr.mxu0 0.0
    %3155 = vmatpush1.msra.mxu0 0.0
    %3156 = vmatprep.subr.mxu0 0.0
    %3157 = vmatpush1.msra.mxu0 0.0
    %3158 = vmatprep.subr.mxu0 0.0
    %3159 = vmatpush1.msra.mxu0 0.0
    %3160 = vmatprep.subr.mxu0 0.0
    %3161 = vmatpush1.msra.mxu0 0.0
    %3162 = vmatprep.subr.mxu0 0.0
    %3163 = vmatpush1.msra.mxu0 0.0
    %3164 = vmatprep.subr.mxu0 0.0
    %3165 = vmatpush1.msra.mxu0 0.0
    %3166 = vmatprep.subr.mxu0 0.0
    %3167 = vmatpush1.msra.mxu0 0.0
    %3168 = vmatprep.subr.mxu0 0.0
    %3169 = vmatpush1.msra.mxu0 %v3133
    %3170 = vmatprep.subr.mxu0 0.0
    %3171 = vmatpush2.msra.mxu0 0.0
    %3172 = vmatprep.subr.mxu0 0.0
    %3173 = vmatpush2.msra.mxu0 0.0
    %3174 = vmatprep.subr.mxu0 0.0
    %3175 = vmatpush2.msra.mxu0 0.0
    %3176 = vmatprep.subr.mxu0 0.0
    %3177 = vmatpush2.msra.mxu0 0.0
    %3178 = vmatprep.subr.mxu0 0.0
    %3179 = vmatpush2.msra.mxu0 0.0
    %3180 = vmatprep.subr.mxu0 0.0
    %3181 = vmatpush2.msra.mxu0 0.0
    %3182 = vmatprep.subr.mxu0 0.0
    %3183 = vmatpush2.msra.mxu0 0.0
    %3184 = vmatprep.subr.mxu0 0.0
    %3185 = vmatpush2.msra.mxu0 0.0
    %3186 = vmatprep.subr.mxu0 0.0
    %3187 = vmatpush2.msra.mxu0 0.0
    %3188 = vmatprep.subr.mxu0 0.0
    %3189 = vmatpush2.msra.mxu0 0.0
    %3190 = vmatprep.subr.mxu0 0.0
    %3191 = vmatpush2.msra.mxu0 0.0
    %3192 = vmatprep.subr.mxu0 0.0
    %3193 = vmatpush2.msra.mxu0 0.0
    %3194 = vmatprep.subr.mxu0 0.0
    %3195 = vmatpush2.msra.mxu0 0.0
    %3196 = vmatprep.subr.mxu0 0.0
    %3197 = vmatpush2.msra.mxu0 0.0
    %3198 = vmatprep.subr.mxu0 0.0
    %3199 = vmatpush2.msra.mxu0 0.0
    %3200 = vmatprep.subr.mxu0 0.0
    %3201 = vmatpush2.msra.mxu0 0.0
    %3202 = vmatprep.mubr.f32.mxu0 0.0
    %3203 = vmatmul.mubr.f32.gmra.mxu0 %v3136
    %v3204 = vpop.f32.mrf.mxu0
    %v3205 = vadd.f32 0.0, %v3204
    %v3206 = vpop.f32.mrf.mxu0
    %3207 = vdwg.mxu0
    %3208 = vrot.lane.b32.xlu0 %v2206, 104
    %v3209 = vpop.permute.xlu0 %3208
    %3210 = vrot.lane.b32.xlu0 %v2206, 72
    %v3211 = vpop.permute.xlu0 %3210
    %v3212 = vsel %vm626, %v3209, 0
    %v3214 = vsel %vm626, %v3211, 0
    %3216 = vmatprep.subr.mxu0 0.0
    %3217 = vmatpush1.xpose.msra.mxu0 0.0
    %3218 = vmatprep.subr.mxu0 0.0
    %3219 = vmatpush1.xpose.msra.mxu0 0.0
    %3220 = vmatprep.subr.mxu0 0.0
    %3221 = vmatpush1.xpose.msra.mxu0 0.0
    %3222 = vmatprep.subr.mxu0 0.0
    %3223 = vmatpush1.xpose.msra.mxu0 0.0
    %3224 = vmatprep.subr.mxu0 0.0
    %3225 = vmatpush1.xpose.msra.mxu0 0.0
    %3226 = vmatprep.subr.mxu0 0.0
    %3227 = vmatpush1.xpose.msra.mxu0 0.0
    %3228 = vmatprep.subr.mxu0 0.0
    %3229 = vmatpush1.xpose.msra.mxu0 0.0
    %3230 = vmatprep.subr.mxu0 0.0
    %3231 = vmatpush1.xpose.msra.mxu0 0.0
    %3232 = vmatprep.subr.mxu0 0.0
    %3233 = vmatpush1.xpose.msra.mxu0 0.0
    %3234 = vmatprep.subr.mxu0 0.0
    %3235 = vmatpush1.xpose.msra.mxu0 0.0
    %3236 = vmatprep.subr.mxu0 0.0
    %3237 = vmatpush1.xpose.msra.mxu0 0.0
    %3238 = vmatprep.subr.mxu0 0.0
    %3239 = vmatpush1.xpose.msra.mxu0 0.0
    %3240 = vmatprep.subr.mxu0 0.0
    %3241 = vmatpush1.xpose.msra.mxu0 0.0
    %3242 = vmatprep.subr.mxu0 0.0
    %3243 = vmatpush1.xpose.msra.mxu0 0.0
    %3244 = vmatprep.subr.mxu0 0.0
    %3245 = vmatpush1.xpose.msra.mxu0 0.0
    %3246 = vmatprep.subr.mxu0 0.0
    %3247 = vmatpush1.xpose.msra.mxu0 %v3214
    %3248 = vmatprep.subr.mxu0 0.0
    %3249 = vmatpush2.xpose.msra.mxu0 0.0
    %3250 = vmatprep.subr.mxu0 0.0
    %3251 = vmatpush2.xpose.msra.mxu0 0.0
    %3252 = vmatprep.subr.mxu0 0.0
    %3253 = vmatpush2.xpose.msra.mxu0 0.0
    %3254 = vmatprep.subr.mxu0 0.0
    %3255 = vmatpush2.xpose.msra.mxu0 0.0
    %3256 = vmatprep.subr.mxu0 0.0
    %3257 = vmatpush2.xpose.msra.mxu0 0.0
    %3258 = vmatprep.subr.mxu0 0.0
    %3259 = vmatpush2.xpose.msra.mxu0 0.0
    %3260 = vmatprep.subr.mxu0 0.0
    %3261 = vmatpush2.xpose.msra.mxu0 0.0
    %3262 = vmatprep.subr.mxu0 0.0
    %3263 = vmatpush2.xpose.msra.mxu0 0.0
    %3264 = vmatprep.subr.mxu0 0.0
    %3265 = vmatpush2.xpose.msra.mxu0 0.0
    %3266 = vmatprep.subr.mxu0 0.0
    %3267 = vmatpush2.xpose.msra.mxu0 0.0
    %3268 = vmatprep.subr.mxu0 0.0
    %3269 = vmatpush2.xpose.msra.mxu0 0.0
    %3270 = vmatprep.subr.mxu0 0.0
    %3271 = vmatpush2.xpose.msra.mxu0 0.0
    %3272 = vmatprep.subr.mxu0 0.0
    %3273 = vmatpush2.xpose.msra.mxu0 0.0
    %3274 = vmatprep.subr.mxu0 0.0
    %3275 = vmatpush2.xpose.msra.mxu0 0.0
    %3276 = vmatprep.subr.mxu0 0.0
    %3277 = vmatpush2.xpose.msra.mxu0 0.0
    %3278 = vmatprep.subr.mxu0 0.0
    %3279 = vmatpush2.xpose.msra.mxu0 0.0
    %3280 = vmatprep.mubr.f32.mxu0 0.0
    %3281 = vmatmul.mubr.f32.gmra.mxu0 %v3212
    %v3282 = vpop.f32.mrf.mxu0
    %v3283 = vadd.f32 0.0, %v3282
    %v3284 = vpop.f32.mrf.mxu0
    %3285 = vdwg.mxu0
    %3286 = vrot.lane.b32.xlu0 %v2211, 104
    %v3287 = vpop.permute.xlu0 %3286
    %3288 = vrot.lane.b32.xlu0 %v2211, 72
    %v3289 = vpop.permute.xlu0 %3288
    %v3290 = vsel %vm626, %v3287, 0
    %v3292 = vsel %vm626, %v3289, 0
    %3294 = vmatprep.subr.mxu0 0.0
    %3295 = vmatpush1.xpose.msra.mxu0 0.0
    %3296 = vmatprep.subr.mxu0 0.0
    %3297 = vmatpush1.xpose.msra.mxu0 0.0
    %3298 = vmatprep.subr.mxu0 0.0
    %3299 = vmatpush1.xpose.msra.mxu0 0.0
    %3300 = vmatprep.subr.mxu0 0.0
    %3301 = vmatpush1.xpose.msra.mxu0 0.0
    %3302 = vmatprep.subr.mxu0 0.0
    %3303 = vmatpush1.xpose.msra.mxu0 0.0
    %3304 = vmatprep.subr.mxu0 0.0
    %3305 = vmatpush1.xpose.msra.mxu0 0.0
    %3306 = vmatprep.subr.mxu0 0.0
    %3307 = vmatpush1.xpose.msra.mxu0 0.0
    %3308 = vmatprep.subr.mxu0 0.0
    %3309 = vmatpush1.xpose.msra.mxu0 0.0
    %3310 = vmatprep.subr.mxu0 0.0
    %3311 = vmatpush1.xpose.msra.mxu0 0.0
    %3312 = vmatprep.subr.mxu0 0.0
    %3313 = vmatpush1.xpose.msra.mxu0 0.0
    %3314 = vmatprep.subr.mxu0 0.0
    %3315 = vmatpush1.xpose.msra.mxu0 0.0
    %3316 = vmatprep.subr.mxu0 0.0
    %3317 = vmatpush1.xpose.msra.mxu0 0.0
    %3318 = vmatprep.subr.mxu0 0.0
    %3319 = vmatpush1.xpose.msra.mxu0 0.0
    %3320 = vmatprep.subr.mxu0 0.0
    %3321 = vmatpush1.xpose.msra.mxu0 0.0
    %3322 = vmatprep.subr.mxu0 0.0
    %3323 = vmatpush1.xpose.msra.mxu0 0.0
    %3324 = vmatprep.subr.mxu0 0.0
    %3325 = vmatpush1.xpose.msra.mxu0 %v3292
    %3326 = vmatprep.subr.mxu0 0.0
    %3327 = vmatpush2.xpose.msra.mxu0 0.0
    %3328 = vmatprep.subr.mxu0 0.0
    %3329 = vmatpush2.xpose.msra.mxu0 0.0
    %3330 = vmatprep.subr.mxu0 0.0
    %3331 = vmatpush2.xpose.msra.mxu0 0.0
    %3332 = vmatprep.subr.mxu0 0.0
    %3333 = vmatpush2.xpose.msra.mxu0 0.0
    %3334 = vmatprep.subr.mxu0 0.0
    %3335 = vmatpush2.xpose.msra.mxu0 0.0
    %3336 = vmatprep.subr.mxu0 0.0
    %3337 = vmatpush2.xpose.msra.mxu0 0.0
    %3338 = vmatprep.subr.mxu0 0.0
    %3339 = vmatpush2.xpose.msra.mxu0 0.0
    %3340 = vmatprep.subr.mxu0 0.0
    %3341 = vmatpush2.xpose.msra.mxu0 0.0
    %3342 = vmatprep.subr.mxu0 0.0
    %3343 = vmatpush2.xpose.msra.mxu0 0.0
    %3344 = vmatprep.subr.mxu0 0.0
    %3345 = vmatpush2.xpose.msra.mxu0 0.0
    %3346 = vmatprep.subr.mxu0 0.0
    %3347 = vmatpush2.xpose.msra.mxu0 0.0
    %3348 = vmatprep.subr.mxu0 0.0
    %3349 = vmatpush2.xpose.msra.mxu0 0.0
    %3350 = vmatprep.subr.mxu0 0.0
    %3351 = vmatpush2.xpose.msra.mxu0 0.0
    %3352 = vmatprep.subr.mxu0 0.0
    %3353 = vmatpush2.xpose.msra.mxu0 0.0
    %3354 = vmatprep.subr.mxu0 0.0
    %3355 = vmatpush2.xpose.msra.mxu0 0.0
    %3356 = vmatprep.subr.mxu0 0.0
    %3357 = vmatpush2.xpose.msra.mxu0 0.0
    %3358 = vmatprep.mubr.f32.mxu0 0.0
    %3359 = vmatmul.mubr.f32.gmra.mxu0 %v3290
    %v3360 = vpop.f32.mrf.mxu0
    %v3361 = vadd.f32 0.0, %v3360
    %v3362 = vpop.f32.mrf.mxu0
    %3363 = vdwg.mxu0
    %v3364 = vmul.f32 %v3283, 0.35355338
    %v3365 = vmul.f32 %v3361, 0.35355338
    %v3366 = vsel %vm626, %v3364, -inf
    %3367 = vmax.xlane.f32.xlu0 %v3366
    %v3368 = vpop.xlane.xlu0 %3367
    %v3369 = vsel %vm626, %v3365, -inf
    %3370 = vmax.xlane.f32.xlu0 %v3369
    %v3371 = vpop.xlane.xlu0 %3370
    %v3372 = vsub.f32 %v3364, %v3368
    %v3373 = vsub.f32 %v3365, %v3371
    %v3374 = vmul.f32 %v3372, 1.442695
    %v3375 = vpow.pop %v3374
    %v3376 = vmul.f32 %v3373, 1.442695
    %v3377 = vpow.pop %v3376
    %v3378 = vsel %vm626, %v3375, 0.0
    %3379 = vadd.xlane.f32.xlu0 %v3378
    %v3380 = vpop.xlane.xlu0 %3379
    %v3381 = vsel %vm626, %v3377, 0.0
    %3382 = vadd.xlane.f32.xlu0 %v3381
    %v3383 = vpop.xlane.xlu0 %3382
    %v3384 = vrcp.pop %v3380
    %v3385 = vrcp.pop %v3383
    %v3386 = vmul.f32 %v3375, %v3384
    %v3387 = vmul.f32 %v3377, %v3385
    %3388 = vrot.lane.b32.xlu0 %v2206, 40
    %v3389 = vpop.permute.xlu0 %3388
    %v3392 = vsel %vm626, %v3386, 0
    %3394 = vmatprep.subr.mxu0 0.0
    %3395 = vmatpush1.msra.mxu0 0.0
    %3396 = vmatprep.subr.mxu0 0.0
    %3397 = vmatpush1.msra.mxu0 0.0
    %3398 = vmatprep.subr.mxu0 0.0
    %3399 = vmatpush1.msra.mxu0 0.0
    %3400 = vmatprep.subr.mxu0 0.0
    %3401 = vmatpush1.msra.mxu0 0.0
    %3402 = vmatprep.subr.mxu0 0.0
    %3403 = vmatpush1.msra.mxu0 0.0
    %3404 = vmatprep.subr.mxu0 0.0
    %3405 = vmatpush1.msra.mxu0 0.0
    %3406 = vmatprep.subr.mxu0 0.0
    %3407 = vmatpush1.msra.mxu0 0.0
    %3408 = vmatprep.subr.mxu0 0.0
    %3409 = vmatpush1.msra.mxu0 0.0
    %3410 = vmatprep.subr.mxu0 0.0
    %3411 = vmatpush1.msra.mxu0 0.0
    %3412 = vmatprep.subr.mxu0 0.0
    %3413 = vmatpush1.msra.mxu0 0.0
    %3414 = vmatprep.subr.mxu0 0.0
    %3415 = vmatpush1.msra.mxu0 0.0
    %3416 = vmatprep.subr.mxu0 0.0
    %3417 = vmatpush1.msra.mxu0 0.0
    %3418 = vmatprep.subr.mxu0 0.0
    %3419 = vmatpush1.msra.mxu0 0.0
    %3420 = vmatprep.subr.mxu0 0.0
    %3421 = vmatpush1.msra.mxu0 0.0
    %3422 = vmatprep.subr.mxu0 0.0
    %3423 = vmatpush1.msra.mxu0 0.0
    %3424 = vmatprep.subr.mxu0 0.0
    %3425 = vmatpush1.msra.mxu0 %v3389
    %3426 = vmatprep.subr.mxu0 0.0
    %3427 = vmatpush2.msra.mxu0 0.0
    %3428 = vmatprep.subr.mxu0 0.0
    %3429 = vmatpush2.msra.mxu0 0.0
    %3430 = vmatprep.subr.mxu0 0.0
    %3431 = vmatpush2.msra.mxu0 0.0
    %3432 = vmatprep.subr.mxu0 0.0
    %3433 = vmatpush2.msra.mxu0 0.0
    %3434 = vmatprep.subr.mxu0 0.0
    %3435 = vmatpush2.msra.mxu0 0.0
    %3436 = vmatprep.subr.mxu0 0.0
    %3437 = vmatpush2.msra.mxu0 0.0
    %3438 = vmatprep.subr.mxu0 0.0
    %3439 = vmatpush2.msra.mxu0 0.0
    %3440 = vmatprep.subr.mxu0 0.0
    %3441 = vmatpush2.msra.mxu0 0.0
    %3442 = vmatprep.subr.mxu0 0.0
    %3443 = vmatpush2.msra.mxu0 0.0
    %3444 = vmatprep.subr.mxu0 0.0
    %3445 = vmatpush2.msra.mxu0 0.0
    %3446 = vmatprep.subr.mxu0 0.0
    %3447 = vmatpush2.msra.mxu0 0.0
    %3448 = vmatprep.subr.mxu0 0.0
    %3449 = vmatpush2.msra.mxu0 0.0
    %3450 = vmatprep.subr.mxu0 0.0
    %3451 = vmatpush2.msra.mxu0 0.0
    %3452 = vmatprep.subr.mxu0 0.0
    %3453 = vmatpush2.msra.mxu0 0.0
    %3454 = vmatprep.subr.mxu0 0.0
    %3455 = vmatpush2.msra.mxu0 0.0
    %3456 = vmatprep.subr.mxu0 0.0
    %3457 = vmatpush2.msra.mxu0 0.0
    %3458 = vmatprep.mubr.f32.mxu0 0.0
    %3459 = vmatmul.mubr.f32.gmra.mxu0 %v3392
    %v3460 = vpop.f32.mrf.mxu0
    %v3461 = vadd.f32 0.0, %v3460
    %v3462 = vpop.f32.mrf.mxu0
    %3463 = vdwg.mxu0
    %3464 = vrot.lane.b32.xlu0 %v2211, 40
    %v3465 = vpop.permute.xlu0 %3464
    %v3468 = vsel %vm626, %v3387, 0
    %3470 = vmatprep.subr.mxu0 0.0
    %3471 = vmatpush1.msra.mxu0 0.0
    %3472 = vmatprep.subr.mxu0 0.0
    %3473 = vmatpush1.msra.mxu0 0.0
    %3474 = vmatprep.subr.mxu0 0.0
    %3475 = vmatpush1.msra.mxu0 0.0
    %3476 = vmatprep.subr.mxu0 0.0
    %3477 = vmatpush1.msra.mxu0 0.0
    %3478 = vmatprep.subr.mxu0 0.0
    %3479 = vmatpush1.msra.mxu0 0.0
    %3480 = vmatprep.subr.mxu0 0.0
    %3481 = vmatpush1.msra.mxu0 0.0
    %3482 = vmatprep.subr.mxu0 0.0
    %3483 = vmatpush1.msra.mxu0 0.0
    %3484 = vmatprep.subr.mxu0 0.0
    %3485 = vmatpush1.msra.mxu0 0.0
    %3486 = vmatprep.subr.mxu0 0.0
    %3487 = vmatpush1.msra.mxu0 0.0
    %3488 = vmatprep.subr.mxu0 0.0
    %3489 = vmatpush1.msra.mxu0 0.0
    %3490 = vmatprep.subr.mxu0 0.0
    %3491 = vmatpush1.msra.mxu0 0.0
    %3492 = vmatprep.subr.mxu0 0.0
    %3493 = vmatpush1.msra.mxu0 0.0
    %3494 = vmatprep.subr.mxu0 0.0
    %3495 = vmatpush1.msra.mxu0 0.0
    %3496 = vmatprep.subr.mxu0 0.0
    %3497 = vmatpush1.msra.mxu0 0.0
    %3498 = vmatprep.subr.mxu0 0.0
    %3499 = vmatpush1.msra.mxu0 0.0
    %3500 = vmatprep.subr.mxu0 0.0
    %3501 = vmatpush1.msra.mxu0 %v3465
    %3502 = vmatprep.subr.mxu0 0.0
    %3503 = vmatpush2.msra.mxu0 0.0
    %3504 = vmatprep.subr.mxu0 0.0
    %3505 = vmatpush2.msra.mxu0 0.0
    %3506 = vmatprep.subr.mxu0 0.0
    %3507 = vmatpush2.msra.mxu0 0.0
    %3508 = vmatprep.subr.mxu0 0.0
    %3509 = vmatpush2.msra.mxu0 0.0
    %3510 = vmatprep.subr.mxu0 0.0
    %3511 = vmatpush2.msra.mxu0 0.0
    %3512 = vmatprep.subr.mxu0 0.0
    %3513 = vmatpush2.msra.mxu0 0.0
    %3514 = vmatprep.subr.mxu0 0.0
    %3515 = vmatpush2.msra.mxu0 0.0
    %3516 = vmatprep.subr.mxu0 0.0
    %3517 = vmatpush2.msra.mxu0 0.0
    %3518 = vmatprep.subr.mxu0 0.0
    %3519 = vmatpush2.msra.mxu0 0.0
    %3520 = vmatprep.subr.mxu0 0.0
    %3521 = vmatpush2.msra.mxu0 0.0
    %3522 = vmatprep.subr.mxu0 0.0
    %3523 = vmatpush2.msra.mxu0 0.0
    %3524 = vmatprep.subr.mxu0 0.0
    %3525 = vmatpush2.msra.mxu0 0.0
    %3526 = vmatprep.subr.mxu0 0.0
    %3527 = vmatpush2.msra.mxu0 0.0
    %3528 = vmatprep.subr.mxu0 0.0
    %3529 = vmatpush2.msra.mxu0 0.0
    %3530 = vmatprep.subr.mxu0 0.0
    %3531 = vmatpush2.msra.mxu0 0.0
    %3532 = vmatprep.subr.mxu0 0.0
    %3533 = vmatpush2.msra.mxu0 0.0
    %3534 = vmatprep.mubr.f32.mxu0 0.0
    %3535 = vmatmul.mubr.f32.gmra.mxu0 %v3468
    %v3536 = vpop.f32.mrf.mxu0
    %v3537 = vadd.f32 0.0, %v3536
    %v3538 = vpop.f32.mrf.mxu0
    %3539 = vdwg.mxu0
    %3542 = vrot.lane.b32.xlu0 %v2797, 8
    %v3543 = vpop.permute.xlu0 %3542
    %3544 = vrot.lane.b32.xlu0 %v2873, 8
    %v3545 = vpop.permute.xlu0 %3544
    %3550 = vrot.lane.b32.xlu0 %v3129, 16
    %v3551 = vpop.permute.xlu0 %3550
    %3552 = vrot.lane.b32.xlu0 %v3205, 16
    %v3553 = vpop.permute.xlu0 %3552
    %3558 = vrot.lane.b32.xlu0 %v3461, 24
    %v3559 = vpop.permute.xlu0 %3558
    %3560 = vrot.lane.b32.xlu0 %v3537, 24
    %v3561 = vpop.permute.xlu0 %3560
    %v3564 = vsel %vm626, %v2465, %v3543
    %v3565 = vsel %vm626, %v2541, %v3545
    %v3566 = vsel %vm1976, %v3564, %v3551
    %v3567 = vsel %vm1976, %v3565, %v3553
    %v3568 = vsel %vm1979, %v3566, %v3559
    %v3569 = vsel %vm1979, %v3567, %v3561
    %s3570 = scalar_lea.vmem [#allocation13], 32
    %v3571 = vld [vmem:[%s3570] sm:$0xff]
    %v3572 = vld [vmem:[%s3570 + $0x8] sm:$0xff]
    %v3573 = vld [vmem:[%s3570 + $0x10] sm:$0xff]
    %v3574 = vld [vmem:[%s3570 + $0x18] sm:$0xff]
    %s3575 = scalar_lea.vmem %s12, 1
    %v3576 = vld [vmem:[%s3575] sm:$0x1]
    %v3578 = vlaneseq
    %v3579 = vshrl.u32 %v3578, 7
    %v3580 = vsub.s32 0, %v3579
    %v3581 = vrot.slane %v3576, %v3580
    %v3584 = vsel %vm186, %v3568, 0
    %v3587 = vsel %vm186, %v3569, 0
    %3589 = vmatprep.subr.mxu0 0.0
    %3590 = vmatpush1.msra.mxu0 0.0
    %3591 = vmatprep.subr.mxu0 0.0
    %3592 = vmatpush1.msra.mxu0 0.0
    %3593 = vmatprep.subr.mxu0 0.0
    %3594 = vmatpush1.msra.mxu0 0.0
    %3595 = vmatprep.subr.mxu0 0.0
    %3596 = vmatpush1.msra.mxu0 0.0
    %3597 = vmatprep.subr.mxu0 0.0
    %3598 = vmatpush1.msra.mxu0 0.0
    %3599 = vmatprep.subr.mxu0 0.0
    %3600 = vmatpush1.msra.mxu0 0.0
    %3601 = vmatprep.subr.mxu0 0.0
    %3602 = vmatpush1.msra.mxu0 0.0
    %3603 = vmatprep.subr.mxu0 0.0
    %3604 = vmatpush1.msra.mxu0 0.0
    %3605 = vmatprep.subr.mxu0 0.0
    %3606 = vmatpush1.msra.mxu0 0.0
    %3607 = vmatprep.subr.mxu0 0.0
    %3608 = vmatpush1.msra.mxu0 0.0
    %3609 = vmatprep.subr.mxu0 0.0
    %3610 = vmatpush1.msra.mxu0 0.0
    %3611 = vmatprep.subr.mxu0 0.0
    %3612 = vmatpush1.msra.mxu0 0.0
    %3613 = vmatprep.subr.mxu0 0.0
    %3614 = vmatpush1.msra.mxu0 %v3574
    %3615 = vmatprep.subr.mxu0 0.0
    %3616 = vmatpush1.msra.mxu0 %v3573
    %3617 = vmatprep.subr.mxu0 0.0
    %3618 = vmatpush1.msra.mxu0 %v3572
    %3619 = vmatprep.subr.mxu0 0.0
    %3620 = vmatpush1.msra.mxu0 %v3571
    %3621 = vmatprep.subr.mxu0 0.0
    %3622 = vmatpush2.msra.mxu0 0.0
    %3623 = vmatprep.subr.mxu0 0.0
    %3624 = vmatpush2.msra.mxu0 0.0
    %3625 = vmatprep.subr.mxu0 0.0
    %3626 = vmatpush2.msra.mxu0 0.0
    %3627 = vmatprep.subr.mxu0 0.0
    %3628 = vmatpush2.msra.mxu0 0.0
    %3629 = vmatprep.subr.mxu0 0.0
    %3630 = vmatpush2.msra.mxu0 0.0
    %3631 = vmatprep.subr.mxu0 0.0
    %3632 = vmatpush2.msra.mxu0 0.0
    %3633 = vmatprep.subr.mxu0 0.0
    %3634 = vmatpush2.msra.mxu0 0.0
    %3635 = vmatprep.subr.mxu0 0.0
    %3636 = vmatpush2.msra.mxu0 0.0
    %3637 = vmatprep.subr.mxu0 0.0
    %3638 = vmatpush2.msra.mxu0 0.0
    %3639 = vmatprep.subr.mxu0 0.0
    %3640 = vmatpush2.msra.mxu0 0.0
    %3641 = vmatprep.subr.mxu0 0.0
    %3642 = vmatpush2.msra.mxu0 0.0
    %3643 = vmatprep.subr.mxu0 0.0
    %3644 = vmatpush2.msra.mxu0 0.0
    %3645 = vmatprep.subr.mxu0 0.0
    %3646 = vmatpush2.msra.mxu0 0.0
    %3647 = vmatprep.subr.mxu0 0.0
    %3648 = vmatpush2.msra.mxu0 0.0
    %3649 = vmatprep.subr.mxu0 0.0
    %3650 = vmatpush2.msra.mxu0 0.0
    %3651 = vmatprep.subr.mxu0 0.0
    %3652 = vmatpush2.msra.mxu0 0.0
    %3653 = vmatprep.mubr.f32.mxu0 0.0
    %3654 = vmatmul.mubr.f32.gmra.mxu0 %v3584
    %v3655 = vpop.f32.mrf.mxu0
    %v3656 = vadd.f32 %v3581, %v3655
    %v3657 = vpop.f32.mrf.mxu0
    %3658 = vmatprep.mubr.f32.mxu0 0.0
    %3659 = vmatmul.mubr.f32.gmra.mxu0 %v3587
    %v3660 = vpop.f32.mrf.mxu0
    %v3661 = vadd.f32 %v3581, %v3660
    %v3662 = vpop.f32.mrf.mxu0
    %3663 = vdwg.mxu0
    %v3664 = vadd.f32 %v2118, %v3656
    %v3665 = vadd.f32 %v2119, %v3661
    %s3666 = scalar_lea.vmem %s13, 1
    %v3667 = vld [vmem:[%s3666] sm:$0x1]
    %s3668 = scalar_lea.vmem %s14, 1
    %v3669 = vld [vmem:[%s3668] sm:$0x1]
    %v3670 = vsel %vm186, %v3664, 0.0
    %3671 = vadd.xlane.f32.xlu0 %v3670
    %v3672 = vpop.xlane.xlu0 %3671
    %v3673 = vsel %vm186, %v3665, 0.0
    %3674 = vadd.xlane.f32.xlu0 %v3673
    %v3675 = vpop.xlane.xlu0 %3674
    %v3676 = vmul.f32 %v3672, %v382
    %v3677 = vmul.f32 %v3675, %v382
    %v3678 = vsub.f32 %v3664, %v3676
    %v3679 = vsub.f32 %v3665, %v3677
    %v3680 = vmul.f32 %v3678, %v3678
    %v3681 = vmul.f32 %v3679, %v3679
    %v3682 = vsel %vm186, %v3680, 0.0
    %3683 = vadd.xlane.f32.xlu0 %v3682
    %v3684 = vpop.xlane.xlu0 %3683
    %v3685 = vsel %vm186, %v3681, 0.0
    %3686 = vadd.xlane.f32.xlu0 %v3685
    %v3687 = vpop.xlane.xlu0 %3686
    %v3688 = vmul.f32 %v3684, %v382
    %v3689 = vmul.f32 %v3687, %v382
    %v3690 = vadd.f32 %v3688, 1e-05
    %v3691 = vadd.f32 %v3689, 1e-05
    %v3692 = vrsqrt.pop %v3690
    %v3693 = vrsqrt.pop %v3691
    %v3694 = vmul.f32 %v3678, %v3692
    %v3695 = vmul.f32 %v3679, %v3693
    %v3697 = vlaneseq
    %v3698 = vshrl.u32 %v3697, 7
    %v3699 = vsub.s32 0, %v3698
    %v3700 = vrot.slane %v3667, %v3699
    %v3702 = vmul.f32 %v3694, %v3700
    %v3703 = vmul.f32 %v3695, %v3700
    %v3705 = vlaneseq
    %v3706 = vshrl.u32 %v3705, 7
    %v3707 = vsub.s32 0, %v3706
    %v3708 = vrot.slane %v3669, %v3707
    %v3710 = vadd.f32 %v3702, %v3708
    %v3711 = vadd.f32 %v3703, %v3708
    %v3712 = vld [vmem:[#allocation14] sm:$0xff]
    %v3713 = vld [vmem:[#allocation14 + $0x8] sm:$0xff]
    %v3714 = vld [vmem:[#allocation14 + $0x10] sm:$0xff]
    %v3715 = vld [vmem:[#allocation14 + $0x18] sm:$0xff]
    %v3716 = vld [vmem:[#allocation16] sm:$0x1]
    %v3718 = vlaneseq
    %v3719 = vshrl.u32 %v3718, 7
    %v3720 = vsub.s32 0, %v3719
    %v3721 = vrot.slane %v3716, %v3720
    %v3725 = vrot.slane %v3710, 7
    %v3726 = vrot.slane %v3711, 6
    %vm3727 = vcmask 1041409
    %v3728 = vsel %vm3727, %v3726, %v3725
    %v3729 = vsel %vm186, %v3728, 0
    %3731 = vmatprep.subr.mxu0 0.0
    %3732 = vmatpush1.msra.mxu0 0.0
    %3733 = vmatprep.subr.mxu0 0.0
    %3734 = vmatpush1.msra.mxu0 0.0
    %3735 = vmatprep.subr.mxu0 0.0
    %3736 = vmatpush1.msra.mxu0 0.0
    %3737 = vmatprep.subr.mxu0 0.0
    %3738 = vmatpush1.msra.mxu0 0.0
    %3739 = vmatprep.subr.mxu0 0.0
    %3740 = vmatpush1.msra.mxu0 0.0
    %3741 = vmatprep.subr.mxu0 0.0
    %3742 = vmatpush1.msra.mxu0 0.0
    %3743 = vmatprep.subr.mxu0 0.0
    %3744 = vmatpush1.msra.mxu0 0.0
    %3745 = vmatprep.subr.mxu0 0.0
    %3746 = vmatpush1.msra.mxu0 0.0
    %3747 = vmatprep.subr.mxu0 0.0
    %3748 = vmatpush1.msra.mxu0 0.0
    %3749 = vmatprep.subr.mxu0 0.0
    %3750 = vmatpush1.msra.mxu0 0.0
    %3751 = vmatprep.subr.mxu0 0.0
    %3752 = vmatpush1.msra.mxu0 0.0
    %3753 = vmatprep.subr.mxu0 0.0
    %3754 = vmatpush1.msra.mxu0 0.0
    %3755 = vmatprep.subr.mxu0 0.0
    %3756 = vmatpush1.msra.mxu0 %v3715
    %3757 = vmatprep.subr.mxu0 0.0
    %3758 = vmatpush1.msra.mxu0 %v3714
    %3759 = vmatprep.subr.mxu0 0.0
    %3760 = vmatpush1.msra.mxu0 %v3713
    %3761 = vmatprep.subr.mxu0 0.0
    %3762 = vmatpush1.msra.mxu0 %v3712
    %3763 = vmatprep.subr.mxu0 0.0
    %3764 = vmatpush2.msra.mxu0 0.0
    %3765 = vmatprep.subr.mxu0 0.0
    %3766 = vmatpush2.msra.mxu0 0.0
    %3767 = vmatprep.subr.mxu0 0.0
    %3768 = vmatpush2.msra.mxu0 0.0
    %3769 = vmatprep.subr.mxu0 0.0
    %3770 = vmatpush2.msra.mxu0 0.0
    %3771 = vmatprep.subr.mxu0 0.0
    %3772 = vmatpush2.msra.mxu0 0.0
    %3773 = vmatprep.subr.mxu0 0.0
    %3774 = vmatpush2.msra.mxu0 0.0
    %3775 = vmatprep.subr.mxu0 0.0
    %3776 = vmatpush2.msra.mxu0 0.0
    %3777 = vmatprep.subr.mxu0 0.0
    %3778 = vmatpush2.msra.mxu0 0.0
    %3779 = vmatprep.subr.mxu0 0.0
    %3780 = vmatpush2.msra.mxu0 0.0
    %3781 = vmatprep.subr.mxu0 0.0
    %3782 = vmatpush2.msra.mxu0 0.0
    %3783 = vmatprep.subr.mxu0 0.0
    %3784 = vmatpush2.msra.mxu0 0.0
    %3785 = vmatprep.subr.mxu0 0.0
    %3786 = vmatpush2.msra.mxu0 0.0
    %3787 = vmatprep.subr.mxu0 0.0
    %3788 = vmatpush2.msra.mxu0 0.0
    %3789 = vmatprep.subr.mxu0 0.0
    %3790 = vmatpush2.msra.mxu0 0.0
    %3791 = vmatprep.subr.mxu0 0.0
    %3792 = vmatpush2.msra.mxu0 0.0
    %3793 = vmatprep.subr.mxu0 0.0
    %3794 = vmatpush2.msra.mxu0 0.0
    %3795 = vmatprep.mubr.f32.mxu0 0.0
    %3796 = vmatmul.mubr.f32.gmra.mxu0 %v3729
    %v3797 = vpop.f32.mrf.mxu0
    %v3798 = vadd.f32 %v3721, %v3797
    %v3799 = vpop.f32.mrf.mxu0
    %3800 = vdwg.mxu0
    %3801 = vst [vmem:[#allocation17] sm:$0x3] %v3798
    // Predicated region
    $region106: #{tft_forward.1} parent=1 // pred_check
      _
    $region107: #{tft_forward.1} parent=1 // pred_check_branch
      %3803 = sbr.rel (0) target = $region109
    $region108: #{tft_forward.1} parent=1 // pred_region
      %s3805 = ssub.s32 32, 32
      %3806 = vsyncadd [#allocation4], %s3805
      %s3808 = sshll.u32 [#allocation17], 4
      %s3809 = int_to_ptr.vmem [resolvable:$true] %s3808
      %3811 = dma.vmem_to_hbm [thread:$0]  %s3809, 32, %s17, [#allocation4]
    $region109: #{tft_forward.1} parent=1 // pred_fallthru
      _
    // Predicated region
    $region110: #{tft_forward.1} parent=1 // pred_check
      _
    $region111: #{tft_forward.1} parent=1 // pred_check_branch
      %3813 = sbr.rel (0) target = $region113
    $region112: #{tft_forward.1} parent=1 // pred_region
      %3814 = dma.done [#allocation4], 32
    $region113: #{tft_forward.1} parent=1 // pred_fallthru
      _
    %3815 = vsyncpa [#allocation3], 1
    %3816 = vsyncpa [#allocation6], 1
    %3817 = vsyncpa [#allocation9], 1
    %3818 = vsyncpa [#allocation12], 1
    %3819 = vsyncpa [#allocation15], 1
    %3820 = vsyncpa [#allocation4], 1

</llo_original>
